<compile_context>
chip_gen: v6e
topology: v6e:2x2x1
jax: 0.10.0
libtpu: 0.0.40
codegen_flags: <defaults>
</compile_context>

<pallas_src>
import jax
import jax.numpy as jnp
from jax.experimental import pallas as pl
from jax.experimental.pallas import tpu as pltpu

BN_EPS = 1e-5


# ----------------------------------------------------------------------------
# Small helpers
# ----------------------------------------------------------------------------
def _round_up(x, m):
    return (x + m - 1) // m * m


def _pad2d(x, rows, cols):
    return jnp.pad(x, ((0, rows - x.shape[0]), (0, cols - x.shape[1])))


def _pick_lane_tile(sp):
    for t in (512, 256, 128):
        if sp % t == 0:
            return t
    return 128


def _choose_n_tiling(s):
    sp = _round_up(s, 128)
    tn = _pick_lane_tile(sp)
    return sp, tn


def _choose_k_tiling(k):
    k16 = _round_up(k, 16)          # bf16 sublane packing
    if k16 <= 1024:
        return k16, k16             # single K step, minimal padding
    k128 = _round_up(k, 128)
    for tk in (512, 384, 256, 128):
        if k128 % tk == 0:
            return k128, tk
    return _round_up(k, 512), 512


# ----------------------------------------------------------------------------
# Pallas kernel 1: tiled bf16 matmul (lane-dense output) + BN partial sums
# ----------------------------------------------------------------------------
def _matmul_stats_kernel(w_ref, p_ref, y_ref, ysum_ref, ysq_ref, acc_ref):
    k = pl.program_id(1)

    @pl.when(k == 0)
    def _init():
        acc_ref[...] = jnp.zeros_like(acc_ref)

    acc_ref[...] += jnp.dot(w_ref[...], p_ref[...],
                            preferred_element_type=jnp.float32)

    @pl.when(k == pl.num_programs(1) - 1)
    def _epilogue():
        acc = acc_ref[...]
        y_ref[...] = acc
        s = jnp.sum(acc, axis=1, keepdims=True)        # [Mp, 1]
        q = jnp.sum(acc * acc, axis=1, keepdims=True)  # [Mp, 1]
        ysum_ref[...] = jnp.broadcast_to(s, ysum_ref.shape)
        ysq_ref[...] = jnp.broadcast_to(q, ysq_ref.shape)


def matmul_stats(w_mat, p_mat):
    """[M, K] @ [K, S] -> (y [Mp, Sp] f32, row_sum [Mp], row_sumsq [Mp]).

    Callers put the big batch*spatial dim on S (lanes) and the small channel
    dim on M (sublanes).  Operands are cast to bf16; accumulation is f32.
    """
    M, K = w_mat.shape
    K2, S = p_mat.shape
    assert K == K2
    Mp = _round_up(M, 16)
    Kp, tk = _choose_k_tiling(K)
    Sp, tn = _choose_n_tiling(S)
    wp = _pad2d(w_mat.astype(jnp.bfloat16), Mp, Kp)
    pp = _pad2d(p_mat.astype(jnp.bfloat16), Kp, Sp)
    n_tiles, k_tiles = Sp // tn, Kp // tk

    y, ysum, ysq = pl.pallas_call(
        _matmul_stats_kernel,
        out_shape=(
            jax.ShapeDtypeStruct((Mp, Sp), jnp.float32),
            jax.ShapeDtypeStruct((Mp, n_tiles * 128), jnp.float32),
            jax.ShapeDtypeStruct((Mp, n_tiles * 128), jnp.float32),
        ),
        grid=(n_tiles, k_tiles),
        in_specs=[
            pl.BlockSpec((Mp, tk), lambda n, k: (0, k)),   # weight (small, resident in n)
            pl.BlockSpec((tk, tn), lambda n, k: (k, n)),   # patches / activations
        ],
        out_specs=[
            pl.BlockSpec((Mp, tn), lambda n, k: (0, n)),
            pl.BlockSpec((Mp, 128), lambda n, k: (0, n)),
            pl.BlockSpec((Mp, 128), lambda n, k: (0, n)),
        ],
        scratch_shapes=[pltpu.VMEM((Mp, tn), jnp.float32)],
        compiler_params=pltpu.CompilerParams(
            dimension_semantics=("parallel", "arbitrary")),
    )(wp, pp)

    row_sum = jnp.sum(ysum.reshape(Mp, n_tiles, 128)[:, :, 0], axis=1)
    row_sq = jnp.sum(ysq.reshape(Mp, n_tiles, 128)[:, :, 0], axis=1)
    return y, row_sum, row_sq


# ----------------------------------------------------------------------------
# Pallas kernel 2: fused BN-apply + residual + activation (tiled over lanes)
# ----------------------------------------------------------------------------
def _make_apply_kernel(act, has_res):
    def kernel(y_ref, s_ref, b_ref, *rest):
        if has_res:
            r_ref, o_ref = rest
        else:
            (o_ref,) = rest
        v = y_ref[...] * s_ref[...] + b_ref[...]     # per-row (channel) affine
        if has_res:
            v = v + r_ref[...]
        if act == "relu":
            v = jnp.maximum(v, 0.0)
        elif act == "tanh":
            v = jnp.tanh(v)
        o_ref[...] = v
    return kernel


def bn_act_apply(y_pad, scale, shift, act, residual_pad=None):
    """y_pad / residual_pad: [Mp, Sp] f32 (Mp%8==0, Sp%128==0); scale/shift: [Mp]."""
    Mp, Sp = y_pad.shape
    tn = _pick_lane_tile(Sp)
    has_res = residual_pad is not None
    inputs = [y_pad,
              scale.reshape(Mp, 1).astype(jnp.float32),
              shift.reshape(Mp, 1).astype(jnp.float32)]
    in_specs = [
        pl.BlockSpec((Mp, tn), lambda i: (0, i)),
        pl.BlockSpec((Mp, 1), lambda i: (0, 0)),
        pl.BlockSpec((Mp, 1), lambda i: (0, 0)),
    ]
    if has_res:
        inputs.append(residual_pad)
        in_specs.append(pl.BlockSpec((Mp, tn), lambda i: (0, i)))
    return pl.pallas_call(
        _make_apply_kernel(act, has_res),
        out_shape=jax.ShapeDtypeStruct((Mp, Sp), jnp.float32),
        grid=(Sp // tn,),
        in_specs=in_specs,
        out_specs=pl.BlockSpec((Mp, tn), lambda i: (0, i)),
        compiler_params=pltpu.CompilerParams(dimension_semantics=("parallel",)),
    )(*inputs)


# ----------------------------------------------------------------------------
# Conv / transposed-conv building blocks (im2col / col2im glue in XLA)
# ----------------------------------------------------------------------------
def _im2col_T(x_cbhw, kh, kw, stride, pad):
    """x: [C, B, H, W] -> patch matrix [C*kh*kw, B*OH*OW] (channel-major rows)."""
    x = jnp.pad(x_cbhw, ((0, 0), (0, 0), (pad, pad), (pad, pad)))
    C, B, H, W = x.shape
    OH = (H - kh) // stride + 1
    OW = (W - kw) // stride + 1
    taps = []
    for i in range(kh):
        for j in range(kw):
            taps.append(x[:, :, i:i + stride * OH:stride, j:j + stride * OW:stride])
    p = jnp.stack(taps, axis=1)                     # [C, kh*kw, B, OH, OW]
    return p.reshape(C * kh * kw, B * OH * OW), (B, OH, OW)


def conv_block(x, w, stride, pad, use_bn, act, residual=None):
    """Conv2d(bias=False) [+ BatchNorm2d batch-stats] + activation.

    x: [Cin, B, H, W] f32; w: [Cout, Cin, kh, kw] (PyTorch Conv2d layout);
    residual: [Cout, B, OH, OW] f32 or None.  Returns [Cout, B, OH, OW] f32.
    """
    Cout, Cin, kh, kw = w.shape
    patches, (B, OH, OW) = _im2col_T(x.astype(jnp.bfloat16), kh, kw, stride, pad)
    K, S = patches.shape
    w_mat = w.reshape(Cout, Cin * kh * kw).astype(jnp.bfloat16)

    y, rsum, rsq = matmul_stats(w_mat, patches)     # y: [Mp, Sp] f32
    Mp, Sp = y.shape

    if use_bn:
        mean = rsum / S
        var = jnp.maximum(rsq / S - mean * mean, 0.0)   # biased batch variance
        scale = jax.lax.rsqrt(var + BN_EPS)             # gamma = 1
        shift = -mean * scale                           # beta  = 0
    else:
        scale = jnp.ones((Mp,), jnp.float32)
        shift = jnp.zeros((Mp,), jnp.float32)

    res_pad = None
    if residual is not None:
        res_pad = _pad2d(residual.reshape(Cout, S), Mp, Sp)

    out = bn_act_apply(y, scale, shift, act, res_pad)
    return out[:Cout, :S].reshape(Cout, B, OH, OW)


def deconv_block(x, w, stride, pad, use_bn, act):
    """ConvTranspose2d(bias=False) [+ BN batch-stats] + activation.

    x: [Cin, B, H, W]; w: [Cin, Cout, kh, kw] (PyTorch ConvTranspose2d layout).
    Direct formulation: Z = (W reshaped) @ x_flat, then col2im overlap-add.
    """
    Cin, Cout, kh, kw = w.shape
    C, B, H, W = x.shape
    assert C == Cin

    w_mat = jnp.transpose(w, (1, 2, 3, 0)).reshape(Cout * kh * kw, Cin)
    x_flat = x.reshape(Cin, B * H * W).astype(jnp.bfloat16)
    z, _, _ = matmul_stats(w_mat.astype(jnp.bfloat16), x_flat)
    s_in = B * H * W
    z = z[:Cout * kh * kw, :s_in].reshape(Cout, kh, kw, B, H, W)

    # col2im overlap-add (XLA glue): y_full[a, b] += z[i, j, h, w] at a=h*s+i, b=w*s+j.
    FH = (H - 1) * stride + kh
    FW = (W - 1) * stride + kw
    zero = jnp.array(0.0, jnp.float32)
    y_full = jnp.zeros((Cout, B, FH, FW), jnp.float32)
    for i in range(kh):
        for j in range(kw):
            cfg = [(0, 0, 0), (0, 0, 0),
                   (i, kh - 1 - i, stride - 1),
                   (j, kw - 1 - j, stride - 1)]
            y_full = y_full + jax.lax.pad(z[:, i, j], zero, cfg)
    OH = FH - 2 * pad
    OW = FW - 2 * pad
    y = y_full[:, :, pad:pad + OH, pad:pad + OW]          # [Cout, B, OH, OW]

    S = B * OH * OW
    y2 = y.reshape(Cout, S)
    Mp = _round_up(Cout, 8)
    Sp = _round_up(S, 128)
    y2p = _pad2d(y2, Mp, Sp)

    if use_bn:
        mean = jnp.mean(y2, axis=1)
        var = jnp.maximum(jnp.mean(y2 * y2, axis=1) - mean * mean, 0.0)
        scale = jax.lax.rsqrt(var + BN_EPS)
        shift = -mean * scale
        scale = jnp.pad(scale, (0, Mp - Cout), constant_values=1.0)
        shift = jnp.pad(shift, (0, Mp - Cout))
    else:
        scale = jnp.ones((Mp,), jnp.float32)
        shift = jnp.zeros((Mp,), jnp.float32)

    out = bn_act_apply(y2p, scale, shift, act)
    return out[:Cout, :S].reshape(Cout, B, OH, OW)


# ----------------------------------------------------------------------------
# CycleGenerator parameters & forward
# ----------------------------------------------------------------------------
def init_params(key, conv_dim=8, n_res_blocks=2):
    keys = list(jax.random.split(key, 6 + 2 * n_res_blocks))
    it = iter(keys)

    def w(shape):
        return 0.05 * jax.random.normal(next(it), shape, jnp.float32)

    return {
        # Conv2d weights: [Cout, Cin, kh, kw]
        "conv1": w((conv_dim, 3, 4, 4)),
        "conv2": w((conv_dim * 2, conv_dim, 4, 4)),
        "conv3": w((conv_dim * 4, conv_dim * 2, 4, 4)),
        "res": [(w((conv_dim * 4, conv_dim * 4, 3, 3)),
                 w((conv_dim * 4, conv_dim * 4, 3, 3)))
                for _ in range(n_res_blocks)],
        # ConvTranspose2d weights: [Cin, Cout, kh, kw]
        "deconv1": w((conv_dim * 4, conv_dim * 2, 4, 4)),
        "deconv2": w((conv_dim * 2, conv_dim, 4, 4)),
        "deconv3": w((conv_dim, 3, 4, 4)),
    }


def cycle_generator_forward(x_nchw, params):
    # NCHW -> CNHW (channel-major): channels on sublanes, batch*spatial on lanes.
    x = jnp.transpose(x_nchw, (1, 0, 2, 3)).astype(jnp.float32)

    out = conv_block(x, params["conv1"], 2, 1, True, "relu")
    out = conv_block(out, params["conv2"], 2, 1, True, "relu")
    out = conv_block(out, params["conv3"], 2, 1, True, "relu")

    for w1, w2 in params["res"]:
        h = conv_block(out, w1, 1, 1, True, "relu")
        out = conv_block(h, w2, 1, 1, True, "none", residual=out)

    out = deconv_block(out, params["deconv1"], 2, 1, True, "relu")
    out = deconv_block(out, params["deconv2"], 2, 1, True, "relu")
    out = deconv_block(out, params["deconv3"], 2, 1, False, "tanh")

    return jnp.transpose(out, (1, 0, 2, 3))                # CNHW -> NCHW


if __name__ == "__main__":
    key = jax.random.PRNGKey(0)
    k_x, k_p = jax.random.split(key)

    x = jax.random.normal(k_x, (2, 3, 16, 16), jnp.float32)   # NCHW input
    params = init_params(k_p, conv_dim=8, n_res_blocks=2)

    fwd = jax.jit(cycle_generator_forward)
    out = jax.block_until_ready(fwd(x, params))

    assert out.shape == (2, 3, 16, 16), out.shape
    assert bool(jnp.all(jnp.isfinite(out)))
    assert bool(jnp.all(jnp.abs(out) <= 1.0 + 1e-6))          # tanh output range
    print("KERNEL_OK")
</pallas_src>

<mosaic_0001>
module attributes {stable_mosaic.version = 11 : i64} {
  func.func @_matmul_stats_kernel(%arg0: i32, %arg1: i32, %arg2: memref<16x48xbf16, #tpu.memory_space<vmem>>, %arg3: memref<48x128xbf16, #tpu.memory_space<vmem>>, %arg4: memref<16x128xf32, #tpu.memory_space<vmem>>, %arg5: memref<16x128xf32, #tpu.memory_space<vmem>>, %arg6: memref<16x128xf32, #tpu.memory_space<vmem>>, %arg7: memref<16x128xf32, #tpu.memory_space<vmem>>) attributes {dimension_semantics = [#tpu.dimension_semantics<parallel>, #tpu.dimension_semantics<arbitrary>], iteration_bounds = array<i64: 1, 1>, scalar_prefetch = 0 : i64, scratch_operands = 1 : i64, tpu.core_type = #tpu.core_type<tc>, window_params = [{transform_indices = @transform_0, window_bounds = array<i64: 16, 48>}, {transform_indices = @transform_1, window_bounds = array<i64: 48, 128>}, {transform_indices = @transform_2, window_bounds = array<i64: 16, 128>}, {transform_indices = @transform_3, window_bounds = array<i64: 16, 128>}, {transform_indices = @transform_4, window_bounds = array<i64: 16, 128>}]} {
    %c0_i32 = arith.constant 0 : i32
    %0 = arith.cmpi eq, %arg1, %c0_i32 : i32
    %1 = arith.extui %0 : i1 to i32
    %c0_i32_0 = arith.constant 0 : i32
    %2 = arith.cmpi ne, %1, %c0_i32_0 : i32
    scf.if %2 {
      %cst_10 = arith.constant 0.000000e+00 : f32
      %12 = vector.broadcast %cst_10 : f32 to vector<16x128xf32>
      %c0_11 = arith.constant 0 : index
      %c0_12 = arith.constant 0 : index
      %13 = vector.load %arg7[%c0_11, %c0_12] : memref<16x128xf32, #tpu.memory_space<vmem>>, vector<16x128xf32>
      tpu.vector_store %arg7[%c0_11, %c0_12], %12 {strides = array<i32>} : memref<16x128xf32, #tpu.memory_space<vmem>>, vector<16x128xf32>,
    } else {
    }
    %c0 = arith.constant 0 : index
    %c0_1 = arith.constant 0 : index
    %3 = vector.load %arg7[%c0, %c0_1] : memref<16x128xf32, #tpu.memory_space<vmem>>, vector<16x128xf32>
    %c0_2 = arith.constant 0 : index
    %c0_3 = arith.constant 0 : index
    %4 = vector.load %arg2[%c0_2, %c0_3] : memref<16x48xbf16, #tpu.memory_space<vmem>>, vector<16x48xbf16>
    %c0_4 = arith.constant 0 : index
    %c0_5 = arith.constant 0 : index
    %5 = vector.load %arg3[%c0_4, %c0_5] : memref<48x128xbf16, #tpu.memory_space<vmem>>, vector<48x128xbf16>
    %cst = arith.constant dense<0.000000e+00> : vector<16x128xf32>
    %6 = tpu.matmul %4, %5, %cst {dimension_numbers = #tpu.dot_dimension_numbers<[1], [0], [0], [1], [0, 0, 1, 1], [], []>} : vector<16x48xbf16>, vector<48x128xbf16>, vector<16x128xf32> -> vector<16x128xf32>
    %7 = arith.addf %3, %6 : vector<16x128xf32>
    %c0_6 = arith.constant 0 : index
    %c0_7 = arith.constant 0 : index
    %8 = vector.load %arg7[%c0_6, %c0_7] : memref<16x128xf32, #tpu.memory_space<vmem>>, vector<16x128xf32>
    tpu.vector_store %arg7[%c0_6, %c0_7], %7 {strides = array<i32>} : memref<16x128xf32, #tpu.memory_space<vmem>>, vector<16x128xf32>,
    %c0_i32_8 = arith.constant 0 : i32
    %9 = arith.cmpi eq, %arg1, %c0_i32_8 : i32
    %10 = arith.extui %9 : i1 to i32
    %c0_i32_9 = arith.constant 0 : i32
    %11 = arith.cmpi ne, %10, %c0_i32_9 : i32
    scf.if %11 {
      %c0_10 = arith.constant 0 : index
      %c0_11 = arith.constant 0 : index
      %12 = vector.load %arg7[%c0_10, %c0_11] : memref<16x128xf32, #tpu.memory_space<vmem>>, vector<16x128xf32>
      %c0_12 = arith.constant 0 : index
      %c0_13 = arith.constant 0 : index
      %13 = vector.load %arg4[%c0_12, %c0_13] : memref<16x128xf32, #tpu.memory_space<vmem>>, vector<16x128xf32>
      tpu.vector_store %arg4[%c0_12, %c0_13], %12 {strides = array<i32>} : memref<16x128xf32, #tpu.memory_space<vmem>>, vector<16x128xf32>,
      %cst_14 = arith.constant dense<0.000000e+00> : vector<16xf32>
      %14 = vector.multi_reduction <add>, %12, %cst_14 [1] : vector<16x128xf32> to vector<16xf32>
      %15 = vector.shape_cast %14 : vector<16xf32> to vector<16x1xf32>
      %16 = arith.mulf %12, %12 : vector<16x128xf32>
      %cst_15 = arith.constant dense<0.000000e+00> : vector<16xf32>
      %17 = vector.multi_reduction <add>, %16, %cst_15 [1] : vector<16x128xf32> to vector<16xf32>
      %18 = vector.shape_cast %17 : vector<16xf32> to vector<16x1xf32>
      %19 = vector.shape_cast %15 : vector<16x1xf32> to vector<16x1xf32>
      %20 = vector.broadcast %19 : vector<16x1xf32> to vector<16x128xf32>
      %c0_16 = arith.constant 0 : index
      %c0_17 = arith.constant 0 : index
      %21 = vector.load %arg5[%c0_16, %c0_17] : memref<16x128xf32, #tpu.memory_space<vmem>>, vector<16x128xf32>
      tpu.vector_store %arg5[%c0_16, %c0_17], %20 {strides = array<i32>} : memref<16x128xf32, #tpu.memory_space<vmem>>, vector<16x128xf32>,
      %22 = vector.shape_cast %18 : vector<16x1xf32> to vector<16x1xf32>
      %23 = vector.broadcast %22 : vector<16x1xf32> to vector<16x128xf32>
      %c0_18 = arith.constant 0 : index
      %c0_19 = arith.constant 0 : index
      %24 = vector.load %arg6[%c0_18, %c0_19] : memref<16x128xf32, #tpu.memory_space<vmem>>, vector<16x128xf32>
      tpu.vector_store %arg6[%c0_18, %c0_19], %23 {strides = array<i32>} : memref<16x128xf32, #tpu.memory_space<vmem>>, vector<16x128xf32>,
    } else {
    }
    return
  }
  func.func @transform_0(%arg0: i32, %arg1: i32) -> (i32, i32) {
    %c0_i32 = arith.constant 0 : i32
    %c0_i32_0 = arith.constant 0 : i32
    return %c0_i32, %arg1 : i32, i32
  }
  func.func @transform_1(%arg0: i32, %arg1: i32) -> (i32, i32) {
    %c0_i32 = arith.constant 0 : i32
    return %arg1, %arg0 : i32, i32
  }
  func.func @transform_2(%arg0: i32, %arg1: i32) -> (i32, i32) {
    %c0_i32 = arith.constant 0 : i32
    %c0_i32_0 = arith.constant 0 : i32
    return %c0_i32, %arg0 : i32, i32
  }
  func.func @transform_3(%arg0: i32, %arg1: i32) -> (i32, i32) {
    %c0_i32 = arith.constant 0 : i32
    %c0_i32_0 = arith.constant 0 : i32
    return %c0_i32, %arg0 : i32, i32
  }
  func.func @transform_4(%arg0: i32, %arg1: i32) -> (i32, i32) {
    %c0_i32 = arith.constant 0 : i32
    %c0_i32_0 = arith.constant 0 : i32
    return %c0_i32, %arg0 : i32, i32
  }
}

module attributes {stable_mosaic.version = 11 : i64} {
  func.func @kernel(%arg0: i32, %arg1: memref<16x128xf32, #tpu.memory_space<vmem>>, %arg2: memref<16x1xf32, #tpu.memory_space<vmem>>, %arg3: memref<16x1xf32, #tpu.memory_space<vmem>>, %arg4: memref<16x128xf32, #tpu.memory_space<vmem>>) attributes {dimension_semantics = [#tpu.dimension_semantics<parallel>], iteration_bounds = array<i64: 1>, scalar_prefetch = 0 : i64, scratch_operands = 0 : i64, tpu.core_type = #tpu.core_type<tc>, window_params = [{transform_indices = @transform_0, window_bounds = array<i64: 16, 128>}, {pipeline_mode = #tpu.pipeline_mode<synchronous>, transform_indices = @transform_1, window_bounds = array<i64: 16, 1>}, {pipeline_mode = #tpu.pipeline_mode<synchronous>, transform_indices = @transform_2, window_bounds = array<i64: 16, 1>}, {transform_indices = @transform_3, window_bounds = array<i64: 16, 128>}]} {
    %c0 = arith.constant 0 : index
    %c0_0 = arith.constant 0 : index
    %0 = vector.load %arg1[%c0, %c0_0] : memref<16x128xf32, #tpu.memory_space<vmem>>, vector<16x128xf32>
    %c0_1 = arith.constant 0 : index
    %c0_2 = arith.constant 0 : index
    %1 = vector.load %arg2[%c0_1, %c0_2] : memref<16x1xf32, #tpu.memory_space<vmem>>, vector<16x1xf32>
    %2 = vector.broadcast %1 : vector<16x1xf32> to vector<16x128xf32>
    %3 = arith.mulf %0, %2 : vector<16x128xf32>
    %c0_3 = arith.constant 0 : index
    %c0_4 = arith.constant 0 : index
    %4 = vector.load %arg3[%c0_3, %c0_4] : memref<16x1xf32, #tpu.memory_space<vmem>>, vector<16x1xf32>
    %5 = vector.broadcast %4 : vector<16x1xf32> to vector<16x128xf32>
    %6 = arith.addf %3, %5 : vector<16x128xf32>
    %cst = arith.constant 0.000000e+00 : f32
    %7 = vector.broadcast %cst : f32 to vector<16x128xf32>
    %8 = arith.maximumf %6, %7 : vector<16x128xf32>
    %c0_5 = arith.constant 0 : index
    %c0_6 = arith.constant 0 : index
    %9 = vector.load %arg4[%c0_5, %c0_6] : memref<16x128xf32, #tpu.memory_space<vmem>>, vector<16x128xf32>
    tpu.vector_store %arg4[%c0_5, %c0_6], %8 {strides = array<i32>} : memref<16x128xf32, #tpu.memory_space<vmem>>, vector<16x128xf32>,
    return
  }
  func.func @transform_0(%arg0: i32) -> (i32, i32) {
    %c0_i32 = arith.constant 0 : i32
    %c0_i32_0 = arith.constant 0 : i32
    return %c0_i32, %arg0 : i32, i32
  }
  func.func @transform_1(%arg0: i32) -> (i32, i32) {
    %c0_i32 = arith.constant 0 : i32
    %c0_i32_0 = arith.constant 0 : i32
    %c0_i32_1 = arith.constant 0 : i32
    return %c0_i32, %c0_i32_0 : i32, i32
  }
  func.func @transform_2(%arg0: i32) -> (i32, i32) {
    %c0_i32 = arith.constant 0 : i32
    %c0_i32_0 = arith.constant 0 : i32
    %c0_i32_1 = arith.constant 0 : i32
    return %c0_i32, %c0_i32_0 : i32, i32
  }
  func.func @transform_3(%arg0: i32) -> (i32, i32) {
    %c0_i32 = arith.constant 0 : i32
    %c0_i32_0 = arith.constant 0 : i32
    return %c0_i32, %arg0 : i32, i32
  }
}

module attributes {stable_mosaic.version = 11 : i64} {
  func.func @_matmul_stats_kernel(%arg0: i32, %arg1: i32, %arg2: memref<16x128xbf16, #tpu.memory_space<vmem>>, %arg3: memref<128x128xbf16, #tpu.memory_space<vmem>>, %arg4: memref<16x128xf32, #tpu.memory_space<vmem>>, %arg5: memref<16x128xf32, #tpu.memory_space<vmem>>, %arg6: memref<16x128xf32, #tpu.memory_space<vmem>>, %arg7: memref<16x128xf32, #tpu.memory_space<vmem>>) attributes {dimension_semantics = [#tpu.dimension_semantics<parallel>, #tpu.dimension_semantics<arbitrary>], iteration_bounds = array<i64: 1, 1>, scalar_prefetch = 0 : i64, scratch_operands = 1 : i64, tpu.core_type = #tpu.core_type<tc>, window_params = [{transform_indices = @transform_0, window_bounds = array<i64: 16, 128>}, {transform_indices = @transform_1, window_bounds = array<i64: 128, 128>}, {transform_indices = @transform_2, window_bounds = array<i64: 16, 128>}, {transform_indices = @transform_3, window_bounds = array<i64: 16, 128>}, {transform_indices = @transform_4, window_bounds = array<i64: 16, 128>}]} {
    %c0_i32 = arith.constant 0 : i32
    %0 = arith.cmpi eq, %arg1, %c0_i32 : i32
    %1 = arith.extui %0 : i1 to i32
    %c0_i32_0 = arith.constant 0 : i32
    %2 = arith.cmpi ne, %1, %c0_i32_0 : i32
    scf.if %2 {
      %cst_10 = arith.constant 0.000000e+00 : f32
      %12 = vector.broadcast %cst_10 : f32 to vector<16x128xf32>
      %c0_11 = arith.constant 0 : index
      %c0_12 = arith.constant 0 : index
      %13 = vector.load %arg7[%c0_11, %c0_12] : memref<16x128xf32, #tpu.memory_space<vmem>>, vector<16x128xf32>
      tpu.vector_store %arg7[%c0_11, %c0_12], %12 {strides = array<i32>} : memref<16x128xf32, #tpu.memory_space<vmem>>, vector<16x128xf32>,
    } else {
    }
    %c0 = arith.constant 0 : index
    %c0_1 = arith.constant 0 : index
    %3 = vector.load %arg7[%c0, %c0_1] : memref<16x128xf32, #tpu.memory_space<vmem>>, vector<16x128xf32>
    %c0_2 = arith.constant 0 : index
    %c0_3 = arith.constant 0 : index
    %4 = vector.load %arg2[%c0_2, %c0_3] : memref<16x128xbf16, #tpu.memory_space<vmem>>, vector<16x128xbf16>
    %c0_4 = arith.constant 0 : index
    %c0_5 = arith.constant 0 : index
    %5 = vector.load %arg3[%c0_4, %c0_5] : memref<128x128xbf16, #tpu.memory_space<vmem>>, vector<128x128xbf16>
    %cst = arith.constant dense<0.000000e+00> : vector<16x128xf32>
    %6 = tpu.matmul %4, %5, %cst {dimension_numbers = #tpu.dot_dimension_numbers<[1], [0], [0], [1], [0, 0, 1, 1], [], []>} : vector<16x128xbf16>, vector<128x128xbf16>, vector<16x128xf32> -> vector<16x128xf32>
    %7 = arith.addf %3, %6 : vector<16x128xf32>
    %c0_6 = arith.constant 0 : index
    %c0_7 = arith.constant 0 : index
    %8 = vector.load %arg7[%c0_6, %c0_7] : memref<16x128xf32, #tpu.memory_space<vmem>>, vector<16x128xf32>
    tpu.vector_store %arg7[%c0_6, %c0_7], %7 {strides = array<i32>} : memref<16x128xf32, #tpu.memory_space<vmem>>, vector<16x128xf32>,
    %c0_i32_8 = arith.constant 0 : i32
    %9 = arith.cmpi eq, %arg1, %c0_i32_8 : i32
    %10 = arith.extui %9 : i1 to i32
    %c0_i32_9 = arith.constant 0 : i32
    %11 = arith.cmpi ne, %10, %c0_i32_9 : i32
    scf.if %11 {
      %c0_10 = arith.constant 0 : index
      %c0_11 = arith.constant 0 : index
      %12 = vector.load %arg7[%c0_10, %c0_11] : memref<16x128xf32, #tpu.memory_space<vmem>>, vector<16x128xf32>
      %c0_12 = arith.constant 0 : index
      %c0_13 = arith.constant 0 : index
      %13 = vector.load %arg4[%c0_12, %c0_13] : memref<16x128xf32, #tpu.memory_space<vmem>>, vector<16x128xf32>
      tpu.vector_store %arg4[%c0_12, %c0_13], %12 {strides = array<i32>} : memref<16x128xf32, #tpu.memory_space<vmem>>, vector<16x128xf32>,
      %cst_14 = arith.constant dense<0.000000e+00> : vector<16xf32>
      %14 = vector.multi_reduction <add>, %12, %cst_14 [1] : vector<16x128xf32> to vector<16xf32>
      %15 = vector.shape_cast %14 : vector<16xf32> to vector<16x1xf32>
      %16 = arith.mulf %12, %12 : vector<16x128xf32>
      %cst_15 = arith.constant dense<0.000000e+00> : vector<16xf32>
      %17 = vector.multi_reduction <add>, %16, %cst_15 [1] : vector<16x128xf32> to vector<16xf32>
      %18 = vector.shape_cast %17 : vector<16xf32> to vector<16x1xf32>
      %19 = vector.shape_cast %15 : vector<16x1xf32> to vector<16x1xf32>
      %20 = vector.broadcast %19 : vector<16x1xf32> to vector<16x128xf32>
      %c0_16 = arith.constant 0 : index
      %c0_17 = arith.constant 0 : index
      %21 = vector.load %arg5[%c0_16, %c0_17] : memref<16x128xf32, #tpu.memory_space<vmem>>, vector<16x128xf32>
      tpu.vector_store %arg5[%c0_16, %c0_17], %20 {strides = array<i32>} : memref<16x128xf32, #tpu.memory_space<vmem>>, vector<16x128xf32>,
      %22 = vector.shape_cast %18 : vector<16x1xf32> to vector<16x1xf32>
      %23 = vector.broadcast %22 : vector<16x1xf32> to vector<16x128xf32>
      %c0_18 = arith.constant 0 : index
      %c0_19 = arith.constant 0 : index
      %24 = vector.load %arg6[%c0_18, %c0_19] : memref<16x128xf32, #tpu.memory_space<vmem>>, vector<16x128xf32>
      tpu.vector_store %arg6[%c0_18, %c0_19], %23 {strides = array<i32>} : memref<16x128xf32, #tpu.memory_space<vmem>>, vector<16x128xf32>,
    } else {
    }
    return
  }
  func.func @transform_0(%arg0: i32, %arg1: i32) -> (i32, i32) {
    %c0_i32 = arith.constant 0 : i32
    %c0_i32_0 = arith.constant 0 : i32
    return %c0_i32, %arg1 : i32, i32
  }
  func.func @transform_1(%arg0: i32, %arg1: i32) -> (i32, i32) {
    %c0_i32 = arith.constant 0 : i32
    return %arg1, %arg0 : i32, i32
  }
  func.func @transform_2(%arg0: i32, %arg1: i32) -> (i32, i32) {
    %c0_i32 = arith.constant 0 : i32
    %c0_i32_0 = arith.constant 0 : i32
    return %c0_i32, %arg0 : i32, i32
  }
  func.func @transform_3(%arg0: i32, %arg1: i32) -> (i32, i32) {
    %c0_i32 = arith.constant 0 : i32
    %c0_i32_0 = arith.constant 0 : i32
    return %c0_i32, %arg0 : i32, i32
  }
  func.func @transform_4(%arg0: i32, %arg1: i32) -> (i32, i32) {
    %c0_i32 = arith.constant 0 : i32
    %c0_i32_0 = arith.constant 0 : i32
    return %c0_i32, %arg0 : i32, i32
  }
}

module attributes {stable_mosaic.version = 11 : i64} {
  func.func @_matmul_stats_kernel(%arg0: i32, %arg1: i32, %arg2: memref<32x256xbf16, #tpu.memory_space<vmem>>, %arg3: memref<256x128xbf16, #tpu.memory_space<vmem>>, %arg4: memref<32x128xf32, #tpu.memory_space<vmem>>, %arg5: memref<32x128xf32, #tpu.memory_space<vmem>>, %arg6: memref<32x128xf32, #tpu.memory_space<vmem>>, %arg7: memref<32x128xf32, #tpu.memory_space<vmem>>) attributes {dimension_semantics = [#tpu.dimension_semantics<parallel>, #tpu.dimension_semantics<arbitrary>], iteration_bounds = array<i64: 1, 1>, scalar_prefetch = 0 : i64, scratch_operands = 1 : i64, tpu.core_type = #tpu.core_type<tc>, window_params = [{transform_indices = @transform_0, window_bounds = array<i64: 32, 256>}, {transform_indices = @transform_1, window_bounds = array<i64: 256, 128>}, {transform_indices = @transform_2, window_bounds = array<i64: 32, 128>}, {transform_indices = @transform_3, window_bounds = array<i64: 32, 128>}, {transform_indices = @transform_4, window_bounds = array<i64: 32, 128>}]} {
    %c0_i32 = arith.constant 0 : i32
    %0 = arith.cmpi eq, %arg1, %c0_i32 : i32
    %1 = arith.extui %0 : i1 to i32
    %c0_i32_0 = arith.constant 0 : i32
    %2 = arith.cmpi ne, %1, %c0_i32_0 : i32
    scf.if %2 {
      %cst_10 = arith.constant 0.000000e+00 : f32
      %12 = vector.broadcast %cst_10 : f32 to vector<32x128xf32>
      %c0_11 = arith.constant 0 : index
      %c0_12 = arith.constant 0 : index
      %13 = vector.load %arg7[%c0_11, %c0_12] : memref<32x128xf32, #tpu.memory_space<vmem>>, vector<32x128xf32>
      tpu.vector_store %arg7[%c0_11, %c0_12], %12 {strides = array<i32>} : memref<32x128xf32, #tpu.memory_space<vmem>>, vector<32x128xf32>,
    } else {
    }
    %c0 = arith.constant 0 : index
    %c0_1 = arith.constant 0 : index
    %3 = vector.load %arg7[%c0, %c0_1] : memref<32x128xf32, #tpu.memory_space<vmem>>, vector<32x128xf32>
    %c0_2 = arith.constant 0 : index
    %c0_3 = arith.constant 0 : index
    %4 = vector.load %arg2[%c0_2, %c0_3] : memref<32x256xbf16, #tpu.memory_space<vmem>>, vector<32x256xbf16>
    %c0_4 = arith.constant 0 : index
    %c0_5 = arith.constant 0 : index
    %5 = vector.load %arg3[%c0_4, %c0_5] : memref<256x128xbf16, #tpu.memory_space<vmem>>, vector<256x128xbf16>
    %cst = arith.constant dense<0.000000e+00> : vector<32x128xf32>
    %6 = tpu.matmul %4, %5, %cst {dimension_numbers = #tpu.dot_dimension_numbers<[1], [0], [0], [1], [0, 0, 1, 1], [], []>} : vector<32x256xbf16>, vector<256x128xbf16>, vector<32x128xf32> -> vector<32x128xf32>
    %7 = arith.addf %3, %6 : vector<32x128xf32>
    %c0_6 = arith.constant 0 : index
    %c0_7 = arith.constant 0 : index
    %8 = vector.load %arg7[%c0_6, %c0_7] : memref<32x128xf32, #tpu.memory_space<vmem>>, vector<32x128xf32>
    tpu.vector_store %arg7[%c0_6, %c0_7], %7 {strides = array<i32>} : memref<32x128xf32, #tpu.memory_space<vmem>>, vector<32x128xf32>,
    %c0_i32_8 = arith.constant 0 : i32
    %9 = arith.cmpi eq, %arg1, %c0_i32_8 : i32
    %10 = arith.extui %9 : i1 to i32
    %c0_i32_9 = arith.constant 0 : i32
    %11 = arith.cmpi ne, %10, %c0_i32_9 : i32
    scf.if %11 {
      %c0_10 = arith.constant 0 : index
      %c0_11 = arith.constant 0 : index
      %12 = vector.load %arg7[%c0_10, %c0_11] : memref<32x128xf32, #tpu.memory_space<vmem>>, vector<32x128xf32>
      %c0_12 = arith.constant 0 : index
      %c0_13 = arith.constant 0 : index
      %13 = vector.load %arg4[%c0_12, %c0_13] : memref<32x128xf32, #tpu.memory_space<vmem>>, vector<32x128xf32>
      tpu.vector_store %arg4[%c0_12, %c0_13], %12 {strides = array<i32>} : memref<32x128xf32, #tpu.memory_space<vmem>>, vector<32x128xf32>,
      %cst_14 = arith.constant dense<0.000000e+00> : vector<32xf32>
      %14 = vector.multi_reduction <add>, %12, %cst_14 [1] : vector<32x128xf32> to vector<32xf32>
      %15 = vector.shape_cast %14 : vector<32xf32> to vector<32x1xf32>
      %16 = arith.mulf %12, %12 : vector<32x128xf32>
      %cst_15 = arith.constant dense<0.000000e+00> : vector<32xf32>
      %17 = vector.multi_reduction <add>, %16, %cst_15 [1] : vector<32x128xf32> to vector<32xf32>
      %18 = vector.shape_cast %17 : vector<32xf32> to vector<32x1xf32>
      %19 = vector.shape_cast %15 : vector<32x1xf32> to vector<32x1xf32>
      %20 = vector.broadcast %19 : vector<32x1xf32> to vector<32x128xf32>
      %c0_16 = arith.constant 0 : index
      %c0_17 = arith.constant 0 : index
      %21 = vector.load %arg5[%c0_16, %c0_17] : memref<32x128xf32, #tpu.memory_space<vmem>>, vector<32x128xf32>
      tpu.vector_store %arg5[%c0_16, %c0_17], %20 {strides = array<i32>} : memref<32x128xf32, #tpu.memory_space<vmem>>, vector<32x128xf32>,
      %22 = vector.shape_cast %18 : vector<32x1xf32> to vector<32x1xf32>
      %23 = vector.broadcast %22 : vector<32x1xf32> to vector<32x128xf32>
      %c0_18 = arith.constant 0 : index
      %c0_19 = arith.constant 0 : index
      %24 = vector.load %arg6[%c0_18, %c0_19] : memref<32x128xf32, #tpu.memory_space<vmem>>, vector<32x128xf32>
      tpu.vector_store %arg6[%c0_18, %c0_19], %23 {strides = array<i32>} : memref<32x128xf32, #tpu.memory_space<vmem>>, vector<32x128xf32>,
    } else {
    }
    return
  }
  func.func @transform_0(%arg0: i32, %arg1: i32) -> (i32, i32) {
    %c0_i32 = arith.constant 0 : i32
    %c0_i32_0 = arith.constant 0 : i32
    return %c0_i32, %arg1 : i32, i32
  }
  func.func @transform_1(%arg0: i32, %arg1: i32) -> (i32, i32) {
    %c0_i32 = arith.constant 0 : i32
    return %arg1, %arg0 : i32, i32
  }
  func.func @transform_2(%arg0: i32, %arg1: i32) -> (i32, i32) {
    %c0_i32 = arith.constant 0 : i32
    %c0_i32_0 = arith.constant 0 : i32
    return %c0_i32, %arg0 : i32, i32
  }
  func.func @transform_3(%arg0: i32, %arg1: i32) -> (i32, i32) {
    %c0_i32 = arith.constant 0 : i32
    %c0_i32_0 = arith.constant 0 : i32
    return %c0_i32, %arg0 : i32, i32
  }
  func.func @transform_4(%arg0: i32, %arg1: i32) -> (i32, i32) {
    %c0_i32 = arith.constant 0 : i32
    %c0_i32_0 = arith.constant 0 : i32
    return %c0_i32, %arg0 : i32, i32
  }
}

module attributes {stable_mosaic.version = 11 : i64} {
  func.func @kernel(%arg0: i32, %arg1: memref<32x128xf32, #tpu.memory_space<vmem>>, %arg2: memref<32x1xf32, #tpu.memory_space<vmem>>, %arg3: memref<32x1xf32, #tpu.memory_space<vmem>>, %arg4: memref<32x128xf32, #tpu.memory_space<vmem>>) attributes {dimension_semantics = [#tpu.dimension_semantics<parallel>], iteration_bounds = array<i64: 1>, scalar_prefetch = 0 : i64, scratch_operands = 0 : i64, tpu.core_type = #tpu.core_type<tc>, window_params = [{transform_indices = @transform_0, window_bounds = array<i64: 32, 128>}, {pipeline_mode = #tpu.pipeline_mode<synchronous>, transform_indices = @transform_1, window_bounds = array<i64: 32, 1>}, {pipeline_mode = #tpu.pipeline_mode<synchronous>, transform_indices = @transform_2, window_bounds = array<i64: 32, 1>}, {transform_indices = @transform_3, window_bounds = array<i64: 32, 128>}]} {
    %c0 = arith.constant 0 : index
    %c0_0 = arith.constant 0 : index
    %0 = vector.load %arg1[%c0, %c0_0] : memref<32x128xf32, #tpu.memory_space<vmem>>, vector<32x128xf32>
    %c0_1 = arith.constant 0 : index
    %c0_2 = arith.constant 0 : index
    %1 = vector.load %arg2[%c0_1, %c0_2] : memref<32x1xf32, #tpu.memory_space<vmem>>, vector<32x1xf32>
    %2 = vector.broadcast %1 : vector<32x1xf32> to vector<32x128xf32>
    %3 = arith.mulf %0, %2 : vector<32x128xf32>
    %c0_3 = arith.constant 0 : index
    %c0_4 = arith.constant 0 : index
    %4 = vector.load %arg3[%c0_3, %c0_4] : memref<32x1xf32, #tpu.memory_space<vmem>>, vector<32x1xf32>
    %5 = vector.broadcast %4 : vector<32x1xf32> to vector<32x128xf32>
    %6 = arith.addf %3, %5 : vector<32x128xf32>
    %cst = arith.constant 0.000000e+00 : f32
    %7 = vector.broadcast %cst : f32 to vector<32x128xf32>
    %8 = arith.maximumf %6, %7 : vector<32x128xf32>
    %c0_5 = arith.constant 0 : index
    %c0_6 = arith.constant 0 : index
    %9 = vector.load %arg4[%c0_5, %c0_6] : memref<32x128xf32, #tpu.memory_space<vmem>>, vector<32x128xf32>
    tpu.vector_store %arg4[%c0_5, %c0_6], %8 {strides = array<i32>} : memref<32x128xf32, #tpu.memory_space<vmem>>, vector<32x128xf32>,
    return
  }
  func.func @transform_0(%arg0: i32) -> (i32, i32) {
    %c0_i32 = arith.constant 0 : i32
    %c0_i32_0 = arith.constant 0 : i32
    return %c0_i32, %arg0 : i32, i32
  }
  func.func @transform_1(%arg0: i32) -> (i32, i32) {
    %c0_i32 = arith.constant 0 : i32
    %c0_i32_0 = arith.constant 0 : i32
    %c0_i32_1 = arith.constant 0 : i32
    return %c0_i32, %c0_i32_0 : i32, i32
  }
  func.func @transform_2(%arg0: i32) -> (i32, i32) {
    %c0_i32 = arith.constant 0 : i32
    %c0_i32_0 = arith.constant 0 : i32
    %c0_i32_1 = arith.constant 0 : i32
    return %c0_i32, %c0_i32_0 : i32, i32
  }
  func.func @transform_3(%arg0: i32) -> (i32, i32) {
    %c0_i32 = arith.constant 0 : i32
    %c0_i32_0 = arith.constant 0 : i32
    return %c0_i32, %arg0 : i32, i32
  }
}

module attributes {stable_mosaic.version = 11 : i64} {
  func.func @_matmul_stats_kernel(%arg0: i32, %arg1: i32, %arg2: memref<32x288xbf16, #tpu.memory_space<vmem>>, %arg3: memref<288x128xbf16, #tpu.memory_space<vmem>>, %arg4: memref<32x128xf32, #tpu.memory_space<vmem>>, %arg5: memref<32x128xf32, #tpu.memory_space<vmem>>, %arg6: memref<32x128xf32, #tpu.memory_space<vmem>>, %arg7: memref<32x128xf32, #tpu.memory_space<vmem>>) attributes {dimension_semantics = [#tpu.dimension_semantics<parallel>, #tpu.dimension_semantics<arbitrary>], iteration_bounds = array<i64: 1, 1>, scalar_prefetch = 0 : i64, scratch_operands = 1 : i64, tpu.core_type = #tpu.core_type<tc>, window_params = [{transform_indices = @transform_0, window_bounds = array<i64: 32, 288>}, {transform_indices = @transform_1, window_bounds = array<i64: 288, 128>}, {transform_indices = @transform_2, window_bounds = array<i64: 32, 128>}, {transform_indices = @transform_3, window_bounds = array<i64: 32, 128>}, {transform_indices = @transform_4, window_bounds = array<i64: 32, 128>}]} {
    %c0_i32 = arith.constant 0 : i32
    %0 = arith.cmpi eq, %arg1, %c0_i32 : i32
    %1 = arith.extui %0 : i1 to i32
    %c0_i32_0 = arith.constant 0 : i32
    %2 = arith.cmpi ne, %1, %c0_i32_0 : i32
    scf.if %2 {
      %cst_10 = arith.constant 0.000000e+00 : f32
      %12 = vector.broadcast %cst_10 : f32 to vector<32x128xf32>
      %c0_11 = arith.constant 0 : index
      %c0_12 = arith.constant 0 : index
      %13 = vector.load %arg7[%c0_11, %c0_12] : memref<32x128xf32, #tpu.memory_space<vmem>>, vector<32x128xf32>
      tpu.vector_store %arg7[%c0_11, %c0_12], %12 {strides = array<i32>} : memref<32x128xf32, #tpu.memory_space<vmem>>, vector<32x128xf32>,
    } else {
    }
    %c0 = arith.constant 0 : index
    %c0_1 = arith.constant 0 : index
    %3 = vector.load %arg7[%c0, %c0_1] : memref<32x128xf32, #tpu.memory_space<vmem>>, vector<32x128xf32>
    %c0_2 = arith.constant 0 : index
    %c0_3 = arith.constant 0 : index
    %4 = vector.load %arg2[%c0_2, %c0_3] : memref<32x288xbf16, #tpu.memory_space<vmem>>, vector<32x288xbf16>
    %c0_4 = arith.constant 0 : index
    %c0_5 = arith.constant 0 : index
    %5 = vector.load %arg3[%c0_4, %c0_5] : memref<288x128xbf16, #tpu.memory_space<vmem>>, vector<288x128xbf16>
    %cst = arith.constant dense<0.000000e+00> : vector<32x128xf32>
    %6 = tpu.matmul %4, %5, %cst {dimension_numbers = #tpu.dot_dimension_numbers<[1], [0], [0], [1], [0, 0, 1, 1], [], []>} : vector<32x288xbf16>, vector<288x128xbf16>, vector<32x128xf32> -> vector<32x128xf32>
    %7 = arith.addf %3, %6 : vector<32x128xf32>
    %c0_6 = arith.constant 0 : index
    %c0_7 = arith.constant 0 : index
    %8 = vector.load %arg7[%c0_6, %c0_7] : memref<32x128xf32, #tpu.memory_space<vmem>>, vector<32x128xf32>
    tpu.vector_store %arg7[%c0_6, %c0_7], %7 {strides = array<i32>} : memref<32x128xf32, #tpu.memory_space<vmem>>, vector<32x128xf32>,
    %c0_i32_8 = arith.constant 0 : i32
    %9 = arith.cmpi eq, %arg1, %c0_i32_8 : i32
    %10 = arith.extui %9 : i1 to i32
    %c0_i32_9 = arith.constant 0 : i32
    %11 = arith.cmpi ne, %10, %c0_i32_9 : i32
    scf.if %11 {
      %c0_10 = arith.constant 0 : index
      %c0_11 = arith.constant 0 : index
      %12 = vector.load %arg7[%c0_10, %c0_11] : memref<32x128xf32, #tpu.memory_space<vmem>>, vector<32x128xf32>
      %c0_12 = arith.constant 0 : index
      %c0_13 = arith.constant 0 : index
      %13 = vector.load %arg4[%c0_12, %c0_13] : memref<32x128xf32, #tpu.memory_space<vmem>>, vector<32x128xf32>
      tpu.vector_store %arg4[%c0_12, %c0_13], %12 {strides = array<i32>} : memref<32x128xf32, #tpu.memory_space<vmem>>, vector<32x128xf32>,
      %cst_14 = arith.constant dense<0.000000e+00> : vector<32xf32>
      %14 = vector.multi_reduction <add>, %12, %cst_14 [1] : vector<32x128xf32> to vector<32xf32>
      %15 = vector.shape_cast %14 : vector<32xf32> to vector<32x1xf32>
      %16 = arith.mulf %12, %12 : vector<32x128xf32>
      %cst_15 = arith.constant dense<0.000000e+00> : vector<32xf32>
      %17 = vector.multi_reduction <add>, %16, %cst_15 [1] : vector<32x128xf32> to vector<32xf32>
      %18 = vector.shape_cast %17 : vector<32xf32> to vector<32x1xf32>
      %19 = vector.shape_cast %15 : vector<32x1xf32> to vector<32x1xf32>
      %20 = vector.broadcast %19 : vector<32x1xf32> to vector<32x128xf32>
      %c0_16 = arith.constant 0 : index
      %c0_17 = arith.constant 0 : index
      %21 = vector.load %arg5[%c0_16, %c0_17] : memref<32x128xf32, #tpu.memory_space<vmem>>, vector<32x128xf32>
      tpu.vector_store %arg5[%c0_16, %c0_17], %20 {strides = array<i32>} : memref<32x128xf32, #tpu.memory_space<vmem>>, vector<32x128xf32>,
      %22 = vector.shape_cast %18 : vector<32x1xf32> to vector<32x1xf32>
      %23 = vector.broadcast %22 : vector<32x1xf32> to vector<32x128xf32>
      %c0_18 = arith.constant 0 : index
      %c0_19 = arith.constant 0 : index
      %24 = vector.load %arg6[%c0_18, %c0_19] : memref<32x128xf32, #tpu.memory_space<vmem>>, vector<32x128xf32>
      tpu.vector_store %arg6[%c0_18, %c0_19], %23 {strides = array<i32>} : memref<32x128xf32, #tpu.memory_space<vmem>>, vector<32x128xf32>,
    } else {
    }
    return
  }
  func.func @transform_0(%arg0: i32, %arg1: i32) -> (i32, i32) {
    %c0_i32 = arith.constant 0 : i32
    %c0_i32_0 = arith.constant 0 : i32
    return %c0_i32, %arg1 : i32, i32
  }
  func.func @transform_1(%arg0: i32, %arg1: i32) -> (i32, i32) {
    %c0_i32 = arith.constant 0 : i32
    return %arg1, %arg0 : i32, i32
  }
  func.func @transform_2(%arg0: i32, %arg1: i32) -> (i32, i32) {
    %c0_i32 = arith.constant 0 : i32
    %c0_i32_0 = arith.constant 0 : i32
    return %c0_i32, %arg0 : i32, i32
  }
  func.func @transform_3(%arg0: i32, %arg1: i32) -> (i32, i32) {
    %c0_i32 = arith.constant 0 : i32
    %c0_i32_0 = arith.constant 0 : i32
    return %c0_i32, %arg0 : i32, i32
  }
  func.func @transform_4(%arg0: i32, %arg1: i32) -> (i32, i32) {
    %c0_i32 = arith.constant 0 : i32
    %c0_i32_0 = arith.constant 0 : i32
    return %c0_i32, %arg0 : i32, i32
  }
}

module attributes {stable_mosaic.version = 11 : i64} {
  func.func @kernel(%arg0: i32, %arg1: memref<32x128xf32, #tpu.memory_space<vmem>>, %arg2: memref<32x1xf32, #tpu.memory_space<vmem>>, %arg3: memref<32x1xf32, #tpu.memory_space<vmem>>, %arg4: memref<32x128xf32, #tpu.memory_space<vmem>>, %arg5: memref<32x128xf32, #tpu.memory_space<vmem>>) attributes {dimension_semantics = [#tpu.dimension_semantics<parallel>], iteration_bounds = array<i64: 1>, scalar_prefetch = 0 : i64, scratch_operands = 0 : i64, tpu.core_type = #tpu.core_type<tc>, window_params = [{transform_indices = @transform_0, window_bounds = array<i64: 32, 128>}, {pipeline_mode = #tpu.pipeline_mode<synchronous>, transform_indices = @transform_1, window_bounds = array<i64: 32, 1>}, {pipeline_mode = #tpu.pipeline_mode<synchronous>, transform_indices = @transform_2, window_bounds = array<i64: 32, 1>}, {transform_indices = @transform_3, window_bounds = array<i64: 32, 128>}, {transform_indices = @transform_4, window_bounds = array<i64: 32, 128>}]} {
    %c0 = arith.constant 0 : index
    %c0_0 = arith.constant 0 : index
    %0 = vector.load %arg1[%c0, %c0_0] : memref<32x128xf32, #tpu.memory_space<vmem>>, vector<32x128xf32>
    %c0_1 = arith.constant 0 : index
    %c0_2 = arith.constant 0 : index
    %1 = vector.load %arg2[%c0_1, %c0_2] : memref<32x1xf32, #tpu.memory_space<vmem>>, vector<32x1xf32>
    %2 = vector.broadcast %1 : vector<32x1xf32> to vector<32x128xf32>
    %3 = arith.mulf %0, %2 : vector<32x128xf32>
    %c0_3 = arith.constant 0 : index
    %c0_4 = arith.constant 0 : index
    %4 = vector.load %arg3[%c0_3, %c0_4] : memref<32x1xf32, #tpu.memory_space<vmem>>, vector<32x1xf32>
    %5 = vector.broadcast %4 : vector<32x1xf32> to vector<32x128xf32>
    %6 = arith.addf %3, %5 : vector<32x128xf32>
    %c0_5 = arith.constant 0 : index
    %c0_6 = arith.constant 0 : index
    %7 = vector.load %arg4[%c0_5, %c0_6] : memref<32x128xf32, #tpu.memory_space<vmem>>, vector<32x128xf32>
    %8 = arith.addf %6, %7 : vector<32x128xf32>
    %c0_7 = arith.constant 0 : index
    %c0_8 = arith.constant 0 : index
    %9 = vector.load %arg5[%c0_7, %c0_8] : memref<32x128xf32, #tpu.memory_space<vmem>>, vector<32x128xf32>
    tpu.vector_store %arg5[%c0_7, %c0_8], %8 {strides = array<i32>} : memref<32x128xf32, #tpu.memory_space<vmem>>, vector<32x128xf32>,
    return
  }
  func.func @transform_0(%arg0: i32) -> (i32, i32) {
    %c0_i32 = arith.constant 0 : i32
    %c0_i32_0 = arith.constant 0 : i32
    return %c0_i32, %arg0 : i32, i32
  }
  func.func @transform_1(%arg0: i32) -> (i32, i32) {
    %c0_i32 = arith.constant 0 : i32
    %c0_i32_0 = arith.constant 0 : i32
    %c0_i32_1 = arith.constant 0 : i32
    return %c0_i32, %c0_i32_0 : i32, i32
  }
  func.func @transform_2(%arg0: i32) -> (i32, i32) {
    %c0_i32 = arith.constant 0 : i32
    %c0_i32_0 = arith.constant 0 : i32
    %c0_i32_1 = arith.constant 0 : i32
    return %c0_i32, %c0_i32_0 : i32, i32
  }
  func.func @transform_3(%arg0: i32) -> (i32, i32) {
    %c0_i32 = arith.constant 0 : i32
    %c0_i32_0 = arith.constant 0 : i32
    return %c0_i32, %arg0 : i32, i32
  }
  func.func @transform_4(%arg0: i32) -> (i32, i32) {
    %c0_i32 = arith.constant 0 : i32
    %c0_i32_0 = arith.constant 0 : i32
    return %c0_i32, %arg0 : i32, i32
  }
}

module attributes {stable_mosaic.version = 11 : i64} {
  func.func @_matmul_stats_kernel(%arg0: i32, %arg1: i32, %arg2: memref<256x32xbf16, #tpu.memory_space<vmem>>, %arg3: memref<32x128xbf16, #tpu.memory_space<vmem>>, %arg4: memref<256x128xf32, #tpu.memory_space<vmem>>, %arg5: memref<256x128xf32, #tpu.memory_space<vmem>>, %arg6: memref<256x128xf32, #tpu.memory_space<vmem>>, %arg7: memref<256x128xf32, #tpu.memory_space<vmem>>) attributes {dimension_semantics = [#tpu.dimension_semantics<parallel>, #tpu.dimension_semantics<arbitrary>], iteration_bounds = array<i64: 1, 1>, scalar_prefetch = 0 : i64, scratch_operands = 1 : i64, tpu.core_type = #tpu.core_type<tc>, window_params = [{transform_indices = @transform_0, window_bounds = array<i64: 256, 32>}, {transform_indices = @transform_1, window_bounds = array<i64: 32, 128>}, {transform_indices = @transform_2, window_bounds = array<i64: 256, 128>}, {transform_indices = @transform_3, window_bounds = array<i64: 256, 128>}, {transform_indices = @transform_4, window_bounds = array<i64: 256, 128>}]} {
    %c0_i32 = arith.constant 0 : i32
    %0 = arith.cmpi eq, %arg1, %c0_i32 : i32
    %1 = arith.extui %0 : i1 to i32
    %c0_i32_0 = arith.constant 0 : i32
    %2 = arith.cmpi ne, %1, %c0_i32_0 : i32
    scf.if %2 {
      %cst_10 = arith.constant 0.000000e+00 : f32
      %12 = vector.broadcast %cst_10 : f32 to vector<256x128xf32>
      %c0_11 = arith.constant 0 : index
      %c0_12 = arith.constant 0 : index
      %13 = vector.load %arg7[%c0_11, %c0_12] : memref<256x128xf32, #tpu.memory_space<vmem>>, vector<256x128xf32>
      tpu.vector_store %arg7[%c0_11, %c0_12], %12 {strides = array<i32>} : memref<256x128xf32, #tpu.memory_space<vmem>>, vector<256x128xf32>,
    } else {
    }
    %c0 = arith.constant 0 : index
    %c0_1 = arith.constant 0 : index
    %3 = vector.load %arg7[%c0, %c0_1] : memref<256x128xf32, #tpu.memory_space<vmem>>, vector<256x128xf32>
    %c0_2 = arith.constant 0 : index
    %c0_3 = arith.constant 0 : index
    %4 = vector.load %arg2[%c0_2, %c0_3] : memref<256x32xbf16, #tpu.memory_space<vmem>>, vector<256x32xbf16>
    %c0_4 = arith.constant 0 : index
    %c0_5 = arith.constant 0 : index
    %5 = vector.load %arg3[%c0_4, %c0_5] : memref<32x128xbf16, #tpu.memory_space<vmem>>, vector<32x128xbf16>
    %cst = arith.constant dense<0.000000e+00> : vector<256x128xf32>
    %6 = tpu.matmul %4, %5, %cst {dimension_numbers = #tpu.dot_dimension_numbers<[1], [0], [0], [1], [0, 0, 1, 1], [], []>} : vector<256x32xbf16>, vector<32x128xbf16>, vector<256x128xf32> -> vector<256x128xf32>
    %7 = arith.addf %3, %6 : vector<256x128xf32>
    %c0_6 = arith.constant 0 : index
    %c0_7 = arith.constant 0 : index
    %8 = vector.load %arg7[%c0_6, %c0_7] : memref<256x128xf32, #tpu.memory_space<vmem>>, vector<256x128xf32>
    tpu.vector_store %arg7[%c0_6, %c0_7], %7 {strides = array<i32>} : memref<256x128xf32, #tpu.memory_space<vmem>>, vector<256x128xf32>,
    %c0_i32_8 = arith.constant 0 : i32
    %9 = arith.cmpi eq, %arg1, %c0_i32_8 : i32
    %10 = arith.extui %9 : i1 to i32
    %c0_i32_9 = arith.constant 0 : i32
    %11 = arith.cmpi ne, %10, %c0_i32_9 : i32
    scf.if %11 {
      %c0_10 = arith.constant 0 : index
      %c0_11 = arith.constant 0 : index
      %12 = vector.load %arg7[%c0_10, %c0_11] : memref<256x128xf32, #tpu.memory_space<vmem>>, vector<256x128xf32>
      %c0_12 = arith.constant 0 : index
      %c0_13 = arith.constant 0 : index
      %13 = vector.load %arg4[%c0_12, %c0_13] : memref<256x128xf32, #tpu.memory_space<vmem>>, vector<256x128xf32>
      tpu.vector_store %arg4[%c0_12, %c0_13], %12 {strides = array<i32>} : memref<256x128xf32, #tpu.memory_space<vmem>>, vector<256x128xf32>,
      %cst_14 = arith.constant dense<0.000000e+00> : vector<256xf32>
      %14 = vector.multi_reduction <add>, %12, %cst_14 [1] : vector<256x128xf32> to vector<256xf32>
      %15 = vector.shape_cast %14 : vector<256xf32> to vector<256x1xf32>
      %16 = arith.mulf %12, %12 : vector<256x128xf32>
      %cst_15 = arith.constant dense<0.000000e+00> : vector<256xf32>
      %17 = vector.multi_reduction <add>, %16, %cst_15 [1] : vector<256x128xf32> to vector<256xf32>
      %18 = vector.shape_cast %17 : vector<256xf32> to vector<256x1xf32>
      %19 = vector.shape_cast %15 : vector<256x1xf32> to vector<256x1xf32>
      %20 = vector.broadcast %19 : vector<256x1xf32> to vector<256x128xf32>
      %c0_16 = arith.constant 0 : index
      %c0_17 = arith.constant 0 : index
      %21 = vector.load %arg5[%c0_16, %c0_17] : memref<256x128xf32, #tpu.memory_space<vmem>>, vector<256x128xf32>
      tpu.vector_store %arg5[%c0_16, %c0_17], %20 {strides = array<i32>} : memref<256x128xf32, #tpu.memory_space<vmem>>, vector<256x128xf32>,
      %22 = vector.shape_cast %18 : vector<256x1xf32> to vector<256x1xf32>
      %23 = vector.broadcast %22 : vector<256x1xf32> to vector<256x128xf32>
      %c0_18 = arith.constant 0 : index
      %c0_19 = arith.constant 0 : index
      %24 = vector.load %arg6[%c0_18, %c0_19] : memref<256x128xf32, #tpu.memory_space<vmem>>, vector<256x128xf32>
      tpu.vector_store %arg6[%c0_18, %c0_19], %23 {strides = array<i32>} : memref<256x128xf32, #tpu.memory_space<vmem>>, vector<256x128xf32>,
    } else {
    }
    return
  }
  func.func @transform_0(%arg0: i32, %arg1: i32) -> (i32, i32) {
    %c0_i32 = arith.constant 0 : i32
    %c0_i32_0 = arith.constant 0 : i32
    return %c0_i32, %arg1 : i32, i32
  }
  func.func @transform_1(%arg0: i32, %arg1: i32) -> (i32, i32) {
    %c0_i32 = arith.constant 0 : i32
    return %arg1, %arg0 : i32, i32
  }
  func.func @transform_2(%arg0: i32, %arg1: i32) -> (i32, i32) {
    %c0_i32 = arith.constant 0 : i32
    %c0_i32_0 = arith.constant 0 : i32
    return %c0_i32, %arg0 : i32, i32
  }
  func.func @transform_3(%arg0: i32, %arg1: i32) -> (i32, i32) {
    %c0_i32 = arith.constant 0 : i32
    %c0_i32_0 = arith.constant 0 : i32
    return %c0_i32, %arg0 : i32, i32
  }
  func.func @transform_4(%arg0: i32, %arg1: i32) -> (i32, i32) {
    %c0_i32 = arith.constant 0 : i32
    %c0_i32_0 = arith.constant 0 : i32
    return %c0_i32, %arg0 : i32, i32
  }
}

module attributes {stable_mosaic.version = 11 : i64} {
  func.func @_matmul_stats_kernel(%arg0: i32, %arg1: i32, %arg2: memref<128x16xbf16, #tpu.memory_space<vmem>>, %arg3: memref<16x128xbf16, #tpu.memory_space<vmem>>, %arg4: memref<128x128xf32, #tpu.memory_space<vmem>>, %arg5: memref<128x128xf32, #tpu.memory_space<vmem>>, %arg6: memref<128x128xf32, #tpu.memory_space<vmem>>, %arg7: memref<128x128xf32, #tpu.memory_space<vmem>>) attributes {dimension_semantics = [#tpu.dimension_semantics<parallel>, #tpu.dimension_semantics<arbitrary>], iteration_bounds = array<i64: 1, 1>, scalar_prefetch = 0 : i64, scratch_operands = 1 : i64, tpu.core_type = #tpu.core_type<tc>, window_params = [{transform_indices = @transform_0, window_bounds = array<i64: 128, 16>}, {transform_indices = @transform_1, window_bounds = array<i64: 16, 128>}, {transform_indices = @transform_2, window_bounds = array<i64: 128, 128>}, {transform_indices = @transform_3, window_bounds = array<i64: 128, 128>}, {transform_indices = @transform_4, window_bounds = array<i64: 128, 128>}]} {
    %c0_i32 = arith.constant 0 : i32
    %0 = arith.cmpi eq, %arg1, %c0_i32 : i32
    %1 = arith.extui %0 : i1 to i32
    %c0_i32_0 = arith.constant 0 : i32
    %2 = arith.cmpi ne, %1, %c0_i32_0 : i32
    scf.if %2 {
      %cst_10 = arith.constant 0.000000e+00 : f32
      %12 = vector.broadcast %cst_10 : f32 to vector<128x128xf32>
      %c0_11 = arith.constant 0 : index
      %c0_12 = arith.constant 0 : index
      %13 = vector.load %arg7[%c0_11, %c0_12] : memref<128x128xf32, #tpu.memory_space<vmem>>, vector<128x128xf32>
      tpu.vector_store %arg7[%c0_11, %c0_12], %12 {strides = array<i32>} : memref<128x128xf32, #tpu.memory_space<vmem>>, vector<128x128xf32>,
    } else {
    }
    %c0 = arith.constant 0 : index
    %c0_1 = arith.constant 0 : index
    %3 = vector.load %arg7[%c0, %c0_1] : memref<128x128xf32, #tpu.memory_space<vmem>>, vector<128x128xf32>
    %c0_2 = arith.constant 0 : index
    %c0_3 = arith.constant 0 : index
    %4 = vector.load %arg2[%c0_2, %c0_3] : memref<128x16xbf16, #tpu.memory_space<vmem>>, vector<128x16xbf16>
    %c0_4 = arith.constant 0 : index
    %c0_5 = arith.constant 0 : index
    %5 = vector.load %arg3[%c0_4, %c0_5] : memref<16x128xbf16, #tpu.memory_space<vmem>>, vector<16x128xbf16>
    %cst = arith.constant dense<0.000000e+00> : vector<128x128xf32>
    %6 = tpu.matmul %4, %5, %cst {dimension_numbers = #tpu.dot_dimension_numbers<[1], [0], [0], [1], [0, 0, 1, 1], [], []>} : vector<128x16xbf16>, vector<16x128xbf16>, vector<128x128xf32> -> vector<128x128xf32>
    %7 = arith.addf %3, %6 : vector<128x128xf32>
    %c0_6 = arith.constant 0 : index
    %c0_7 = arith.constant 0 : index
    %8 = vector.load %arg7[%c0_6, %c0_7] : memref<128x128xf32, #tpu.memory_space<vmem>>, vector<128x128xf32>
    tpu.vector_store %arg7[%c0_6, %c0_7], %7 {strides = array<i32>} : memref<128x128xf32, #tpu.memory_space<vmem>>, vector<128x128xf32>,
    %c0_i32_8 = arith.constant 0 : i32
    %9 = arith.cmpi eq, %arg1, %c0_i32_8 : i32
    %10 = arith.extui %9 : i1 to i32
    %c0_i32_9 = arith.constant 0 : i32
    %11 = arith.cmpi ne, %10, %c0_i32_9 : i32
    scf.if %11 {
      %c0_10 = arith.constant 0 : index
      %c0_11 = arith.constant 0 : index
      %12 = vector.load %arg7[%c0_10, %c0_11] : memref<128x128xf32, #tpu.memory_space<vmem>>, vector<128x128xf32>
      %c0_12 = arith.constant 0 : index
      %c0_13 = arith.constant 0 : index
      %13 = vector.load %arg4[%c0_12, %c0_13] : memref<128x128xf32, #tpu.memory_space<vmem>>, vector<128x128xf32>
      tpu.vector_store %arg4[%c0_12, %c0_13], %12 {strides = array<i32>} : memref<128x128xf32, #tpu.memory_space<vmem>>, vector<128x128xf32>,
      %cst_14 = arith.constant dense<0.000000e+00> : vector<128xf32>
      %14 = vector.multi_reduction <add>, %12, %cst_14 [1] : vector<128x128xf32> to vector<128xf32>
      %15 = vector.shape_cast %14 : vector<128xf32> to vector<128x1xf32>
      %16 = arith.mulf %12, %12 : vector<128x128xf32>
      %cst_15 = arith.constant dense<0.000000e+00> : vector<128xf32>
      %17 = vector.multi_reduction <add>, %16, %cst_15 [1] : vector<128x128xf32> to vector<128xf32>
      %18 = vector.shape_cast %17 : vector<128xf32> to vector<128x1xf32>
      %19 = vector.shape_cast %15 : vector<128x1xf32> to vector<128x1xf32>
      %20 = vector.broadcast %19 : vector<128x1xf32> to vector<128x128xf32>
      %c0_16 = arith.constant 0 : index
      %c0_17 = arith.constant 0 : index
      %21 = vector.load %arg5[%c0_16, %c0_17] : memref<128x128xf32, #tpu.memory_space<vmem>>, vector<128x128xf32>
      tpu.vector_store %arg5[%c0_16, %c0_17], %20 {strides = array<i32>} : memref<128x128xf32, #tpu.memory_space<vmem>>, vector<128x128xf32>,
      %22 = vector.shape_cast %18 : vector<128x1xf32> to vector<128x1xf32>
      %23 = vector.broadcast %22 : vector<128x1xf32> to vector<128x128xf32>
      %c0_18 = arith.constant 0 : index
      %c0_19 = arith.constant 0 : index
      %24 = vector.load %arg6[%c0_18, %c0_19] : memref<128x128xf32, #tpu.memory_space<vmem>>, vector<128x128xf32>
      tpu.vector_store %arg6[%c0_18, %c0_19], %23 {strides = array<i32>} : memref<128x128xf32, #tpu.memory_space<vmem>>, vector<128x128xf32>,
    } else {
    }
    return
  }
  func.func @transform_0(%arg0: i32, %arg1: i32) -> (i32, i32) {
    %c0_i32 = arith.constant 0 : i32
    %c0_i32_0 = arith.constant 0 : i32
    return %c0_i32, %arg1 : i32, i32
  }
  func.func @transform_1(%arg0: i32, %arg1: i32) -> (i32, i32) {
    %c0_i32 = arith.constant 0 : i32
    return %arg1, %arg0 : i32, i32
  }
  func.func @transform_2(%arg0: i32, %arg1: i32) -> (i32, i32) {
    %c0_i32 = arith.constant 0 : i32
    %c0_i32_0 = arith.constant 0 : i32
    return %c0_i32, %arg0 : i32, i32
  }
  func.func @transform_3(%arg0: i32, %arg1: i32) -> (i32, i32) {
    %c0_i32 = arith.constant 0 : i32
    %c0_i32_0 = arith.constant 0 : i32
    return %c0_i32, %arg0 : i32, i32
  }
  func.func @transform_4(%arg0: i32, %arg1: i32) -> (i32, i32) {
    %c0_i32 = arith.constant 0 : i32
    %c0_i32_0 = arith.constant 0 : i32
    return %c0_i32, %arg0 : i32, i32
  }
}

module attributes {stable_mosaic.version = 11 : i64} {
  func.func @kernel(%arg0: i32, %arg1: memref<8x128xf32, #tpu.memory_space<vmem>>, %arg2: memref<8x1xf32, #tpu.memory_space<vmem>>, %arg3: memref<8x1xf32, #tpu.memory_space<vmem>>, %arg4: memref<8x128xf32, #tpu.memory_space<vmem>>) attributes {dimension_semantics = [#tpu.dimension_semantics<parallel>], iteration_bounds = array<i64: 1>, scalar_prefetch = 0 : i64, scratch_operands = 0 : i64, tpu.core_type = #tpu.core_type<tc>, window_params = [{transform_indices = @transform_0, window_bounds = array<i64: 8, 128>}, {pipeline_mode = #tpu.pipeline_mode<synchronous>, transform_indices = @transform_1, window_bounds = array<i64: 8, 1>}, {pipeline_mode = #tpu.pipeline_mode<synchronous>, transform_indices = @transform_2, window_bounds = array<i64: 8, 1>}, {transform_indices = @transform_3, window_bounds = array<i64: 8, 128>}]} {
    %c0 = arith.constant 0 : index
    %c0_0 = arith.constant 0 : index
    %0 = vector.load %arg1[%c0, %c0_0] : memref<8x128xf32, #tpu.memory_space<vmem>>, vector<8x128xf32>
    %c0_1 = arith.constant 0 : index
    %c0_2 = arith.constant 0 : index
    %1 = vector.load %arg2[%c0_1, %c0_2] : memref<8x1xf32, #tpu.memory_space<vmem>>, vector<8x1xf32>
    %2 = vector.broadcast %1 : vector<8x1xf32> to vector<8x128xf32>
    %3 = arith.mulf %0, %2 : vector<8x128xf32>
    %c0_3 = arith.constant 0 : index
    %c0_4 = arith.constant 0 : index
    %4 = vector.load %arg3[%c0_3, %c0_4] : memref<8x1xf32, #tpu.memory_space<vmem>>, vector<8x1xf32>
    %5 = vector.broadcast %4 : vector<8x1xf32> to vector<8x128xf32>
    %6 = arith.addf %3, %5 : vector<8x128xf32>
    %cst = arith.constant 0.000000e+00 : f32
    %7 = vector.broadcast %cst : f32 to vector<8x128xf32>
    %8 = arith.maximumf %6, %7 : vector<8x128xf32>
    %c0_5 = arith.constant 0 : index
    %c0_6 = arith.constant 0 : index
    %9 = vector.load %arg4[%c0_5, %c0_6] : memref<8x128xf32, #tpu.memory_space<vmem>>, vector<8x128xf32>
    tpu.vector_store %arg4[%c0_5, %c0_6], %8 {strides = array<i32>} : memref<8x128xf32, #tpu.memory_space<vmem>>, vector<8x128xf32>,
    return
  }
  func.func @transform_0(%arg0: i32) -> (i32, i32) {
    %c0_i32 = arith.constant 0 : i32
    %c0_i32_0 = arith.constant 0 : i32
    return %c0_i32, %arg0 : i32, i32
  }
  func.func @transform_1(%arg0: i32) -> (i32, i32) {
    %c0_i32 = arith.constant 0 : i32
    %c0_i32_0 = arith.constant 0 : i32
    %c0_i32_1 = arith.constant 0 : i32
    return %c0_i32, %c0_i32_0 : i32, i32
  }
  func.func @transform_2(%arg0: i32) -> (i32, i32) {
    %c0_i32 = arith.constant 0 : i32
    %c0_i32_0 = arith.constant 0 : i32
    %c0_i32_1 = arith.constant 0 : i32
    return %c0_i32, %c0_i32_0 : i32, i32
  }
  func.func @transform_3(%arg0: i32) -> (i32, i32) {
    %c0_i32 = arith.constant 0 : i32
    %c0_i32_0 = arith.constant 0 : i32
    return %c0_i32, %arg0 : i32, i32
  }
}

module attributes {stable_mosaic.version = 11 : i64} {
  func.func @_matmul_stats_kernel(%arg0: i32, %arg1: i32, %arg2: memref<48x16xbf16, #tpu.memory_space<vmem>>, %arg3: memref<16x128xbf16, #tpu.memory_space<vmem>>, %arg4: memref<48x128xf32, #tpu.memory_space<vmem>>, %arg5: memref<48x128xf32, #tpu.memory_space<vmem>>, %arg6: memref<48x128xf32, #tpu.memory_space<vmem>>, %arg7: memref<48x128xf32, #tpu.memory_space<vmem>>) attributes {dimension_semantics = [#tpu.dimension_semantics<parallel>, #tpu.dimension_semantics<arbitrary>], iteration_bounds = array<i64: 1, 1>, scalar_prefetch = 0 : i64, scratch_operands = 1 : i64, tpu.core_type = #tpu.core_type<tc>, window_params = [{transform_indices = @transform_0, window_bounds = array<i64: 48, 16>}, {transform_indices = @transform_1, window_bounds = array<i64: 16, 128>}, {transform_indices = @transform_2, window_bounds = array<i64: 48, 128>}, {transform_indices = @transform_3, window_bounds = array<i64: 48, 128>}, {transform_indices = @transform_4, window_bounds = array<i64: 48, 128>}]} {
    %c0_i32 = arith.constant 0 : i32
    %0 = arith.cmpi eq, %arg1, %c0_i32 : i32
    %1 = arith.extui %0 : i1 to i32
    %c0_i32_0 = arith.constant 0 : i32
    %2 = arith.cmpi ne, %1, %c0_i32_0 : i32
    scf.if %2 {
      %cst_10 = arith.constant 0.000000e+00 : f32
      %12 = vector.broadcast %cst_10 : f32 to vector<48x128xf32>
      %c0_11 = arith.constant 0 : index
      %c0_12 = arith.constant 0 : index
      %13 = vector.load %arg7[%c0_11, %c0_12] : memref<48x128xf32, #tpu.memory_space<vmem>>, vector<48x128xf32>
      tpu.vector_store %arg7[%c0_11, %c0_12], %12 {strides = array<i32>} : memref<48x128xf32, #tpu.memory_space<vmem>>, vector<48x128xf32>,
    } else {
    }
    %c0 = arith.constant 0 : index
    %c0_1 = arith.constant 0 : index
    %3 = vector.load %arg7[%c0, %c0_1] : memref<48x128xf32, #tpu.memory_space<vmem>>, vector<48x128xf32>
    %c0_2 = arith.constant 0 : index
    %c0_3 = arith.constant 0 : index
    %4 = vector.load %arg2[%c0_2, %c0_3] : memref<48x16xbf16, #tpu.memory_space<vmem>>, vector<48x16xbf16>
    %c0_4 = arith.constant 0 : index
    %c0_5 = arith.constant 0 : index
    %5 = vector.load %arg3[%c0_4, %c0_5] : memref<16x128xbf16, #tpu.memory_space<vmem>>, vector<16x128xbf16>
    %cst = arith.constant dense<0.000000e+00> : vector<48x128xf32>
    %6 = tpu.matmul %4, %5, %cst {dimension_numbers = #tpu.dot_dimension_numbers<[1], [0], [0], [1], [0, 0, 1, 1], [], []>} : vector<48x16xbf16>, vector<16x128xbf16>, vector<48x128xf32> -> vector<48x128xf32>
    %7 = arith.addf %3, %6 : vector<48x128xf32>
    %c0_6 = arith.constant 0 : index
    %c0_7 = arith.constant 0 : index
    %8 = vector.load %arg7[%c0_6, %c0_7] : memref<48x128xf32, #tpu.memory_space<vmem>>, vector<48x128xf32>
    tpu.vector_store %arg7[%c0_6, %c0_7], %7 {strides = array<i32>} : memref<48x128xf32, #tpu.memory_space<vmem>>, vector<48x128xf32>,
    %c0_i32_8 = arith.constant 0 : i32
    %9 = arith.cmpi eq, %arg1, %c0_i32_8 : i32
    %10 = arith.extui %9 : i1 to i32
    %c0_i32_9 = arith.constant 0 : i32
    %11 = arith.cmpi ne, %10, %c0_i32_9 : i32
    scf.if %11 {
      %c0_10 = arith.constant 0 : index
      %c0_11 = arith.constant 0 : index
      %12 = vector.load %arg7[%c0_10, %c0_11] : memref<48x128xf32, #tpu.memory_space<vmem>>, vector<48x128xf32>
      %c0_12 = arith.constant 0 : index
      %c0_13 = arith.constant 0 : index
      %13 = vector.load %arg4[%c0_12, %c0_13] : memref<48x128xf32, #tpu.memory_space<vmem>>, vector<48x128xf32>
      tpu.vector_store %arg4[%c0_12, %c0_13], %12 {strides = array<i32>} : memref<48x128xf32, #tpu.memory_space<vmem>>, vector<48x128xf32>,
      %cst_14 = arith.constant dense<0.000000e+00> : vector<48xf32>
      %14 = vector.multi_reduction <add>, %12, %cst_14 [1] : vector<48x128xf32> to vector<48xf32>
      %15 = vector.shape_cast %14 : vector<48xf32> to vector<48x1xf32>
      %16 = arith.mulf %12, %12 : vector<48x128xf32>
      %cst_15 = arith.constant dense<0.000000e+00> : vector<48xf32>
      %17 = vector.multi_reduction <add>, %16, %cst_15 [1] : vector<48x128xf32> to vector<48xf32>
      %18 = vector.shape_cast %17 : vector<48xf32> to vector<48x1xf32>
      %19 = vector.shape_cast %15 : vector<48x1xf32> to vector<48x1xf32>
      %20 = vector.broadcast %19 : vector<48x1xf32> to vector<48x128xf32>
      %c0_16 = arith.constant 0 : index
      %c0_17 = arith.constant 0 : index
      %21 = vector.load %arg5[%c0_16, %c0_17] : memref<48x128xf32, #tpu.memory_space<vmem>>, vector<48x128xf32>
      tpu.vector_store %arg5[%c0_16, %c0_17], %20 {strides = array<i32>} : memref<48x128xf32, #tpu.memory_space<vmem>>, vector<48x128xf32>,
      %22 = vector.shape_cast %18 : vector<48x1xf32> to vector<48x1xf32>
      %23 = vector.broadcast %22 : vector<48x1xf32> to vector<48x128xf32>
      %c0_18 = arith.constant 0 : index
      %c0_19 = arith.constant 0 : index
      %24 = vector.load %arg6[%c0_18, %c0_19] : memref<48x128xf32, #tpu.memory_space<vmem>>, vector<48x128xf32>
      tpu.vector_store %arg6[%c0_18, %c0_19], %23 {strides = array<i32>} : memref<48x128xf32, #tpu.memory_space<vmem>>, vector<48x128xf32>,
    } else {
    }
    return
  }
  func.func @transform_0(%arg0: i32, %arg1: i32) -> (i32, i32) {
    %c0_i32 = arith.constant 0 : i32
    %c0_i32_0 = arith.constant 0 : i32
    return %c0_i32, %arg1 : i32, i32
  }
  func.func @transform_1(%arg0: i32, %arg1: i32) -> (i32, i32) {
    %c0_i32 = arith.constant 0 : i32
    return %arg1, %arg0 : i32, i32
  }
  func.func @transform_2(%arg0: i32, %arg1: i32) -> (i32, i32) {
    %c0_i32 = arith.constant 0 : i32
    %c0_i32_0 = arith.constant 0 : i32
    return %c0_i32, %arg0 : i32, i32
  }
  func.func @transform_3(%arg0: i32, %arg1: i32) -> (i32, i32) {
    %c0_i32 = arith.constant 0 : i32
    %c0_i32_0 = arith.constant 0 : i32
    return %c0_i32, %arg0 : i32, i32
  }
  func.func @transform_4(%arg0: i32, %arg1: i32) -> (i32, i32) {
    %c0_i32 = arith.constant 0 : i32
    %c0_i32_0 = arith.constant 0 : i32
    return %c0_i32, %arg0 : i32, i32
  }
}

module attributes {stable_mosaic.version = 11 : i64} {
  func.func @kernel(%arg0: i32, %arg1: memref<8x512xf32, #tpu.memory_space<vmem>>, %arg2: memref<8x1xf32, #tpu.memory_space<vmem>>, %arg3: memref<8x1xf32, #tpu.memory_space<vmem>>, %arg4: memref<8x512xf32, #tpu.memory_space<vmem>>) attributes {dimension_semantics = [#tpu.dimension_semantics<parallel>], iteration_bounds = array<i64: 1>, scalar_prefetch = 0 : i64, scratch_operands = 0 : i64, tpu.core_type = #tpu.core_type<tc>, window_params = [{transform_indices = @transform_0, window_bounds = array<i64: 8, 512>}, {pipeline_mode = #tpu.pipeline_mode<synchronous>, transform_indices = @transform_1, window_bounds = array<i64: 8, 1>}, {pipeline_mode = #tpu.pipeline_mode<synchronous>, transform_indices = @transform_2, window_bounds = array<i64: 8, 1>}, {transform_indices = @transform_3, window_bounds = array<i64: 8, 512>}]} {
    %c0 = arith.constant 0 : index
    %c0_0 = arith.constant 0 : index
    %0 = vector.load %arg1[%c0, %c0_0] : memref<8x512xf32, #tpu.memory_space<vmem>>, vector<8x512xf32>
    %c0_1 = arith.constant 0 : index
    %c0_2 = arith.constant 0 : index
    %1 = vector.load %arg2[%c0_1, %c0_2] : memref<8x1xf32, #tpu.memory_space<vmem>>, vector<8x1xf32>
    %2 = vector.broadcast %1 : vector<8x1xf32> to vector<8x512xf32>
    %3 = arith.mulf %0, %2 : vector<8x512xf32>
    %c0_3 = arith.constant 0 : index
    %c0_4 = arith.constant 0 : index
    %4 = vector.load %arg3[%c0_3, %c0_4] : memref<8x1xf32, #tpu.memory_space<vmem>>, vector<8x1xf32>
    %5 = vector.broadcast %4 : vector<8x1xf32> to vector<8x512xf32>
    %6 = arith.addf %3, %5 : vector<8x512xf32>
    %7 = math.tanh %6 : vector<8x512xf32>
    %c0_5 = arith.constant 0 : index
    %c0_6 = arith.constant 0 : index
    %8 = vector.load %arg4[%c0_5, %c0_6] : memref<8x512xf32, #tpu.memory_space<vmem>>, vector<8x512xf32>
    tpu.vector_store %arg4[%c0_5, %c0_6], %7 {strides = array<i32>} : memref<8x512xf32, #tpu.memory_space<vmem>>, vector<8x512xf32>,
    return
  }
  func.func @transform_0(%arg0: i32) -> (i32, i32) {
    %c0_i32 = arith.constant 0 : i32
    %c0_i32_0 = arith.constant 0 : i32
    return %c0_i32, %arg0 : i32, i32
  }
  func.func @transform_1(%arg0: i32) -> (i32, i32) {
    %c0_i32 = arith.constant 0 : i32
    %c0_i32_0 = arith.constant 0 : i32
    %c0_i32_1 = arith.constant 0 : i32
    return %c0_i32, %c0_i32_0 : i32, i32
  }
  func.func @transform_2(%arg0: i32) -> (i32, i32) {
    %c0_i32 = arith.constant 0 : i32
    %c0_i32_0 = arith.constant 0 : i32
    %c0_i32_1 = arith.constant 0 : i32
    return %c0_i32, %c0_i32_0 : i32, i32
  }
  func.func @transform_3(%arg0: i32) -> (i32, i32) {
    %c0_i32 = arith.constant 0 : i32
    %c0_i32_0 = arith.constant 0 : i32
    return %c0_i32, %arg0 : i32, i32
  }
}

</mosaic_0001>

<llo_original>
// kernel: cycle_generator_forward.21
$region0: #{cycle_generator_forward.21}
  #allocation0 [shape = 'u32[]', space=smem, size = 0x4, offset = 0x4, fixed_abs, tag = 'smem constant byte address 0x4 - core index']
  #allocation1 [shape = 'u32[144,128]{1,0:T(1,128)}', space=vmem, size = 0x12000, scoped, tag = 'internal scratch']
  %s0 = inlined_call_operand.vmem [shape: f32[16,128], index: 0, kind: input, shape index: {}]
  %s1 = inlined_call_operand.vmem [shape: f32[16,1], index: 1, kind: input, shape index: {}]
  %s2 = inlined_call_operand.vmem [shape: f32[16,1], index: 2, kind: input, shape index: {}]
  %s3 = inlined_call_operand.vmem [shape: f32[16,128], index: 3, kind: output, shape index: {}]
  %s4 = sld [smem:[#allocation0]]
  $region22: #{cycle_generator_forward.21} parent=0
    _
  %s6 = ssub.s32 1, %s4
  %s7 = scalar_select 0, %s6, %s4
  // Predicated region
  $region2: #{cycle_generator_forward.21} parent=0 // pred_check
    _
  $region3: #{cycle_generator_forward.21} parent=0 // pred_check_branch
    %9 = sbr.rel (0) target = $region5
  $region4: #{cycle_generator_forward.21} parent=0 // pred_region
    _
  $region5: #{cycle_generator_forward.21} parent=0 // pred_fallthru
    _
  // Predicated region
  $region6: #{cycle_generator_forward.21} parent=0 // pred_check
    _
  $region7: #{cycle_generator_forward.21} parent=0 // pred_check_branch
    %11 = sbr.rel (0) target = $region9
  $region8: #{cycle_generator_forward.21} parent=0 // pred_region
    _
  $region9: #{cycle_generator_forward.21} parent=0 // pred_fallthru
    _
  // Predicated region
  $region10: #{cycle_generator_forward.21} parent=0 // pred_check
    _
  $region11: #{cycle_generator_forward.21} parent=0 // pred_check_branch
    %13 = sbr.rel (0) target = $region13
  $region12: #{cycle_generator_forward.21} parent=0 // pred_region
    _
  $region13: #{cycle_generator_forward.21} parent=0 // pred_fallthru
    _
  %v14 = vld [vmem:[%s0] sm:$0xff]
  %v15 = vld [vmem:[%s0 + $0x8] sm:$0xff]
  %v16 = vld [vmem:[%s1] sm:$0xff]
  %v17 = vld [vmem:[%s1 + $0x8] sm:$0xff]
  %19 = vset.pattern.permute.xlu0 0
  %20 = vperm.xlu0 %19, %v16
  %v21 = vpop.permute.xlu0 %20
  %24 = vset.pattern.permute.xlu0 0
  %25 = vperm.xlu0 %24, %v17
  %v26 = vpop.permute.xlu0 %25
  %v28 = vmul.f32 %v14, %v21
  %v29 = vmul.f32 %v15, %v26
  %v30 = vld [vmem:[%s2] sm:$0xff]
  %v31 = vld [vmem:[%s2 + $0x8] sm:$0xff]
  %33 = vset.pattern.permute.xlu0 0
  %34 = vperm.xlu0 %33, %v30
  %v35 = vpop.permute.xlu0 %34
  %38 = vset.pattern.permute.xlu0 0
  %39 = vperm.xlu0 %38, %v31
  %v40 = vpop.permute.xlu0 %39
  %v42 = vadd.f32 %v28, %v35
  %v43 = vadd.f32 %v29, %v40
  %v44 = vmax.f32 %v42, 0.0
  %v45 = vmax.f32 %v43, 0.0
  %46 = vst [vmem:[%s3] sm:$0xff] %v44
  %47 = vst [vmem:[%s3 + $0x8] sm:$0xff] %v45
  // Predicated region
  $region14: #{cycle_generator_forward.21} parent=0 // pred_check
    _
  $region15: #{cycle_generator_forward.21} parent=0 // pred_check_branch
    %49 = sbr.rel (0) target = $region17
  $region16: #{cycle_generator_forward.21} parent=0 // pred_region
    _
  $region17: #{cycle_generator_forward.21} parent=0 // pred_fallthru
    _
  // Predicated region
  $region18: #{cycle_generator_forward.21} parent=0 // pred_check
    _
  $region19: #{cycle_generator_forward.21} parent=0 // pred_check_branch
    %51 = sbr.rel (0) target = $region21
  $region20: #{cycle_generator_forward.21} parent=0 // pred_region
    _
  $region21: #{cycle_generator_forward.21} parent=0 // pred_fallthru
    _

// kernel: cycle_generator_forward.20
$region0: #{cycle_generator_forward.20}
  #allocation0 [shape = 'u32[]', space=smem, size = 0x4, offset = 0x4, fixed_abs, tag = 'smem constant byte address 0x4 - core index']
  #allocation1 [shape = 'u32[144,128]{1,0:T(1,128)}', space=vmem, size = 0x12000, scoped, tag = 'internal scratch']
  #allocation2 [shape = 'f32[16,128]{1,0:T(8,128)}', space=vmem, size = 0x2000, scoped, tag = 'scratch operand']
  %s0 = inlined_call_operand.vmem [shape: bf16[16,48], index: 0, kind: input, shape index: {}]
  %s1 = inlined_call_operand.vmem [shape: bf16[48,128], index: 1, kind: input, shape index: {}]
  %s2 = inlined_call_operand.vmem [shape: f32[16,128], index: 2, kind: output, shape index: {0}]
  %s3 = inlined_call_operand.vmem [shape: f32[16,128], index: 3, kind: output, shape index: {1}]
  %s4 = inlined_call_operand.vmem [shape: f32[16,128], index: 4, kind: output, shape index: {2}]
  %5 = xla_tuple %s2, %s3, %s4
  %s6 = sld [smem:[#allocation0]]
  $region42: #{cycle_generator_forward.20} parent=0
    _
  %s8 = ssub.s32 1, %s6
  %s9 = scalar_select 0, %s8, %s6
  // Predicated region
  $region2: #{cycle_generator_forward.20} parent=0 // pred_check
    _
  $region3: #{cycle_generator_forward.20} parent=0 // pred_check_branch
    %11 = sbr.rel (0) target = $region5
  $region4: #{cycle_generator_forward.20} parent=0 // pred_region
    _
  $region5: #{cycle_generator_forward.20} parent=0 // pred_fallthru
    _
  // Predicated region
  $region6: #{cycle_generator_forward.20} parent=0 // pred_check
    _
  $region7: #{cycle_generator_forward.20} parent=0 // pred_check_branch
    %13 = sbr.rel (0) target = $region9
  $region8: #{cycle_generator_forward.20} parent=0 // pred_region
    _
  $region9: #{cycle_generator_forward.20} parent=0 // pred_fallthru
    _
  %p15 = scmp.eq.s32.totalorder 0, 0
  // Predicated region
  $region10: #{cycle_generator_forward.20} parent=0 // pred_check
    %p16 = pneg %p15
  $region11: #{cycle_generator_forward.20} parent=0 // pred_check_branch
    %18 = sbr.rel (%p16) target = $region13
  $region12: #{cycle_generator_forward.20} parent=0 // pred_region
    %19 = vst [vmem:[#allocation2] sm:$0xff] 0.0
    %20 = vst [vmem:[#allocation2 + $0x8] sm:$0xff] 0.0
  $region13: #{cycle_generator_forward.20} parent=0 // pred_fallthru
    _
  %v21 = vld [vmem:[#allocation2] sm:$0xff]
  %v22 = vld [vmem:[#allocation2 + $0x8] sm:$0xff]
  %v23 = vld [vmem:[%s0] sm:$0xf]
  %v24 = vld [vmem:[%s0 + $0x4] sm:$0xf]
  %v25 = vld [vmem:[%s1] sm:$0xf]
  %v26 = vld [vmem:[%s1 + $0x4] sm:$0xf]
  %v27 = vld [vmem:[%s1 + $0x8] sm:$0xf]
  %v28 = vld [vmem:[%s1 + $0xc] sm:$0xf]
  %v29 = vld [vmem:[%s1 + $0x10] sm:$0xf]
  %v30 = vld [vmem:[%s1 + $0x14] sm:$0xf]
  %v33 = vunpack.c.l.b16 %v23
  %v34 = vunpack.c.l.b16 %v24
  %v35 = vpack.c.b16 %v34, %v33
  %v42 = vunpack.c.l.b16 %v25
  %v43 = vunpack.c.l.b16 %v26
  %v44 = vunpack.c.l.b16 %v27
  %v45 = vunpack.c.l.b16 %v28
  %v46 = vunpack.c.l.b16 %v29
  %v47 = vunpack.c.l.b16 %v30
  %v48 = vpack.c.b16 %v43, %v42
  %v49 = vpack.c.b16 %v45, %v44
  %v50 = vpack.c.b16 %v47, %v46
  %vm54 = vcmask 392192
  %v56 = vsel %vm54, %v35, 0
  %58 = vmatprep.subr.bf16.mxu0 0
  %59 = vmatpush1.bf16.msra.mxu0 0
  %60 = vmatprep.subr.bf16.mxu0 0
  %61 = vmatpush1.bf16.msra.mxu0 0
  %62 = vmatprep.subr.bf16.mxu0 0
  %63 = vmatpush1.bf16.msra.mxu0 0
  %64 = vmatprep.subr.bf16.mxu0 0
  %65 = vmatpush1.bf16.msra.mxu0 0
  %66 = vmatprep.subr.bf16.mxu0 0
  %67 = vmatpush1.bf16.msra.mxu0 0
  %68 = vmatprep.subr.bf16.mxu0 0
  %69 = vmatpush1.bf16.msra.mxu0 %v50
  %70 = vmatprep.subr.bf16.mxu0 0
  %71 = vmatpush1.bf16.msra.mxu0 %v49
  %72 = vmatprep.subr.bf16.mxu0 0
  %73 = vmatpush1.bf16.msra.mxu0 %v48
  %74 = vmatprep.subr.bf16.mxu0 0
  %75 = vmatpush2.bf16.msra.mxu0 0
  %76 = vmatprep.subr.bf16.mxu0 0
  %77 = vmatpush2.bf16.msra.mxu0 0
  %78 = vmatprep.subr.bf16.mxu0 0
  %79 = vmatpush2.bf16.msra.mxu0 0
  %80 = vmatprep.subr.bf16.mxu0 0
  %81 = vmatpush2.bf16.msra.mxu0 0
  %82 = vmatprep.subr.bf16.mxu0 0
  %83 = vmatpush2.bf16.msra.mxu0 0
  %84 = vmatprep.subr.bf16.mxu0 0
  %85 = vmatpush2.bf16.msra.mxu0 0
  %86 = vmatprep.subr.bf16.mxu0 0
  %87 = vmatpush2.bf16.msra.mxu0 0
  %88 = vmatprep.subr.bf16.mxu0 0
  %89 = vmatpush2.bf16.msra.mxu0 0
  %90 = vmatprep.mubr.bf16.mxu0 0
  %91 = vmatmul.mubr.bf16.gmra.mxu0 %v56
  %v92 = vpop.f32.mrf.mxu0
  %v93 = vadd.f32 0.0, %v92
  %v94 = vpop.f32.mrf.mxu0
  %v95 = vpop.f32.mrf.mxu0
  %v96 = vadd.f32 0.0, %v95
  %v97 = vpop.f32.mrf.mxu0
  %98 = vdwg.mxu0
  %v99 = vadd.f32 %v21, %v93
  %v100 = vadd.f32 %v22, %v96
  %101 = vst [vmem:[#allocation2] sm:$0xff] %v99
  %102 = vst [vmem:[#allocation2 + $0x8] sm:$0xff] %v100
  // Predicated region
  $region14: #{cycle_generator_forward.20} parent=0 // pred_check
    %p103 = pneg %p15
  $region15: #{cycle_generator_forward.20} parent=0 // pred_check_branch
    %105 = sbr.rel (%p103) target = $region17
  $region16: #{cycle_generator_forward.20} parent=0 // pred_region
    %v106 = vld [vmem:[#allocation2] sm:$0xff]
    %v107 = vld [vmem:[#allocation2 + $0x8] sm:$0xff]
    %108 = vst [vmem:[%s2] sm:$0xff] %v106
    %109 = vst [vmem:[%s2 + $0x8] sm:$0xff] %v107
    %110 = vadd.xlane.f32.xlu0 %v106
    %v111 = vpop.xlane.xlu0 %110
    %112 = vadd.xlane.f32.xlu0 %v107
    %v113 = vpop.xlane.xlu0 %112
    %v114 = vmul.f32 %v106, %v106
    %v115 = vmul.f32 %v107, %v107
    %116 = vadd.xlane.f32.xlu0 %v114
    %v117 = vpop.xlane.xlu0 %116
    %118 = vadd.xlane.f32.xlu0 %v115
    %v119 = vpop.xlane.xlu0 %118
    %120 = vst [vmem:[%s3] sm:$0xff] %v111
    %121 = vst [vmem:[%s3 + $0x8] sm:$0xff] %v113
    %122 = vst [vmem:[%s4] sm:$0xff] %v117
    %123 = vst [vmem:[%s4 + $0x8] sm:$0xff] %v119
  $region17: #{cycle_generator_forward.20} parent=0 // pred_fallthru
    _
  // Predicated region
  $region18: #{cycle_generator_forward.20} parent=0 // pred_check
    _
  $region19: #{cycle_generator_forward.20} parent=0 // pred_check_branch
    %125 = sbr.rel (0) target = $region21
  $region20: #{cycle_generator_forward.20} parent=0 // pred_region
    _
  $region21: #{cycle_generator_forward.20} parent=0 // pred_fallthru
    _
  // Predicated region
  $region22: #{cycle_generator_forward.20} parent=0 // pred_check
    _
  $region23: #{cycle_generator_forward.20} parent=0 // pred_check_branch
    %127 = sbr.rel (0) target = $region25
  $region24: #{cycle_generator_forward.20} parent=0 // pred_region
    _
  $region25: #{cycle_generator_forward.20} parent=0 // pred_fallthru
    _
  // Predicated region
  $region26: #{cycle_generator_forward.20} parent=0 // pred_check
    _
  $region27: #{cycle_generator_forward.20} parent=0 // pred_check_branch
    %129 = sbr.rel (0) target = $region29
  $region28: #{cycle_generator_forward.20} parent=0 // pred_region
    _
  $region29: #{cycle_generator_forward.20} parent=0 // pred_fallthru
    _
  // Predicated region
  $region30: #{cycle_generator_forward.20} parent=0 // pred_check
    _
  $region31: #{cycle_generator_forward.20} parent=0 // pred_check_branch
    %131 = sbr.rel (0) target = $region33
  $region32: #{cycle_generator_forward.20} parent=0 // pred_region
    _
  $region33: #{cycle_generator_forward.20} parent=0 // pred_fallthru
    _
  // Predicated region
  $region34: #{cycle_generator_forward.20} parent=0 // pred_check
    _
  $region35: #{cycle_generator_forward.20} parent=0 // pred_check_branch
    %133 = sbr.rel (0) target = $region37
  $region36: #{cycle_generator_forward.20} parent=0 // pred_region
    _
  $region37: #{cycle_generator_forward.20} parent=0 // pred_fallthru
    _
  // Predicated region
  $region38: #{cycle_generator_forward.20} parent=0 // pred_check
    _
  $region39: #{cycle_generator_forward.20} parent=0 // pred_check_branch
    %135 = sbr.rel (0) target = $region41
  $region40: #{cycle_generator_forward.20} parent=0 // pred_region
    _
  $region41: #{cycle_generator_forward.20} parent=0 // pred_fallthru
    _

// kernel: cycle_generator_forward.22
$region0: #{cycle_generator_forward.22}
  #allocation0 [shape = 'u32[]', space=smem, size = 0x4, offset = 0x4, fixed_abs, tag = 'smem constant byte address 0x4 - core index']
  #allocation1 [shape = 'u32[144,128]{1,0:T(1,128)}', space=vmem, size = 0x12000, scoped, tag = 'internal scratch']
  #allocation2 [shape = 'f32[16,128]{1,0:T(8,128)}', space=vmem, size = 0x2000, scoped, tag = 'scratch operand']
  %s0 = inlined_call_operand.vmem [shape: bf16[16,128], index: 0, kind: input, shape index: {}]
  %s1 = inlined_call_operand.vmem [shape: bf16[128,128], index: 1, kind: input, shape index: {}]
  %s2 = inlined_call_operand.vmem [shape: f32[16,128], index: 2, kind: output, shape index: {0}]
  %s3 = inlined_call_operand.vmem [shape: f32[16,128], index: 3, kind: output, shape index: {1}]
  %s4 = inlined_call_operand.vmem [shape: f32[16,128], index: 4, kind: output, shape index: {2}]
  %5 = xla_tuple %s2, %s3, %s4
  %s6 = sld [smem:[#allocation0]]
  $region42: #{cycle_generator_forward.22} parent=0
    _
  %s8 = ssub.s32 1, %s6
  %s9 = scalar_select 0, %s8, %s6
  // Predicated region
  $region2: #{cycle_generator_forward.22} parent=0 // pred_check
    _
  $region3: #{cycle_generator_forward.22} parent=0 // pred_check_branch
    %11 = sbr.rel (0) target = $region5
  $region4: #{cycle_generator_forward.22} parent=0 // pred_region
    _
  $region5: #{cycle_generator_forward.22} parent=0 // pred_fallthru
    _
  // Predicated region
  $region6: #{cycle_generator_forward.22} parent=0 // pred_check
    _
  $region7: #{cycle_generator_forward.22} parent=0 // pred_check_branch
    %13 = sbr.rel (0) target = $region9
  $region8: #{cycle_generator_forward.22} parent=0 // pred_region
    _
  $region9: #{cycle_generator_forward.22} parent=0 // pred_fallthru
    _
  %p15 = scmp.eq.s32.totalorder 0, 0
  // Predicated region
  $region10: #{cycle_generator_forward.22} parent=0 // pred_check
    %p16 = pneg %p15
  $region11: #{cycle_generator_forward.22} parent=0 // pred_check_branch
    %18 = sbr.rel (%p16) target = $region13
  $region12: #{cycle_generator_forward.22} parent=0 // pred_region
    %19 = vst [vmem:[#allocation2] sm:$0xff] 0.0
    %20 = vst [vmem:[#allocation2 + $0x8] sm:$0xff] 0.0
  $region13: #{cycle_generator_forward.22} parent=0 // pred_fallthru
    _
  %v21 = vld [vmem:[#allocation2] sm:$0xff]
  %v22 = vld [vmem:[#allocation2 + $0x8] sm:$0xff]
  %v23 = vld [vmem:[%s0] sm:$0xf]
  %v24 = vld [vmem:[%s0 + $0x4] sm:$0xf]
  %v25 = vld [vmem:[%s1] sm:$0xf]
  %v26 = vld [vmem:[%s1 + $0x4] sm:$0xf]
  %v27 = vld [vmem:[%s1 + $0x8] sm:$0xf]
  %v28 = vld [vmem:[%s1 + $0xc] sm:$0xf]
  %v29 = vld [vmem:[%s1 + $0x10] sm:$0xf]
  %v30 = vld [vmem:[%s1 + $0x14] sm:$0xf]
  %v31 = vld [vmem:[%s1 + $0x18] sm:$0xf]
  %v32 = vld [vmem:[%s1 + $0x1c] sm:$0xf]
  %v33 = vld [vmem:[%s1 + $0x20] sm:$0xf]
  %v34 = vld [vmem:[%s1 + $0x24] sm:$0xf]
  %v35 = vld [vmem:[%s1 + $0x28] sm:$0xf]
  %v36 = vld [vmem:[%s1 + $0x2c] sm:$0xf]
  %v37 = vld [vmem:[%s1 + $0x30] sm:$0xf]
  %v38 = vld [vmem:[%s1 + $0x34] sm:$0xf]
  %v39 = vld [vmem:[%s1 + $0x38] sm:$0xf]
  %v40 = vld [vmem:[%s1 + $0x3c] sm:$0xf]
  %v43 = vunpack.c.l.b16 %v23
  %v44 = vunpack.c.l.b16 %v24
  %v45 = vpack.c.b16 %v44, %v43
  %v63 = vunpack.c.l.b16 %v25
  %v64 = vunpack.c.l.b16 %v26
  %v65 = vunpack.c.l.b16 %v27
  %v66 = vunpack.c.l.b16 %v28
  %v67 = vunpack.c.l.b16 %v29
  %v68 = vunpack.c.l.b16 %v30
  %v69 = vunpack.c.l.b16 %v31
  %v70 = vunpack.c.l.b16 %v32
  %v71 = vunpack.c.l.b16 %v33
  %v72 = vunpack.c.l.b16 %v34
  %v73 = vunpack.c.l.b16 %v35
  %v74 = vunpack.c.l.b16 %v36
  %v75 = vunpack.c.l.b16 %v37
  %v76 = vunpack.c.l.b16 %v38
  %v77 = vunpack.c.l.b16 %v39
  %v78 = vunpack.c.l.b16 %v40
  %v79 = vpack.c.b16 %v64, %v63
  %v80 = vpack.c.b16 %v66, %v65
  %v81 = vpack.c.b16 %v68, %v67
  %v82 = vpack.c.b16 %v70, %v69
  %v83 = vpack.c.b16 %v72, %v71
  %v84 = vpack.c.b16 %v74, %v73
  %v85 = vpack.c.b16 %v76, %v75
  %v86 = vpack.c.b16 %v78, %v77
  %95 = vmatprep.subr.bf16.mxu0 0
  %96 = vmatpush1.bf16.msra.mxu0 %v86
  %97 = vmatprep.subr.bf16.mxu0 0
  %98 = vmatpush1.bf16.msra.mxu0 %v85
  %99 = vmatprep.subr.bf16.mxu0 0
  %100 = vmatpush1.bf16.msra.mxu0 %v84
  %101 = vmatprep.subr.bf16.mxu0 0
  %102 = vmatpush1.bf16.msra.mxu0 %v83
  %103 = vmatprep.subr.bf16.mxu0 0
  %104 = vmatpush1.bf16.msra.mxu0 %v82
  %105 = vmatprep.subr.bf16.mxu0 0
  %106 = vmatpush1.bf16.msra.mxu0 %v81
  %107 = vmatprep.subr.bf16.mxu0 0
  %108 = vmatpush1.bf16.msra.mxu0 %v80
  %109 = vmatprep.subr.bf16.mxu0 0
  %110 = vmatpush1.bf16.msra.mxu0 %v79
  %111 = vmatprep.subr.bf16.mxu0 0
  %112 = vmatpush2.bf16.msra.mxu0 0
  %113 = vmatprep.subr.bf16.mxu0 0
  %114 = vmatpush2.bf16.msra.mxu0 0
  %115 = vmatprep.subr.bf16.mxu0 0
  %116 = vmatpush2.bf16.msra.mxu0 0
  %117 = vmatprep.subr.bf16.mxu0 0
  %118 = vmatpush2.bf16.msra.mxu0 0
  %119 = vmatprep.subr.bf16.mxu0 0
  %120 = vmatpush2.bf16.msra.mxu0 0
  %121 = vmatprep.subr.bf16.mxu0 0
  %122 = vmatpush2.bf16.msra.mxu0 0
  %123 = vmatprep.subr.bf16.mxu0 0
  %124 = vmatpush2.bf16.msra.mxu0 0
  %125 = vmatprep.subr.bf16.mxu0 0
  %126 = vmatpush2.bf16.msra.mxu0 0
  %127 = vmatprep.mubr.bf16.mxu0 0
  %128 = vmatmul.mubr.bf16.gmra.mxu0 %v45
  %v129 = vpop.f32.mrf.mxu0
  %v130 = vadd.f32 0.0, %v129
  %v131 = vpop.f32.mrf.mxu0
  %v132 = vpop.f32.mrf.mxu0
  %v133 = vadd.f32 0.0, %v132
  %v134 = vpop.f32.mrf.mxu0
  %135 = vdwg.mxu0
  %v136 = vadd.f32 %v21, %v130
  %v137 = vadd.f32 %v22, %v133
  %138 = vst [vmem:[#allocation2] sm:$0xff] %v136
  %139 = vst [vmem:[#allocation2 + $0x8] sm:$0xff] %v137
  // Predicated region
  $region14: #{cycle_generator_forward.22} parent=0 // pred_check
    %p140 = pneg %p15
  $region15: #{cycle_generator_forward.22} parent=0 // pred_check_branch
    %142 = sbr.rel (%p140) target = $region17
  $region16: #{cycle_generator_forward.22} parent=0 // pred_region
    %v143 = vld [vmem:[#allocation2] sm:$0xff]
    %v144 = vld [vmem:[#allocation2 + $0x8] sm:$0xff]
    %145 = vst [vmem:[%s2] sm:$0xff] %v143
    %146 = vst [vmem:[%s2 + $0x8] sm:$0xff] %v144
    %147 = vadd.xlane.f32.xlu0 %v143
    %v148 = vpop.xlane.xlu0 %147
    %149 = vadd.xlane.f32.xlu0 %v144
    %v150 = vpop.xlane.xlu0 %149
    %v151 = vmul.f32 %v143, %v143
    %v152 = vmul.f32 %v144, %v144
    %153 = vadd.xlane.f32.xlu0 %v151
    %v154 = vpop.xlane.xlu0 %153
    %155 = vadd.xlane.f32.xlu0 %v152
    %v156 = vpop.xlane.xlu0 %155
    %157 = vst [vmem:[%s3] sm:$0xff] %v148
    %158 = vst [vmem:[%s3 + $0x8] sm:$0xff] %v150
    %159 = vst [vmem:[%s4] sm:$0xff] %v154
    %160 = vst [vmem:[%s4 + $0x8] sm:$0xff] %v156
  $region17: #{cycle_generator_forward.22} parent=0 // pred_fallthru
    _
  // Predicated region
  $region18: #{cycle_generator_forward.22} parent=0 // pred_check
    _
  $region19: #{cycle_generator_forward.22} parent=0 // pred_check_branch
    %162 = sbr.rel (0) target = $region21
  $region20: #{cycle_generator_forward.22} parent=0 // pred_region
    _
  $region21: #{cycle_generator_forward.22} parent=0 // pred_fallthru
    _
  // Predicated region
  $region22: #{cycle_generator_forward.22} parent=0 // pred_check
    _
  $region23: #{cycle_generator_forward.22} parent=0 // pred_check_branch
    %164 = sbr.rel (0) target = $region25
  $region24: #{cycle_generator_forward.22} parent=0 // pred_region
    _
  $region25: #{cycle_generator_forward.22} parent=0 // pred_fallthru
    _
  // Predicated region
  $region26: #{cycle_generator_forward.22} parent=0 // pred_check
    _
  $region27: #{cycle_generator_forward.22} parent=0 // pred_check_branch
    %166 = sbr.rel (0) target = $region29
  $region28: #{cycle_generator_forward.22} parent=0 // pred_region
    _
  $region29: #{cycle_generator_forward.22} parent=0 // pred_fallthru
    _
  // Predicated region
  $region30: #{cycle_generator_forward.22} parent=0 // pred_check
    _
  $region31: #{cycle_generator_forward.22} parent=0 // pred_check_branch
    %168 = sbr.rel (0) target = $region33
  $region32: #{cycle_generator_forward.22} parent=0 // pred_region
    _
  $region33: #{cycle_generator_forward.22} parent=0 // pred_fallthru
    _
  // Predicated region
  $region34: #{cycle_generator_forward.22} parent=0 // pred_check
    _
  $region35: #{cycle_generator_forward.22} parent=0 // pred_check_branch
    %170 = sbr.rel (0) target = $region37
  $region36: #{cycle_generator_forward.22} parent=0 // pred_region
    _
  $region37: #{cycle_generator_forward.22} parent=0 // pred_fallthru
    _
  // Predicated region
  $region38: #{cycle_generator_forward.22} parent=0 // pred_check
    _
  $region39: #{cycle_generator_forward.22} parent=0 // pred_check_branch
    %172 = sbr.rel (0) target = $region41
  $region40: #{cycle_generator_forward.22} parent=0 // pred_region
    _
  $region41: #{cycle_generator_forward.22} parent=0 // pred_fallthru
    _

// kernel: cycle_generator_forward.24
$region0: #{cycle_generator_forward.24}
  #allocation0 [shape = 'u32[]', space=smem, size = 0x4, offset = 0x4, fixed_abs, tag = 'smem constant byte address 0x4 - core index']
  #allocation1 [shape = 'u32[144,128]{1,0:T(1,128)}', space=vmem, size = 0x12000, scoped, tag = 'internal scratch']
  #allocation2 [shape = 'f32[32,128]{1,0:T(8,128)}', space=vmem, size = 0x4000, scoped, tag = 'scratch operand']
  %s0 = inlined_call_operand.vmem [shape: bf16[32,256], index: 0, kind: input, shape index: {}]
  %s1 = inlined_call_operand.vmem [shape: bf16[256,128], index: 1, kind: input, shape index: {}]
  %s2 = inlined_call_operand.vmem [shape: f32[32,128], index: 2, kind: output, shape index: {0}]
  %s3 = inlined_call_operand.vmem [shape: f32[32,128], index: 3, kind: output, shape index: {1}]
  %s4 = inlined_call_operand.vmem [shape: f32[32,128], index: 4, kind: output, shape index: {2}]
  %5 = xla_tuple %s2, %s3, %s4
  %s6 = sld [smem:[#allocation0]]
  $region42: #{cycle_generator_forward.24} parent=0
    _
  %s8 = ssub.s32 1, %s6
  %s9 = scalar_select 0, %s8, %s6
  // Predicated region
  $region2: #{cycle_generator_forward.24} parent=0 // pred_check
    _
  $region3: #{cycle_generator_forward.24} parent=0 // pred_check_branch
    %11 = sbr.rel (0) target = $region5
  $region4: #{cycle_generator_forward.24} parent=0 // pred_region
    _
  $region5: #{cycle_generator_forward.24} parent=0 // pred_fallthru
    _
  // Predicated region
  $region6: #{cycle_generator_forward.24} parent=0 // pred_check
    _
  $region7: #{cycle_generator_forward.24} parent=0 // pred_check_branch
    %13 = sbr.rel (0) target = $region9
  $region8: #{cycle_generator_forward.24} parent=0 // pred_region
    _
  $region9: #{cycle_generator_forward.24} parent=0 // pred_fallthru
    _
  %p15 = scmp.eq.s32.totalorder 0, 0
  // Predicated region
  $region10: #{cycle_generator_forward.24} parent=0 // pred_check
    %p16 = pneg %p15
  $region11: #{cycle_generator_forward.24} parent=0 // pred_check_branch
    %18 = sbr.rel (%p16) target = $region13
  $region12: #{cycle_generator_forward.24} parent=0 // pred_region
    %19 = vst [vmem:[#allocation2] sm:$0xff] 0.0
    %20 = vst [vmem:[#allocation2 + $0x8] sm:$0xff] 0.0
    %21 = vst [vmem:[#allocation2 + $0x10] sm:$0xff] 0.0
    %22 = vst [vmem:[#allocation2 + $0x18] sm:$0xff] 0.0
  $region13: #{cycle_generator_forward.24} parent=0 // pred_fallthru
    _
  %v23 = vld [vmem:[#allocation2] sm:$0xff]
  %v24 = vld [vmem:[#allocation2 + $0x8] sm:$0xff]
  %v25 = vld [vmem:[#allocation2 + $0x10] sm:$0xff]
  %v26 = vld [vmem:[#allocation2 + $0x18] sm:$0xff]
  %v27 = vld [vmem:[%s0] sm:$0xff]
  %v28 = vld [vmem:[%s0 + $0x8] sm:$0xff]
  %v29 = vld [vmem:[%s0 + $0x10] sm:$0xff]
  %v30 = vld [vmem:[%s0 + $0x18] sm:$0xff]
  %v31 = vld [vmem:[%s1] sm:$0xf]
  %v32 = vld [vmem:[%s1 + $0x4] sm:$0xf]
  %v33 = vld [vmem:[%s1 + $0x8] sm:$0xf]
  %v34 = vld [vmem:[%s1 + $0xc] sm:$0xf]
  %v35 = vld [vmem:[%s1 + $0x10] sm:$0xf]
  %v36 = vld [vmem:[%s1 + $0x14] sm:$0xf]
  %v37 = vld [vmem:[%s1 + $0x18] sm:$0xf]
  %v38 = vld [vmem:[%s1 + $0x1c] sm:$0xf]
  %v39 = vld [vmem:[%s1 + $0x20] sm:$0xf]
  %v40 = vld [vmem:[%s1 + $0x24] sm:$0xf]
  %v41 = vld [vmem:[%s1 + $0x28] sm:$0xf]
  %v42 = vld [vmem:[%s1 + $0x2c] sm:$0xf]
  %v43 = vld [vmem:[%s1 + $0x30] sm:$0xf]
  %v44 = vld [vmem:[%s1 + $0x34] sm:$0xf]
  %v45 = vld [vmem:[%s1 + $0x38] sm:$0xf]
  %v46 = vld [vmem:[%s1 + $0x3c] sm:$0xf]
  %v47 = vld [vmem:[%s1 + $0x40] sm:$0xf]
  %v48 = vld [vmem:[%s1 + $0x44] sm:$0xf]
  %v49 = vld [vmem:[%s1 + $0x48] sm:$0xf]
  %v50 = vld [vmem:[%s1 + $0x4c] sm:$0xf]
  %v51 = vld [vmem:[%s1 + $0x50] sm:$0xf]
  %v52 = vld [vmem:[%s1 + $0x54] sm:$0xf]
  %v53 = vld [vmem:[%s1 + $0x58] sm:$0xf]
  %v54 = vld [vmem:[%s1 + $0x5c] sm:$0xf]
  %v55 = vld [vmem:[%s1 + $0x60] sm:$0xf]
  %v56 = vld [vmem:[%s1 + $0x64] sm:$0xf]
  %v57 = vld [vmem:[%s1 + $0x68] sm:$0xf]
  %v58 = vld [vmem:[%s1 + $0x6c] sm:$0xf]
  %v59 = vld [vmem:[%s1 + $0x70] sm:$0xf]
  %v60 = vld [vmem:[%s1 + $0x74] sm:$0xf]
  %v61 = vld [vmem:[%s1 + $0x78] sm:$0xf]
  %v62 = vld [vmem:[%s1 + $0x7c] sm:$0xf]
  %v67 = vunpack.c.l.b16 %v27
  %v68 = vunpack.c.h.b16 %v27
  %v69 = vunpack.c.l.b16 %v28
  %v70 = vunpack.c.h.b16 %v28
  %v71 = vunpack.c.l.b16 %v29
  %v72 = vunpack.c.h.b16 %v29
  %v73 = vunpack.c.l.b16 %v30
  %v74 = vunpack.c.h.b16 %v30
  %v75 = vpack.c.b16 %v69, %v67
  %v76 = vpack.c.b16 %v70, %v68
  %v77 = vpack.c.b16 %v73, %v71
  %v78 = vpack.c.b16 %v74, %v72
  %v115 = vunpack.c.l.b16 %v31
  %v116 = vunpack.c.l.b16 %v32
  %v117 = vunpack.c.l.b16 %v33
  %v118 = vunpack.c.l.b16 %v34
  %v119 = vunpack.c.l.b16 %v35
  %v120 = vunpack.c.l.b16 %v36
  %v121 = vunpack.c.l.b16 %v37
  %v122 = vunpack.c.l.b16 %v38
  %v123 = vunpack.c.l.b16 %v39
  %v124 = vunpack.c.l.b16 %v40
  %v125 = vunpack.c.l.b16 %v41
  %v126 = vunpack.c.l.b16 %v42
  %v127 = vunpack.c.l.b16 %v43
  %v128 = vunpack.c.l.b16 %v44
  %v129 = vunpack.c.l.b16 %v45
  %v130 = vunpack.c.l.b16 %v46
  %v131 = vunpack.c.l.b16 %v47
  %v132 = vunpack.c.l.b16 %v48
  %v133 = vunpack.c.l.b16 %v49
  %v134 = vunpack.c.l.b16 %v50
  %v135 = vunpack.c.l.b16 %v51
  %v136 = vunpack.c.l.b16 %v52
  %v137 = vunpack.c.l.b16 %v53
  %v138 = vunpack.c.l.b16 %v54
  %v139 = vunpack.c.l.b16 %v55
  %v140 = vunpack.c.l.b16 %v56
  %v141 = vunpack.c.l.b16 %v57
  %v142 = vunpack.c.l.b16 %v58
  %v143 = vunpack.c.l.b16 %v59
  %v144 = vunpack.c.l.b16 %v60
  %v145 = vunpack.c.l.b16 %v61
  %v146 = vunpack.c.l.b16 %v62
  %v147 = vpack.c.b16 %v116, %v115
  %v148 = vpack.c.b16 %v118, %v117
  %v149 = vpack.c.b16 %v120, %v119
  %v150 = vpack.c.b16 %v122, %v121
  %v151 = vpack.c.b16 %v124, %v123
  %v152 = vpack.c.b16 %v126, %v125
  %v153 = vpack.c.b16 %v128, %v127
  %v154 = vpack.c.b16 %v130, %v129
  %v155 = vpack.c.b16 %v132, %v131
  %v156 = vpack.c.b16 %v134, %v133
  %v157 = vpack.c.b16 %v136, %v135
  %v158 = vpack.c.b16 %v138, %v137
  %v159 = vpack.c.b16 %v140, %v139
  %v160 = vpack.c.b16 %v142, %v141
  %v161 = vpack.c.b16 %v144, %v143
  %v162 = vpack.c.b16 %v146, %v145
  %179 = vmatprep.subr.bf16.mxu0 0
  %180 = vmatpush1.bf16.msra.mxu0 %v154
  %181 = vmatprep.subr.bf16.mxu0 0
  %182 = vmatpush1.bf16.msra.mxu0 %v153
  %183 = vmatprep.subr.bf16.mxu0 0
  %184 = vmatpush1.bf16.msra.mxu0 %v152
  %185 = vmatprep.subr.bf16.mxu0 0
  %186 = vmatpush1.bf16.msra.mxu0 %v151
  %187 = vmatprep.subr.bf16.mxu0 0
  %188 = vmatpush1.bf16.msra.mxu0 %v150
  %189 = vmatprep.subr.bf16.mxu0 0
  %190 = vmatpush1.bf16.msra.mxu0 %v149
  %191 = vmatprep.subr.bf16.mxu0 0
  %192 = vmatpush1.bf16.msra.mxu0 %v148
  %193 = vmatprep.subr.bf16.mxu0 0
  %194 = vmatpush1.bf16.msra.mxu0 %v147
  %195 = vmatprep.subr.bf16.mxu0 0
  %196 = vmatpush2.bf16.msra.mxu0 %v162
  %197 = vmatprep.subr.bf16.mxu0 0
  %198 = vmatpush2.bf16.msra.mxu0 %v161
  %199 = vmatprep.subr.bf16.mxu0 0
  %200 = vmatpush2.bf16.msra.mxu0 %v160
  %201 = vmatprep.subr.bf16.mxu0 0
  %202 = vmatpush2.bf16.msra.mxu0 %v159
  %203 = vmatprep.subr.bf16.mxu0 0
  %204 = vmatpush2.bf16.msra.mxu0 %v158
  %205 = vmatprep.subr.bf16.mxu0 0
  %206 = vmatpush2.bf16.msra.mxu0 %v157
  %207 = vmatprep.subr.bf16.mxu0 0
  %208 = vmatpush2.bf16.msra.mxu0 %v156
  %209 = vmatprep.subr.bf16.mxu0 0
  %210 = vmatpush2.bf16.msra.mxu0 %v155
  %211 = vmatprep.mubr.bf16.mxu0 %v76
  %212 = vmatmul.mubr.bf16.gmra.mxu0 %v75
  %v213 = vpop.f32.mrf.mxu0
  %v214 = vadd.f32 0.0, %v213
  %v215 = vpop.f32.mrf.mxu0
  %v216 = vpop.f32.mrf.mxu0
  %v217 = vadd.f32 0.0, %v216
  %v218 = vpop.f32.mrf.mxu0
  %219 = vmatprep.mubr.bf16.mxu0 %v78
  %220 = vmatmul.mubr.bf16.gmra.mxu0 %v77
  %v221 = vpop.f32.mrf.mxu0
  %v222 = vadd.f32 0.0, %v221
  %v223 = vpop.f32.mrf.mxu0
  %v224 = vpop.f32.mrf.mxu0
  %v225 = vadd.f32 0.0, %v224
  %v226 = vpop.f32.mrf.mxu0
  %227 = vdwg.mxu0
  %v228 = vadd.f32 %v23, %v214
  %v229 = vadd.f32 %v24, %v217
  %v230 = vadd.f32 %v25, %v222
  %v231 = vadd.f32 %v26, %v225
  %232 = vst [vmem:[#allocation2] sm:$0xff] %v228
  %233 = vst [vmem:[#allocation2 + $0x8] sm:$0xff] %v229
  %234 = vst [vmem:[#allocation2 + $0x10] sm:$0xff] %v230
  %235 = vst [vmem:[#allocation2 + $0x18] sm:$0xff] %v231
  // Predicated region
  $region14: #{cycle_generator_forward.24} parent=0 // pred_check
    %p236 = pneg %p15
  $region15: #{cycle_generator_forward.24} parent=0 // pred_check_branch
    %238 = sbr.rel (%p236) target = $region17
  $region16: #{cycle_generator_forward.24} parent=0 // pred_region
    %v239 = vld [vmem:[#allocation2] sm:$0xff]
    %v240 = vld [vmem:[#allocation2 + $0x8] sm:$0xff]
    %v241 = vld [vmem:[#allocation2 + $0x10] sm:$0xff]
    %v242 = vld [vmem:[#allocation2 + $0x18] sm:$0xff]
    %243 = vst [vmem:[%s2] sm:$0xff] %v239
    %244 = vst [vmem:[%s2 + $0x8] sm:$0xff] %v240
    %245 = vst [vmem:[%s2 + $0x10] sm:$0xff] %v241
    %246 = vst [vmem:[%s2 + $0x18] sm:$0xff] %v242
    %247 = vadd.xlane.f32.xlu0 %v239
    %v248 = vpop.xlane.xlu0 %247
    %249 = vadd.xlane.f32.xlu0 %v240
    %v250 = vpop.xlane.xlu0 %249
    %251 = vadd.xlane.f32.xlu0 %v241
    %v252 = vpop.xlane.xlu0 %251
    %253 = vadd.xlane.f32.xlu0 %v242
    %v254 = vpop.xlane.xlu0 %253
    %v255 = vmul.f32 %v239, %v239
    %v256 = vmul.f32 %v240, %v240
    %v257 = vmul.f32 %v241, %v241
    %v258 = vmul.f32 %v242, %v242
    %259 = vadd.xlane.f32.xlu0 %v255
    %v260 = vpop.xlane.xlu0 %259
    %261 = vadd.xlane.f32.xlu0 %v256
    %v262 = vpop.xlane.xlu0 %261
    %263 = vadd.xlane.f32.xlu0 %v257
    %v264 = vpop.xlane.xlu0 %263
    %265 = vadd.xlane.f32.xlu0 %v258
    %v266 = vpop.xlane.xlu0 %265
    %267 = vst [vmem:[%s3] sm:$0xff] %v248
    %268 = vst [vmem:[%s3 + $0x8] sm:$0xff] %v250
    %269 = vst [vmem:[%s3 + $0x10] sm:$0xff] %v252
    %270 = vst [vmem:[%s3 + $0x18] sm:$0xff] %v254
    %271 = vst [vmem:[%s4] sm:$0xff] %v260
    %272 = vst [vmem:[%s4 + $0x8] sm:$0xff] %v262
    %273 = vst [vmem:[%s4 + $0x10] sm:$0xff] %v264
    %274 = vst [vmem:[%s4 + $0x18] sm:$0xff] %v266
  $region17: #{cycle_generator_forward.24} parent=0 // pred_fallthru
    _
  // Predicated region
  $region18: #{cycle_generator_forward.24} parent=0 // pred_check
    _
  $region19: #{cycle_generator_forward.24} parent=0 // pred_check_branch
    %276 = sbr.rel (0) target = $region21
  $region20: #{cycle_generator_forward.24} parent=0 // pred_region
    _
  $region21: #{cycle_generator_forward.24} parent=0 // pred_fallthru
    _
  // Predicated region
  $region22: #{cycle_generator_forward.24} parent=0 // pred_check
    _
  $region23: #{cycle_generator_forward.24} parent=0 // pred_check_branch
    %278 = sbr.rel (0) target = $region25
  $region24: #{cycle_generator_forward.24} parent=0 // pred_region
    _
  $region25: #{cycle_generator_forward.24} parent=0 // pred_fallthru
    _
  // Predicated region
  $region26: #{cycle_generator_forward.24} parent=0 // pred_check
    _
  $region27: #{cycle_generator_forward.24} parent=0 // pred_check_branch
    %280 = sbr.rel (0) target = $region29
  $region28: #{cycle_generator_forward.24} parent=0 // pred_region
    _
  $region29: #{cycle_generator_forward.24} parent=0 // pred_fallthru
    _
  // Predicated region
  $region30: #{cycle_generator_forward.24} parent=0 // pred_check
    _
  $region31: #{cycle_generator_forward.24} parent=0 // pred_check_branch
    %282 = sbr.rel (0) target = $region33
  $region32: #{cycle_generator_forward.24} parent=0 // pred_region
    _
  $region33: #{cycle_generator_forward.24} parent=0 // pred_fallthru
    _
  // Predicated region
  $region34: #{cycle_generator_forward.24} parent=0 // pred_check
    _
  $region35: #{cycle_generator_forward.24} parent=0 // pred_check_branch
    %284 = sbr.rel (0) target = $region37
  $region36: #{cycle_generator_forward.24} parent=0 // pred_region
    _
  $region37: #{cycle_generator_forward.24} parent=0 // pred_fallthru
    _
  // Predicated region
  $region38: #{cycle_generator_forward.24} parent=0 // pred_check
    _
  $region39: #{cycle_generator_forward.24} parent=0 // pred_check_branch
    %286 = sbr.rel (0) target = $region41
  $region40: #{cycle_generator_forward.24} parent=0 // pred_region
    _
  $region41: #{cycle_generator_forward.24} parent=0 // pred_fallthru
    _

// kernel: cycle_generator_forward.25
$region0: #{cycle_generator_forward.25}
  #allocation0 [shape = 'u32[]', space=smem, size = 0x4, offset = 0x4, fixed_abs, tag = 'smem constant byte address 0x4 - core index']
  #allocation1 [shape = 'u32[144,128]{1,0:T(1,128)}', space=vmem, size = 0x12000, scoped, tag = 'internal scratch']
  %s0 = inlined_call_operand.vmem [shape: f32[32,128], index: 0, kind: input, shape index: {}]
  %s1 = inlined_call_operand.vmem [shape: f32[32,1], index: 1, kind: input, shape index: {}]
  %s2 = inlined_call_operand.vmem [shape: f32[32,1], index: 2, kind: input, shape index: {}]
  %s3 = inlined_call_operand.vmem [shape: f32[32,128], index: 3, kind: output, shape index: {}]
  %s4 = sld [smem:[#allocation0]]
  $region22: #{cycle_generator_forward.25} parent=0
    _
  %s6 = ssub.s32 1, %s4
  %s7 = scalar_select 0, %s6, %s4
  // Predicated region
  $region2: #{cycle_generator_forward.25} parent=0 // pred_check
    _
  $region3: #{cycle_generator_forward.25} parent=0 // pred_check_branch
    %9 = sbr.rel (0) target = $region5
  $region4: #{cycle_generator_forward.25} parent=0 // pred_region
    _
  $region5: #{cycle_generator_forward.25} parent=0 // pred_fallthru
    _
  // Predicated region
  $region6: #{cycle_generator_forward.25} parent=0 // pred_check
    _
  $region7: #{cycle_generator_forward.25} parent=0 // pred_check_branch
    %11 = sbr.rel (0) target = $region9
  $region8: #{cycle_generator_forward.25} parent=0 // pred_region
    _
  $region9: #{cycle_generator_forward.25} parent=0 // pred_fallthru
    _
  // Predicated region
  $region10: #{cycle_generator_forward.25} parent=0 // pred_check
    _
  $region11: #{cycle_generator_forward.25} parent=0 // pred_check_branch
    %13 = sbr.rel (0) target = $region13
  $region12: #{cycle_generator_forward.25} parent=0 // pred_region
    _
  $region13: #{cycle_generator_forward.25} parent=0 // pred_fallthru
    _
  %v14 = vld [vmem:[%s0] sm:$0xff]
  %v15 = vld [vmem:[%s0 + $0x8] sm:$0xff]
  %v16 = vld [vmem:[%s0 + $0x10] sm:$0xff]
  %v17 = vld [vmem:[%s0 + $0x18] sm:$0xff]
  %v18 = vld [vmem:[%s1] sm:$0xff]
  %v19 = vld [vmem:[%s1 + $0x8] sm:$0xff]
  %v20 = vld [vmem:[%s1 + $0x10] sm:$0xff]
  %v21 = vld [vmem:[%s1 + $0x18] sm:$0xff]
  %23 = vset.pattern.permute.xlu0 0
  %24 = vperm.xlu0 %23, %v18
  %v25 = vpop.permute.xlu0 %24
  %28 = vset.pattern.permute.xlu0 0
  %29 = vperm.xlu0 %28, %v19
  %v30 = vpop.permute.xlu0 %29
  %33 = vset.pattern.permute.xlu0 0
  %34 = vperm.xlu0 %33, %v20
  %v35 = vpop.permute.xlu0 %34
  %38 = vset.pattern.permute.xlu0 0
  %39 = vperm.xlu0 %38, %v21
  %v40 = vpop.permute.xlu0 %39
  %v42 = vmul.f32 %v14, %v25
  %v43 = vmul.f32 %v15, %v30
  %v44 = vmul.f32 %v16, %v35
  %v45 = vmul.f32 %v17, %v40
  %v46 = vld [vmem:[%s2] sm:$0xff]
  %v47 = vld [vmem:[%s2 + $0x8] sm:$0xff]
  %v48 = vld [vmem:[%s2 + $0x10] sm:$0xff]
  %v49 = vld [vmem:[%s2 + $0x18] sm:$0xff]
  %51 = vset.pattern.permute.xlu0 0
  %52 = vperm.xlu0 %51, %v46
  %v53 = vpop.permute.xlu0 %52
  %56 = vset.pattern.permute.xlu0 0
  %57 = vperm.xlu0 %56, %v47
  %v58 = vpop.permute.xlu0 %57
  %61 = vset.pattern.permute.xlu0 0
  %62 = vperm.xlu0 %61, %v48
  %v63 = vpop.permute.xlu0 %62
  %66 = vset.pattern.permute.xlu0 0
  %67 = vperm.xlu0 %66, %v49
  %v68 = vpop.permute.xlu0 %67
  %v70 = vadd.f32 %v42, %v53
  %v71 = vadd.f32 %v43, %v58
  %v72 = vadd.f32 %v44, %v63
  %v73 = vadd.f32 %v45, %v68
  %v74 = vmax.f32 %v70, 0.0
  %v75 = vmax.f32 %v71, 0.0
  %v76 = vmax.f32 %v72, 0.0
  %v77 = vmax.f32 %v73, 0.0
  %78 = vst [vmem:[%s3] sm:$0xff] %v74
  %79 = vst [vmem:[%s3 + $0x8] sm:$0xff] %v75
  %80 = vst [vmem:[%s3 + $0x10] sm:$0xff] %v76
  %81 = vst [vmem:[%s3 + $0x18] sm:$0xff] %v77
  // Predicated region
  $region14: #{cycle_generator_forward.25} parent=0 // pred_check
    _
  $region15: #{cycle_generator_forward.25} parent=0 // pred_check_branch
    %83 = sbr.rel (0) target = $region17
  $region16: #{cycle_generator_forward.25} parent=0 // pred_region
    _
  $region17: #{cycle_generator_forward.25} parent=0 // pred_fallthru
    _
  // Predicated region
  $region18: #{cycle_generator_forward.25} parent=0 // pred_check
    _
  $region19: #{cycle_generator_forward.25} parent=0 // pred_check_branch
    %85 = sbr.rel (0) target = $region21
  $region20: #{cycle_generator_forward.25} parent=0 // pred_region
    _
  $region21: #{cycle_generator_forward.25} parent=0 // pred_fallthru
    _

// kernel: cycle_generator_forward.29
$region0: #{cycle_generator_forward.29}
  #allocation0 [shape = 'u32[]', space=smem, size = 0x4, offset = 0x4, fixed_abs, tag = 'smem constant byte address 0x4 - core index']
  #allocation1 [shape = 'u32[144,128]{1,0:T(1,128)}', space=vmem, size = 0x12000, scoped, tag = 'internal scratch']
  %s0 = inlined_call_operand.vmem [shape: f32[32,128], index: 0, kind: input, shape index: {}]
  %s1 = inlined_call_operand.vmem [shape: f32[32,1], index: 1, kind: input, shape index: {}]
  %s2 = inlined_call_operand.vmem [shape: f32[32,1], index: 2, kind: input, shape index: {}]
  %s3 = inlined_call_operand.vmem [shape: f32[32,128], index: 3, kind: input, shape index: {}]
  %s4 = inlined_call_operand.vmem [shape: f32[32,128], index: 4, kind: output, shape index: {}]
  %s5 = sld [smem:[#allocation0]]
  $region26: #{cycle_generator_forward.29} parent=0
    _
  %s7 = ssub.s32 1, %s5
  %s8 = scalar_select 0, %s7, %s5
  // Predicated region
  $region2: #{cycle_generator_forward.29} parent=0 // pred_check
    _
  $region3: #{cycle_generator_forward.29} parent=0 // pred_check_branch
    %10 = sbr.rel (0) target = $region5
  $region4: #{cycle_generator_forward.29} parent=0 // pred_region
    _
  $region5: #{cycle_generator_forward.29} parent=0 // pred_fallthru
    _
  // Predicated region
  $region6: #{cycle_generator_forward.29} parent=0 // pred_check
    _
  $region7: #{cycle_generator_forward.29} parent=0 // pred_check_branch
    %12 = sbr.rel (0) target = $region9
  $region8: #{cycle_generator_forward.29} parent=0 // pred_region
    _
  $region9: #{cycle_generator_forward.29} parent=0 // pred_fallthru
    _
  // Predicated region
  $region10: #{cycle_generator_forward.29} parent=0 // pred_check
    _
  $region11: #{cycle_generator_forward.29} parent=0 // pred_check_branch
    %14 = sbr.rel (0) target = $region13
  $region12: #{cycle_generator_forward.29} parent=0 // pred_region
    _
  $region13: #{cycle_generator_forward.29} parent=0 // pred_fallthru
    _
  // Predicated region
  $region14: #{cycle_generator_forward.29} parent=0 // pred_check
    _
  $region15: #{cycle_generator_forward.29} parent=0 // pred_check_branch
    %16 = sbr.rel (0) target = $region17
  $region16: #{cycle_generator_forward.29} parent=0 // pred_region
    _
  $region17: #{cycle_generator_forward.29} parent=0 // pred_fallthru
    _
  %v17 = vld [vmem:[%s0] sm:$0xff]
  %v18 = vld [vmem:[%s0 + $0x8] sm:$0xff]
  %v19 = vld [vmem:[%s0 + $0x10] sm:$0xff]
  %v20 = vld [vmem:[%s0 + $0x18] sm:$0xff]
  %v21 = vld [vmem:[%s1] sm:$0xff]
  %v22 = vld [vmem:[%s1 + $0x8] sm:$0xff]
  %v23 = vld [vmem:[%s1 + $0x10] sm:$0xff]
  %v24 = vld [vmem:[%s1 + $0x18] sm:$0xff]
  %26 = vset.pattern.permute.xlu0 0
  %27 = vperm.xlu0 %26, %v21
  %v28 = vpop.permute.xlu0 %27
  %31 = vset.pattern.permute.xlu0 0
  %32 = vperm.xlu0 %31, %v22
  %v33 = vpop.permute.xlu0 %32
  %36 = vset.pattern.permute.xlu0 0
  %37 = vperm.xlu0 %36, %v23
  %v38 = vpop.permute.xlu0 %37
  %41 = vset.pattern.permute.xlu0 0
  %42 = vperm.xlu0 %41, %v24
  %v43 = vpop.permute.xlu0 %42
  %v45 = vmul.f32 %v17, %v28
  %v46 = vmul.f32 %v18, %v33
  %v47 = vmul.f32 %v19, %v38
  %v48 = vmul.f32 %v20, %v43
  %v49 = vld [vmem:[%s2] sm:$0xff]
  %v50 = vld [vmem:[%s2 + $0x8] sm:$0xff]
  %v51 = vld [vmem:[%s2 + $0x10] sm:$0xff]
  %v52 = vld [vmem:[%s2 + $0x18] sm:$0xff]
  %54 = vset.pattern.permute.xlu0 0
  %55 = vperm.xlu0 %54, %v49
  %v56 = vpop.permute.xlu0 %55
  %59 = vset.pattern.permute.xlu0 0
  %60 = vperm.xlu0 %59, %v50
  %v61 = vpop.permute.xlu0 %60
  %64 = vset.pattern.permute.xlu0 0
  %65 = vperm.xlu0 %64, %v51
  %v66 = vpop.permute.xlu0 %65
  %69 = vset.pattern.permute.xlu0 0
  %70 = vperm.xlu0 %69, %v52
  %v71 = vpop.permute.xlu0 %70
  %v73 = vadd.f32 %v45, %v56
  %v74 = vadd.f32 %v46, %v61
  %v75 = vadd.f32 %v47, %v66
  %v76 = vadd.f32 %v48, %v71
  %v77 = vld [vmem:[%s3] sm:$0xff]
  %v78 = vld [vmem:[%s3 + $0x8] sm:$0xff]
  %v79 = vld [vmem:[%s3 + $0x10] sm:$0xff]
  %v80 = vld [vmem:[%s3 + $0x18] sm:$0xff]
  %v81 = vadd.f32 %v73, %v77
  %v82 = vadd.f32 %v74, %v78
  %v83 = vadd.f32 %v75, %v79
  %v84 = vadd.f32 %v76, %v80
  %85 = vst [vmem:[%s4] sm:$0xff] %v81
  %86 = vst [vmem:[%s4 + $0x8] sm:$0xff] %v82
  %87 = vst [vmem:[%s4 + $0x10] sm:$0xff] %v83
  %88 = vst [vmem:[%s4 + $0x18] sm:$0xff] %v84
  // Predicated region
  $region18: #{cycle_generator_forward.29} parent=0 // pred_check
    _
  $region19: #{cycle_generator_forward.29} parent=0 // pred_check_branch
    %90 = sbr.rel (0) target = $region21
  $region20: #{cycle_generator_forward.29} parent=0 // pred_region
    _
  $region21: #{cycle_generator_forward.29} parent=0 // pred_fallthru
    _
  // Predicated region
  $region22: #{cycle_generator_forward.29} parent=0 // pred_check
    _
  $region23: #{cycle_generator_forward.29} parent=0 // pred_check_branch
    %92 = sbr.rel (0) target = $region25
  $region24: #{cycle_generator_forward.29} parent=0 // pred_region
    _
  $region25: #{cycle_generator_forward.29} parent=0 // pred_fallthru
    _

// kernel: cycle_generator_forward.26
$region0: #{cycle_generator_forward.26}
  #allocation0 [shape = 'u32[]', space=smem, size = 0x4, offset = 0x4, fixed_abs, tag = 'smem constant byte address 0x4 - core index']
  #allocation1 [shape = 'u32[144,128]{1,0:T(1,128)}', space=vmem, size = 0x12000, scoped, tag = 'internal scratch']
  #allocation2 [shape = 'f32[32,128]{1,0:T(8,128)}', space=vmem, size = 0x4000, scoped, tag = 'scratch operand']
  %s0 = inlined_call_operand.vmem [shape: bf16[32,288], index: 0, kind: input, shape index: {}]
  %s1 = inlined_call_operand.vmem [shape: bf16[288,128], index: 1, kind: input, shape index: {}]
  %s2 = inlined_call_operand.vmem [shape: f32[32,128], index: 2, kind: output, shape index: {0}]
  %s3 = inlined_call_operand.vmem [shape: f32[32,128], index: 3, kind: output, shape index: {1}]
  %s4 = inlined_call_operand.vmem [shape: f32[32,128], index: 4, kind: output, shape index: {2}]
  %5 = xla_tuple %s2, %s3, %s4
  %s6 = sld [smem:[#allocation0]]
  $region42: #{cycle_generator_forward.26} parent=0
    _
  %s8 = ssub.s32 1, %s6
  %s9 = scalar_select 0, %s8, %s6
  // Predicated region
  $region2: #{cycle_generator_forward.26} parent=0 // pred_check
    _
  $region3: #{cycle_generator_forward.26} parent=0 // pred_check_branch
    %11 = sbr.rel (0) target = $region5
  $region4: #{cycle_generator_forward.26} parent=0 // pred_region
    _
  $region5: #{cycle_generator_forward.26} parent=0 // pred_fallthru
    _
  // Predicated region
  $region6: #{cycle_generator_forward.26} parent=0 // pred_check
    _
  $region7: #{cycle_generator_forward.26} parent=0 // pred_check_branch
    %13 = sbr.rel (0) target = $region9
  $region8: #{cycle_generator_forward.26} parent=0 // pred_region
    _
  $region9: #{cycle_generator_forward.26} parent=0 // pred_fallthru
    _
  %p15 = scmp.eq.s32.totalorder 0, 0
  // Predicated region
  $region10: #{cycle_generator_forward.26} parent=0 // pred_check
    %p16 = pneg %p15
  $region11: #{cycle_generator_forward.26} parent=0 // pred_check_branch
    %18 = sbr.rel (%p16) target = $region13
  $region12: #{cycle_generator_forward.26} parent=0 // pred_region
    %19 = vst [vmem:[#allocation2] sm:$0xff] 0.0
    %20 = vst [vmem:[#allocation2 + $0x8] sm:$0xff] 0.0
    %21 = vst [vmem:[#allocation2 + $0x10] sm:$0xff] 0.0
    %22 = vst [vmem:[#allocation2 + $0x18] sm:$0xff] 0.0
  $region13: #{cycle_generator_forward.26} parent=0 // pred_fallthru
    _
  %v23 = vld [vmem:[#allocation2] sm:$0xff]
  %v24 = vld [vmem:[#allocation2 + $0x8] sm:$0xff]
  %v25 = vld [vmem:[#allocation2 + $0x10] sm:$0xff]
  %v26 = vld [vmem:[#allocation2 + $0x18] sm:$0xff]
  %v27 = vld [vmem:[%s0] sm:$0xff]
  %v28 = vld [vmem:[%s0 + $0x8] sm:$0xf]
  %v29 = vld [vmem:[%s0 + $0xc] sm:$0xff]
  %v30 = vld [vmem:[%s0 + $0x14] sm:$0xf]
  %v31 = vld [vmem:[%s0 + $0x18] sm:$0xff]
  %v32 = vld [vmem:[%s0 + $0x20] sm:$0xf]
  %v33 = vld [vmem:[%s0 + $0x24] sm:$0xff]
  %v34 = vld [vmem:[%s0 + $0x2c] sm:$0xf]
  %v35 = vld [vmem:[%s1] sm:$0xf]
  %v36 = vld [vmem:[%s1 + $0x4] sm:$0xf]
  %v37 = vld [vmem:[%s1 + $0x8] sm:$0xf]
  %v38 = vld [vmem:[%s1 + $0xc] sm:$0xf]
  %v39 = vld [vmem:[%s1 + $0x10] sm:$0xf]
  %v40 = vld [vmem:[%s1 + $0x14] sm:$0xf]
  %v41 = vld [vmem:[%s1 + $0x18] sm:$0xf]
  %v42 = vld [vmem:[%s1 + $0x1c] sm:$0xf]
  %v43 = vld [vmem:[%s1 + $0x20] sm:$0xf]
  %v44 = vld [vmem:[%s1 + $0x24] sm:$0xf]
  %v45 = vld [vmem:[%s1 + $0x28] sm:$0xf]
  %v46 = vld [vmem:[%s1 + $0x2c] sm:$0xf]
  %v47 = vld [vmem:[%s1 + $0x30] sm:$0xf]
  %v48 = vld [vmem:[%s1 + $0x34] sm:$0xf]
  %v49 = vld [vmem:[%s1 + $0x38] sm:$0xf]
  %v50 = vld [vmem:[%s1 + $0x3c] sm:$0xf]
  %v51 = vld [vmem:[%s1 + $0x40] sm:$0xf]
  %v52 = vld [vmem:[%s1 + $0x44] sm:$0xf]
  %v53 = vld [vmem:[%s1 + $0x48] sm:$0xf]
  %v54 = vld [vmem:[%s1 + $0x4c] sm:$0xf]
  %v55 = vld [vmem:[%s1 + $0x50] sm:$0xf]
  %v56 = vld [vmem:[%s1 + $0x54] sm:$0xf]
  %v57 = vld [vmem:[%s1 + $0x58] sm:$0xf]
  %v58 = vld [vmem:[%s1 + $0x5c] sm:$0xf]
  %v59 = vld [vmem:[%s1 + $0x60] sm:$0xf]
  %v60 = vld [vmem:[%s1 + $0x64] sm:$0xf]
  %v61 = vld [vmem:[%s1 + $0x68] sm:$0xf]
  %v62 = vld [vmem:[%s1 + $0x6c] sm:$0xf]
  %v63 = vld [vmem:[%s1 + $0x70] sm:$0xf]
  %v64 = vld [vmem:[%s1 + $0x74] sm:$0xf]
  %v65 = vld [vmem:[%s1 + $0x78] sm:$0xf]
  %v66 = vld [vmem:[%s1 + $0x7c] sm:$0xf]
  %v67 = vld [vmem:[%s1 + $0x80] sm:$0xf]
  %v68 = vld [vmem:[%s1 + $0x84] sm:$0xf]
  %v69 = vld [vmem:[%s1 + $0x88] sm:$0xf]
  %v70 = vld [vmem:[%s1 + $0x8c] sm:$0xf]
  %v79 = vunpack.c.l.b16 %v27
  %v80 = vunpack.c.h.b16 %v27
  %v81 = vunpack.c.l.b16 %v28
  %v82 = vunpack.c.l.b16 %v29
  %v83 = vunpack.c.h.b16 %v29
  %v84 = vunpack.c.l.b16 %v30
  %v85 = vunpack.c.l.b16 %v31
  %v86 = vunpack.c.h.b16 %v31
  %v87 = vunpack.c.l.b16 %v32
  %v88 = vunpack.c.l.b16 %v33
  %v89 = vunpack.c.h.b16 %v33
  %v90 = vunpack.c.l.b16 %v34
  %v91 = vpack.c.b16 %v82, %v79
  %v92 = vpack.c.b16 %v83, %v80
  %v93 = vpack.c.b16 %v84, %v81
  %v94 = vpack.c.b16 %v88, %v85
  %v95 = vpack.c.b16 %v89, %v86
  %v96 = vpack.c.b16 %v90, %v87
  %v137 = vunpack.c.l.b16 %v35
  %v138 = vunpack.c.l.b16 %v36
  %v139 = vunpack.c.l.b16 %v37
  %v140 = vunpack.c.l.b16 %v38
  %v141 = vunpack.c.l.b16 %v39
  %v142 = vunpack.c.l.b16 %v40
  %v143 = vunpack.c.l.b16 %v41
  %v144 = vunpack.c.l.b16 %v42
  %v145 = vunpack.c.l.b16 %v43
  %v146 = vunpack.c.l.b16 %v44
  %v147 = vunpack.c.l.b16 %v45
  %v148 = vunpack.c.l.b16 %v46
  %v149 = vunpack.c.l.b16 %v47
  %v150 = vunpack.c.l.b16 %v48
  %v151 = vunpack.c.l.b16 %v49
  %v152 = vunpack.c.l.b16 %v50
  %v153 = vunpack.c.l.b16 %v51
  %v154 = vunpack.c.l.b16 %v52
  %v155 = vunpack.c.l.b16 %v53
  %v156 = vunpack.c.l.b16 %v54
  %v157 = vunpack.c.l.b16 %v55
  %v158 = vunpack.c.l.b16 %v56
  %v159 = vunpack.c.l.b16 %v57
  %v160 = vunpack.c.l.b16 %v58
  %v161 = vunpack.c.l.b16 %v59
  %v162 = vunpack.c.l.b16 %v60
  %v163 = vunpack.c.l.b16 %v61
  %v164 = vunpack.c.l.b16 %v62
  %v165 = vunpack.c.l.b16 %v63
  %v166 = vunpack.c.l.b16 %v64
  %v167 = vunpack.c.l.b16 %v65
  %v168 = vunpack.c.l.b16 %v66
  %v169 = vunpack.c.l.b16 %v67
  %v170 = vunpack.c.l.b16 %v68
  %v171 = vunpack.c.l.b16 %v69
  %v172 = vunpack.c.l.b16 %v70
  %v173 = vpack.c.b16 %v138, %v137
  %v174 = vpack.c.b16 %v140, %v139
  %v175 = vpack.c.b16 %v142, %v141
  %v176 = vpack.c.b16 %v144, %v143
  %v177 = vpack.c.b16 %v146, %v145
  %v178 = vpack.c.b16 %v148, %v147
  %v179 = vpack.c.b16 %v150, %v149
  %v180 = vpack.c.b16 %v152, %v151
  %v181 = vpack.c.b16 %v154, %v153
  %v182 = vpack.c.b16 %v156, %v155
  %v183 = vpack.c.b16 %v158, %v157
  %v184 = vpack.c.b16 %v160, %v159
  %v185 = vpack.c.b16 %v162, %v161
  %v186 = vpack.c.b16 %v164, %v163
  %v187 = vpack.c.b16 %v166, %v165
  %v188 = vpack.c.b16 %v168, %v167
  %v189 = vpack.c.b16 %v170, %v169
  %v190 = vpack.c.b16 %v172, %v171
  %vm209 = vcmask 261120
  %v211 = vsel %vm209, %v93, 0
  %v214 = vsel %vm209, %v96, 0
  %216 = vmatprep.subr.bf16.mxu0 0
  %217 = vmatpush1.bf16.msra.mxu0 %v180
  %218 = vmatprep.subr.bf16.mxu0 0
  %219 = vmatpush1.bf16.msra.mxu0 %v179
  %220 = vmatprep.subr.bf16.mxu0 0
  %221 = vmatpush1.bf16.msra.mxu0 %v178
  %222 = vmatprep.subr.bf16.mxu0 0
  %223 = vmatpush1.bf16.msra.mxu0 %v177
  %224 = vmatprep.subr.bf16.mxu0 0
  %225 = vmatpush1.bf16.msra.mxu0 %v176
  %226 = vmatprep.subr.bf16.mxu0 0
  %227 = vmatpush1.bf16.msra.mxu0 %v175
  %228 = vmatprep.subr.bf16.mxu0 0
  %229 = vmatpush1.bf16.msra.mxu0 %v174
  %230 = vmatprep.subr.bf16.mxu0 0
  %231 = vmatpush1.bf16.msra.mxu0 %v173
  %232 = vmatprep.subr.bf16.mxu0 0
  %233 = vmatpush2.bf16.msra.mxu0 %v188
  %234 = vmatprep.subr.bf16.mxu0 0
  %235 = vmatpush2.bf16.msra.mxu0 %v187
  %236 = vmatprep.subr.bf16.mxu0 0
  %237 = vmatpush2.bf16.msra.mxu0 %v186
  %238 = vmatprep.subr.bf16.mxu0 0
  %239 = vmatpush2.bf16.msra.mxu0 %v185
  %240 = vmatprep.subr.bf16.mxu0 0
  %241 = vmatpush2.bf16.msra.mxu0 %v184
  %242 = vmatprep.subr.bf16.mxu0 0
  %243 = vmatpush2.bf16.msra.mxu0 %v183
  %244 = vmatprep.subr.bf16.mxu0 0
  %245 = vmatpush2.bf16.msra.mxu0 %v182
  %246 = vmatprep.subr.bf16.mxu0 0
  %247 = vmatpush2.bf16.msra.mxu0 %v181
  %248 = vmatprep.mubr.bf16.mxu0 %v92
  %249 = vmatmul.mubr.bf16.gmra.mxu0 %v91
  %v250 = vpop.f32.mrf.mxu0
  %v251 = vadd.f32 0.0, %v250
  %v252 = vpop.f32.mrf.mxu0
  %v253 = vpop.f32.mrf.mxu0
  %v254 = vadd.f32 0.0, %v253
  %v255 = vpop.f32.mrf.mxu0
  %256 = vmatprep.mubr.bf16.mxu0 %v95
  %257 = vmatmul.mubr.bf16.gmra.mxu0 %v94
  %v258 = vpop.f32.mrf.mxu0
  %v259 = vadd.f32 0.0, %v258
  %v260 = vpop.f32.mrf.mxu0
  %v261 = vpop.f32.mrf.mxu0
  %v262 = vadd.f32 0.0, %v261
  %v263 = vpop.f32.mrf.mxu0
  %264 = vdwg.mxu0
  %265 = vmatprep.subr.bf16.mxu0 0
  %266 = vmatpush1.bf16.msra.mxu0 0
  %267 = vmatprep.subr.bf16.mxu0 0
  %268 = vmatpush1.bf16.msra.mxu0 0
  %269 = vmatprep.subr.bf16.mxu0 0
  %270 = vmatpush1.bf16.msra.mxu0 0
  %271 = vmatprep.subr.bf16.mxu0 0
  %272 = vmatpush1.bf16.msra.mxu0 0
  %273 = vmatprep.subr.bf16.mxu0 0
  %274 = vmatpush1.bf16.msra.mxu0 0
  %275 = vmatprep.subr.bf16.mxu0 0
  %276 = vmatpush1.bf16.msra.mxu0 0
  %277 = vmatprep.subr.bf16.mxu0 0
  %278 = vmatpush1.bf16.msra.mxu0 %v190
  %279 = vmatprep.subr.bf16.mxu0 0
  %280 = vmatpush1.bf16.msra.mxu0 %v189
  %281 = vmatprep.subr.bf16.mxu0 0
  %282 = vmatpush2.bf16.msra.mxu0 0
  %283 = vmatprep.subr.bf16.mxu0 0
  %284 = vmatpush2.bf16.msra.mxu0 0
  %285 = vmatprep.subr.bf16.mxu0 0
  %286 = vmatpush2.bf16.msra.mxu0 0
  %287 = vmatprep.subr.bf16.mxu0 0
  %288 = vmatpush2.bf16.msra.mxu0 0
  %289 = vmatprep.subr.bf16.mxu0 0
  %290 = vmatpush2.bf16.msra.mxu0 0
  %291 = vmatprep.subr.bf16.mxu0 0
  %292 = vmatpush2.bf16.msra.mxu0 0
  %293 = vmatprep.subr.bf16.mxu0 0
  %294 = vmatpush2.bf16.msra.mxu0 0
  %295 = vmatprep.subr.bf16.mxu0 0
  %296 = vmatpush2.bf16.msra.mxu0 0
  %297 = vmatprep.mubr.bf16.mxu0 0
  %298 = vmatmul.mubr.bf16.gmra.mxu0 %v211
  %v299 = vpop.f32.mrf.mxu0
  %v300 = vadd.f32 %v251, %v299
  %v301 = vpop.f32.mrf.mxu0
  %v302 = vpop.f32.mrf.mxu0
  %v303 = vadd.f32 %v254, %v302
  %v304 = vpop.f32.mrf.mxu0
  %305 = vmatprep.mubr.bf16.mxu0 0
  %306 = vmatmul.mubr.bf16.gmra.mxu0 %v214
  %v307 = vpop.f32.mrf.mxu0
  %v308 = vadd.f32 %v259, %v307
  %v309 = vpop.f32.mrf.mxu0
  %v310 = vpop.f32.mrf.mxu0
  %v311 = vadd.f32 %v262, %v310
  %v312 = vpop.f32.mrf.mxu0
  %313 = vdwg.mxu0
  %v314 = vadd.f32 %v23, %v300
  %v315 = vadd.f32 %v24, %v303
  %v316 = vadd.f32 %v25, %v308
  %v317 = vadd.f32 %v26, %v311
  %318 = vst [vmem:[#allocation2] sm:$0xff] %v314
  %319 = vst [vmem:[#allocation2 + $0x8] sm:$0xff] %v315
  %320 = vst [vmem:[#allocation2 + $0x10] sm:$0xff] %v316
  %321 = vst [vmem:[#allocation2 + $0x18] sm:$0xff] %v317
  // Predicated region
  $region14: #{cycle_generator_forward.26} parent=0 // pred_check
    %p322 = pneg %p15
  $region15: #{cycle_generator_forward.26} parent=0 // pred_check_branch
    %324 = sbr.rel (%p322) target = $region17
  $region16: #{cycle_generator_forward.26} parent=0 // pred_region
    %v325 = vld [vmem:[#allocation2] sm:$0xff]
    %v326 = vld [vmem:[#allocation2 + $0x8] sm:$0xff]
    %v327 = vld [vmem:[#allocation2 + $0x10] sm:$0xff]
    %v328 = vld [vmem:[#allocation2 + $0x18] sm:$0xff]
    %329 = vst [vmem:[%s2] sm:$0xff] %v325
    %330 = vst [vmem:[%s2 + $0x8] sm:$0xff] %v326
    %331 = vst [vmem:[%s2 + $0x10] sm:$0xff] %v327
    %332 = vst [vmem:[%s2 + $0x18] sm:$0xff] %v328
    %333 = vadd.xlane.f32.xlu0 %v325
    %v334 = vpop.xlane.xlu0 %333
    %335 = vadd.xlane.f32.xlu0 %v326
    %v336 = vpop.xlane.xlu0 %335
    %337 = vadd.xlane.f32.xlu0 %v327
    %v338 = vpop.xlane.xlu0 %337
    %339 = vadd.xlane.f32.xlu0 %v328
    %v340 = vpop.xlane.xlu0 %339
    %v341 = vmul.f32 %v325, %v325
    %v342 = vmul.f32 %v326, %v326
    %v343 = vmul.f32 %v327, %v327
    %v344 = vmul.f32 %v328, %v328
    %345 = vadd.xlane.f32.xlu0 %v341
    %v346 = vpop.xlane.xlu0 %345
    %347 = vadd.xlane.f32.xlu0 %v342
    %v348 = vpop.xlane.xlu0 %347
    %349 = vadd.xlane.f32.xlu0 %v343
    %v350 = vpop.xlane.xlu0 %349
    %351 = vadd.xlane.f32.xlu0 %v344
    %v352 = vpop.xlane.xlu0 %351
    %353 = vst [vmem:[%s3] sm:$0xff] %v334
    %354 = vst [vmem:[%s3 + $0x8] sm:$0xff] %v336
    %355 = vst [vmem:[%s3 + $0x10] sm:$0xff] %v338
    %356 = vst [vmem:[%s3 + $0x18] sm:$0xff] %v340
    %357 = vst [vmem:[%s4] sm:$0xff] %v346
    %358 = vst [vmem:[%s4 + $0x8] sm:$0xff] %v348
    %359 = vst [vmem:[%s4 + $0x10] sm:$0xff] %v350
    %360 = vst [vmem:[%s4 + $0x18] sm:$0xff] %v352
  $region17: #{cycle_generator_forward.26} parent=0 // pred_fallthru
    _
  // Predicated region
  $region18: #{cycle_generator_forward.26} parent=0 // pred_check
    _
  $region19: #{cycle_generator_forward.26} parent=0 // pred_check_branch
    %362 = sbr.rel (0) target = $region21
  $region20: #{cycle_generator_forward.26} parent=0 // pred_region
    _
  $region21: #{cycle_generator_forward.26} parent=0 // pred_fallthru
    _
  // Predicated region
  $region22: #{cycle_generator_forward.26} parent=0 // pred_check
    _
  $region23: #{cycle_generator_forward.26} parent=0 // pred_check_branch
    %364 = sbr.rel (0) target = $region25
  $region24: #{cycle_generator_forward.26} parent=0 // pred_region
    _
  $region25: #{cycle_generator_forward.26} parent=0 // pred_fallthru
    _
  // Predicated region
  $region26: #{cycle_generator_forward.26} parent=0 // pred_check
    _
  $region27: #{cycle_generator_forward.26} parent=0 // pred_check_branch
    %366 = sbr.rel (0) target = $region29
  $region28: #{cycle_generator_forward.26} parent=0 // pred_region
    _
  $region29: #{cycle_generator_forward.26} parent=0 // pred_fallthru
    _
  // Predicated region
  $region30: #{cycle_generator_forward.26} parent=0 // pred_check
    _
  $region31: #{cycle_generator_forward.26} parent=0 // pred_check_branch
    %368 = sbr.rel (0) target = $region33
  $region32: #{cycle_generator_forward.26} parent=0 // pred_region
    _
  $region33: #{cycle_generator_forward.26} parent=0 // pred_fallthru
    _
  // Predicated region
  $region34: #{cycle_generator_forward.26} parent=0 // pred_check
    _
  $region35: #{cycle_generator_forward.26} parent=0 // pred_check_branch
    %370 = sbr.rel (0) target = $region37
  $region36: #{cycle_generator_forward.26} parent=0 // pred_region
    _
  $region37: #{cycle_generator_forward.26} parent=0 // pred_fallthru
    _
  // Predicated region
  $region38: #{cycle_generator_forward.26} parent=0 // pred_check
    _
  $region39: #{cycle_generator_forward.26} parent=0 // pred_check_branch
    %372 = sbr.rel (0) target = $region41
  $region40: #{cycle_generator_forward.26} parent=0 // pred_region
    _
  $region41: #{cycle_generator_forward.26} parent=0 // pred_fallthru
    _

// kernel: cycle_generator_forward.34
$region0: #{cycle_generator_forward.34}
  #allocation0 [shape = 'u32[]', space=smem, size = 0x4, offset = 0x4, fixed_abs, tag = 'smem constant byte address 0x4 - core index']
  #allocation1 [shape = 'u32[144,128]{1,0:T(1,128)}', space=vmem, size = 0x12000, scoped, tag = 'internal scratch']
  #allocation2 [shape = 'f32[256,128]{1,0:T(8,128)}', space=vmem, size = 0x20000, scoped, tag = 'scratch operand']
  %s0 = inlined_call_operand.vmem [shape: bf16[256,32], index: 0, kind: input, shape index: {}]
  %s1 = inlined_call_operand.vmem [shape: bf16[32,128], index: 1, kind: input, shape index: {}]
  %s2 = inlined_call_operand.vmem [shape: f32[256,128], index: 2, kind: output, shape index: {0}]
  %s3 = inlined_call_operand.hbm [shape: f32[256,128], index: 3, kind: output, shape index: {1}]
  %s4 = inlined_call_operand.hbm [shape: f32[256,128], index: 4, kind: output, shape index: {2}]
  %5 = xla_tuple %s2, %s3, %s4
  %s6 = sld [smem:[#allocation0]]
  $region42: #{cycle_generator_forward.34} parent=0
    _
  %s8 = ssub.s32 1, %s6
  %s9 = scalar_select 0, %s8, %s6
  $region1: #{cycle_generator_forward.34} parent=0
    #allocation3 [shape = 'u8[131072]{0}', space=vmem, size = 0x20000, scoped, tag = 'output window, operand 1, single buffered']
    #allocation4 [shape = 's32[1]{0}', space=sflag, size = 0x4, scoped, tag = 'scoped memory for cycle_generator_forward.34']
    #allocation5 [shape = 'u8[131072]{0}', space=vmem, size = 0x20000, scoped, tag = 'output window, operand 2, single buffered']
    #allocation6 [shape = 's32[1]{0}', space=sflag, size = 0x4, scoped, tag = 'scoped memory for cycle_generator_forward.34']
    %10 = vsyncpa [#allocation4], 0
    %11 = vsyncpa [#allocation6], 0
    // Predicated region
    $region2: #{cycle_generator_forward.34} parent=1 // pred_check
      _
    $region3: #{cycle_generator_forward.34} parent=1 // pred_check_branch
      %13 = sbr.rel (0) target = $region5
    $region4: #{cycle_generator_forward.34} parent=1 // pred_region
      _
    $region5: #{cycle_generator_forward.34} parent=1 // pred_fallthru
      _
    // Predicated region
    $region6: #{cycle_generator_forward.34} parent=1 // pred_check
      _
    $region7: #{cycle_generator_forward.34} parent=1 // pred_check_branch
      %15 = sbr.rel (0) target = $region9
    $region8: #{cycle_generator_forward.34} parent=1 // pred_region
      _
    $region9: #{cycle_generator_forward.34} parent=1 // pred_fallthru
      _
    %p17 = scmp.eq.s32.totalorder 0, 0
    // Predicated region
    $region10: #{cycle_generator_forward.34} parent=1 // pred_check
      %p18 = pneg %p17
    $region11: #{cycle_generator_forward.34} parent=1 // pred_check_branch
      %20 = sbr.rel (%p18) target = $region13
    $region12: #{cycle_generator_forward.34} parent=1 // pred_region
      %21 = vst [vmem:[#allocation2] sm:$0xff] 0.0
      %22 = vst [vmem:[#allocation2 + $0x8] sm:$0xff] 0.0
      %23 = vst [vmem:[#allocation2 + $0x10] sm:$0xff] 0.0
      %24 = vst [vmem:[#allocation2 + $0x18] sm:$0xff] 0.0
      %25 = vst [vmem:[#allocation2 + $0x20] sm:$0xff] 0.0
      %26 = vst [vmem:[#allocation2 + $0x28] sm:$0xff] 0.0
      %27 = vst [vmem:[#allocation2 + $0x30] sm:$0xff] 0.0
      %28 = vst [vmem:[#allocation2 + $0x38] sm:$0xff] 0.0
      %29 = vst [vmem:[#allocation2 + $0x40] sm:$0xff] 0.0
      %30 = vst [vmem:[#allocation2 + $0x48] sm:$0xff] 0.0
      %31 = vst [vmem:[#allocation2 + $0x50] sm:$0xff] 0.0
      %32 = vst [vmem:[#allocation2 + $0x58] sm:$0xff] 0.0
      %33 = vst [vmem:[#allocation2 + $0x60] sm:$0xff] 0.0
      %34 = vst [vmem:[#allocation2 + $0x68] sm:$0xff] 0.0
      %35 = vst [vmem:[#allocation2 + $0x70] sm:$0xff] 0.0
      %36 = vst [vmem:[#allocation2 + $0x78] sm:$0xff] 0.0
      %37 = vst [vmem:[#allocation2 + $0x80] sm:$0xff] 0.0
      %38 = vst [vmem:[#allocation2 + $0x88] sm:$0xff] 0.0
      %39 = vst [vmem:[#allocation2 + $0x90] sm:$0xff] 0.0
      %40 = vst [vmem:[#allocation2 + $0x98] sm:$0xff] 0.0
      %41 = vst [vmem:[#allocation2 + $0xa0] sm:$0xff] 0.0
      %42 = vst [vmem:[#allocation2 + $0xa8] sm:$0xff] 0.0
      %43 = vst [vmem:[#allocation2 + $0xb0] sm:$0xff] 0.0
      %44 = vst [vmem:[#allocation2 + $0xb8] sm:$0xff] 0.0
      %45 = vst [vmem:[#allocation2 + $0xc0] sm:$0xff] 0.0
      %46 = vst [vmem:[#allocation2 + $0xc8] sm:$0xff] 0.0
      %47 = vst [vmem:[#allocation2 + $0xd0] sm:$0xff] 0.0
      %48 = vst [vmem:[#allocation2 + $0xd8] sm:$0xff] 0.0
      %49 = vst [vmem:[#allocation2 + $0xe0] sm:$0xff] 0.0
      %50 = vst [vmem:[#allocation2 + $0xe8] sm:$0xff] 0.0
      %51 = vst [vmem:[#allocation2 + $0xf0] sm:$0xff] 0.0
      %52 = vst [vmem:[#allocation2 + $0xf8] sm:$0xff] 0.0
    $region13: #{cycle_generator_forward.34} parent=1 // pred_fallthru
      _
    %v53 = vld [vmem:[#allocation2] sm:$0xff]
    %v54 = vld [vmem:[#allocation2 + $0x8] sm:$0xff]
    %v55 = vld [vmem:[#allocation2 + $0x10] sm:$0xff]
    %v56 = vld [vmem:[#allocation2 + $0x18] sm:$0xff]
    %v57 = vld [vmem:[#allocation2 + $0x20] sm:$0xff]
    %v58 = vld [vmem:[#allocation2 + $0x28] sm:$0xff]
    %v59 = vld [vmem:[#allocation2 + $0x30] sm:$0xff]
    %v60 = vld [vmem:[#allocation2 + $0x38] sm:$0xff]
    %v61 = vld [vmem:[#allocation2 + $0x40] sm:$0xff]
    %v62 = vld [vmem:[#allocation2 + $0x48] sm:$0xff]
    %v63 = vld [vmem:[#allocation2 + $0x50] sm:$0xff]
    %v64 = vld [vmem:[#allocation2 + $0x58] sm:$0xff]
    %v65 = vld [vmem:[#allocation2 + $0x60] sm:$0xff]
    %v66 = vld [vmem:[#allocation2 + $0x68] sm:$0xff]
    %v67 = vld [vmem:[#allocation2 + $0x70] sm:$0xff]
    %v68 = vld [vmem:[#allocation2 + $0x78] sm:$0xff]
    %v69 = vld [vmem:[#allocation2 + $0x80] sm:$0xff]
    %v70 = vld [vmem:[#allocation2 + $0x88] sm:$0xff]
    %v71 = vld [vmem:[#allocation2 + $0x90] sm:$0xff]
    %v72 = vld [vmem:[#allocation2 + $0x98] sm:$0xff]
    %v73 = vld [vmem:[#allocation2 + $0xa0] sm:$0xff]
    %v74 = vld [vmem:[#allocation2 + $0xa8] sm:$0xff]
    %v75 = vld [vmem:[#allocation2 + $0xb0] sm:$0xff]
    %v76 = vld [vmem:[#allocation2 + $0xb8] sm:$0xff]
    %v77 = vld [vmem:[#allocation2 + $0xc0] sm:$0xff]
    %v78 = vld [vmem:[#allocation2 + $0xc8] sm:$0xff]
    %v79 = vld [vmem:[#allocation2 + $0xd0] sm:$0xff]
    %v80 = vld [vmem:[#allocation2 + $0xd8] sm:$0xff]
    %v81 = vld [vmem:[#allocation2 + $0xe0] sm:$0xff]
    %v82 = vld [vmem:[#allocation2 + $0xe8] sm:$0xff]
    %v83 = vld [vmem:[#allocation2 + $0xf0] sm:$0xff]
    %v84 = vld [vmem:[#allocation2 + $0xf8] sm:$0xff]
    %v85 = vld [vmem:[%s0] sm:$0xf]
    %v86 = vld [vmem:[%s0 + $0x4] sm:$0xf]
    %v87 = vld [vmem:[%s0 + $0x8] sm:$0xf]
    %v88 = vld [vmem:[%s0 + $0xc] sm:$0xf]
    %v89 = vld [vmem:[%s0 + $0x10] sm:$0xf]
    %v90 = vld [vmem:[%s0 + $0x14] sm:$0xf]
    %v91 = vld [vmem:[%s0 + $0x18] sm:$0xf]
    %v92 = vld [vmem:[%s0 + $0x1c] sm:$0xf]
    %v93 = vld [vmem:[%s0 + $0x20] sm:$0xf]
    %v94 = vld [vmem:[%s0 + $0x24] sm:$0xf]
    %v95 = vld [vmem:[%s0 + $0x28] sm:$0xf]
    %v96 = vld [vmem:[%s0 + $0x2c] sm:$0xf]
    %v97 = vld [vmem:[%s0 + $0x30] sm:$0xf]
    %v98 = vld [vmem:[%s0 + $0x34] sm:$0xf]
    %v99 = vld [vmem:[%s0 + $0x38] sm:$0xf]
    %v100 = vld [vmem:[%s0 + $0x3c] sm:$0xf]
    %v101 = vld [vmem:[%s0 + $0x40] sm:$0xf]
    %v102 = vld [vmem:[%s0 + $0x44] sm:$0xf]
    %v103 = vld [vmem:[%s0 + $0x48] sm:$0xf]
    %v104 = vld [vmem:[%s0 + $0x4c] sm:$0xf]
    %v105 = vld [vmem:[%s0 + $0x50] sm:$0xf]
    %v106 = vld [vmem:[%s0 + $0x54] sm:$0xf]
    %v107 = vld [vmem:[%s0 + $0x58] sm:$0xf]
    %v108 = vld [vmem:[%s0 + $0x5c] sm:$0xf]
    %v109 = vld [vmem:[%s0 + $0x60] sm:$0xf]
    %v110 = vld [vmem:[%s0 + $0x64] sm:$0xf]
    %v111 = vld [vmem:[%s0 + $0x68] sm:$0xf]
    %v112 = vld [vmem:[%s0 + $0x6c] sm:$0xf]
    %v113 = vld [vmem:[%s0 + $0x70] sm:$0xf]
    %v114 = vld [vmem:[%s0 + $0x74] sm:$0xf]
    %v115 = vld [vmem:[%s0 + $0x78] sm:$0xf]
    %v116 = vld [vmem:[%s0 + $0x7c] sm:$0xf]
    %v117 = vld [vmem:[%s1] sm:$0xf]
    %v118 = vld [vmem:[%s1 + $0x4] sm:$0xf]
    %v119 = vld [vmem:[%s1 + $0x8] sm:$0xf]
    %v120 = vld [vmem:[%s1 + $0xc] sm:$0xf]
    %v153 = vunpack.c.l.b16 %v85
    %v154 = vunpack.c.l.b16 %v86
    %v155 = vunpack.c.l.b16 %v87
    %v156 = vunpack.c.l.b16 %v88
    %v157 = vunpack.c.l.b16 %v89
    %v158 = vunpack.c.l.b16 %v90
    %v159 = vunpack.c.l.b16 %v91
    %v160 = vunpack.c.l.b16 %v92
    %v161 = vunpack.c.l.b16 %v93
    %v162 = vunpack.c.l.b16 %v94
    %v163 = vunpack.c.l.b16 %v95
    %v164 = vunpack.c.l.b16 %v96
    %v165 = vunpack.c.l.b16 %v97
    %v166 = vunpack.c.l.b16 %v98
    %v167 = vunpack.c.l.b16 %v99
    %v168 = vunpack.c.l.b16 %v100
    %v169 = vunpack.c.l.b16 %v101
    %v170 = vunpack.c.l.b16 %v102
    %v171 = vunpack.c.l.b16 %v103
    %v172 = vunpack.c.l.b16 %v104
    %v173 = vunpack.c.l.b16 %v105
    %v174 = vunpack.c.l.b16 %v106
    %v175 = vunpack.c.l.b16 %v107
    %v176 = vunpack.c.l.b16 %v108
    %v177 = vunpack.c.l.b16 %v109
    %v178 = vunpack.c.l.b16 %v110
    %v179 = vunpack.c.l.b16 %v111
    %v180 = vunpack.c.l.b16 %v112
    %v181 = vunpack.c.l.b16 %v113
    %v182 = vunpack.c.l.b16 %v114
    %v183 = vunpack.c.l.b16 %v115
    %v184 = vunpack.c.l.b16 %v116
    %v185 = vpack.c.b16 %v154, %v153
    %v186 = vpack.c.b16 %v156, %v155
    %v187 = vpack.c.b16 %v158, %v157
    %v188 = vpack.c.b16 %v160, %v159
    %v189 = vpack.c.b16 %v162, %v161
    %v190 = vpack.c.b16 %v164, %v163
    %v191 = vpack.c.b16 %v166, %v165
    %v192 = vpack.c.b16 %v168, %v167
    %v193 = vpack.c.b16 %v170, %v169
    %v194 = vpack.c.b16 %v172, %v171
    %v195 = vpack.c.b16 %v174, %v173
    %v196 = vpack.c.b16 %v176, %v175
    %v197 = vpack.c.b16 %v178, %v177
    %v198 = vpack.c.b16 %v180, %v179
    %v199 = vpack.c.b16 %v182, %v181
    %v200 = vpack.c.b16 %v184, %v183
    %v205 = vunpack.c.l.b16 %v117
    %v206 = vunpack.c.l.b16 %v118
    %v207 = vunpack.c.l.b16 %v119
    %v208 = vunpack.c.l.b16 %v120
    %v209 = vpack.c.b16 %v206, %v205
    %v210 = vpack.c.b16 %v208, %v207
    %vm213 = vcmask 261120
    %v215 = vsel %vm213, %v185, 0
    %v218 = vsel %vm213, %v186, 0
    %v221 = vsel %vm213, %v187, 0
    %v224 = vsel %vm213, %v188, 0
    %v227 = vsel %vm213, %v189, 0
    %v230 = vsel %vm213, %v190, 0
    %v233 = vsel %vm213, %v191, 0
    %v236 = vsel %vm213, %v192, 0
    %v239 = vsel %vm213, %v193, 0
    %v242 = vsel %vm213, %v194, 0
    %v245 = vsel %vm213, %v195, 0
    %v248 = vsel %vm213, %v196, 0
    %v251 = vsel %vm213, %v197, 0
    %v254 = vsel %vm213, %v198, 0
    %v257 = vsel %vm213, %v199, 0
    %v260 = vsel %vm213, %v200, 0
    %262 = vmatprep.subr.bf16.mxu0 0
    %263 = vmatpush1.bf16.msra.mxu0 0
    %264 = vmatprep.subr.bf16.mxu0 0
    %265 = vmatpush1.bf16.msra.mxu0 0
    %266 = vmatprep.subr.bf16.mxu0 0
    %267 = vmatpush1.bf16.msra.mxu0 0
    %268 = vmatprep.subr.bf16.mxu0 0
    %269 = vmatpush1.bf16.msra.mxu0 0
    %270 = vmatprep.subr.bf16.mxu0 0
    %271 = vmatpush1.bf16.msra.mxu0 0
    %272 = vmatprep.subr.bf16.mxu0 0
    %273 = vmatpush1.bf16.msra.mxu0 0
    %274 = vmatprep.subr.bf16.mxu0 0
    %275 = vmatpush1.bf16.msra.mxu0 %v210
    %276 = vmatprep.subr.bf16.mxu0 0
    %277 = vmatpush1.bf16.msra.mxu0 %v209
    %278 = vmatprep.subr.bf16.mxu0 0
    %279 = vmatpush2.bf16.msra.mxu0 0
    %280 = vmatprep.subr.bf16.mxu0 0
    %281 = vmatpush2.bf16.msra.mxu0 0
    %282 = vmatprep.subr.bf16.mxu0 0
    %283 = vmatpush2.bf16.msra.mxu0 0
    %284 = vmatprep.subr.bf16.mxu0 0
    %285 = vmatpush2.bf16.msra.mxu0 0
    %286 = vmatprep.subr.bf16.mxu0 0
    %287 = vmatpush2.bf16.msra.mxu0 0
    %288 = vmatprep.subr.bf16.mxu0 0
    %289 = vmatpush2.bf16.msra.mxu0 0
    %290 = vmatprep.subr.bf16.mxu0 0
    %291 = vmatpush2.bf16.msra.mxu0 0
    %292 = vmatprep.subr.bf16.mxu0 0
    %293 = vmatpush2.bf16.msra.mxu0 0
    %294 = vmatprep.mubr.bf16.mxu0 0
    %295 = vmatmul.mubr.bf16.gmra.mxu0 %v215
    %v296 = vpop.f32.mrf.mxu0
    %v297 = vadd.f32 0.0, %v296
    %v298 = vpop.f32.mrf.mxu0
    %v299 = vpop.f32.mrf.mxu0
    %v300 = vadd.f32 0.0, %v299
    %v301 = vpop.f32.mrf.mxu0
    %302 = vmatprep.mubr.bf16.mxu0 0
    %303 = vmatmul.mubr.bf16.gmra.mxu0 %v218
    %v304 = vpop.f32.mrf.mxu0
    %v305 = vadd.f32 0.0, %v304
    %v306 = vpop.f32.mrf.mxu0
    %v307 = vpop.f32.mrf.mxu0
    %v308 = vadd.f32 0.0, %v307
    %v309 = vpop.f32.mrf.mxu0
    %310 = vmatprep.mubr.bf16.mxu0 0
    %311 = vmatmul.mubr.bf16.gmra.mxu0 %v221
    %v312 = vpop.f32.mrf.mxu0
    %v313 = vadd.f32 0.0, %v312
    %v314 = vpop.f32.mrf.mxu0
    %v315 = vpop.f32.mrf.mxu0
    %v316 = vadd.f32 0.0, %v315
    %v317 = vpop.f32.mrf.mxu0
    %318 = vmatprep.mubr.bf16.mxu0 0
    %319 = vmatmul.mubr.bf16.gmra.mxu0 %v224
    %v320 = vpop.f32.mrf.mxu0
    %v321 = vadd.f32 0.0, %v320
    %v322 = vpop.f32.mrf.mxu0
    %v323 = vpop.f32.mrf.mxu0
    %v324 = vadd.f32 0.0, %v323
    %v325 = vpop.f32.mrf.mxu0
    %326 = vmatprep.mubr.bf16.mxu0 0
    %327 = vmatmul.mubr.bf16.gmra.mxu0 %v227
    %v328 = vpop.f32.mrf.mxu0
    %v329 = vadd.f32 0.0, %v328
    %v330 = vpop.f32.mrf.mxu0
    %v331 = vpop.f32.mrf.mxu0
    %v332 = vadd.f32 0.0, %v331
    %v333 = vpop.f32.mrf.mxu0
    %334 = vmatprep.mubr.bf16.mxu0 0
    %335 = vmatmul.mubr.bf16.gmra.mxu0 %v230
    %v336 = vpop.f32.mrf.mxu0
    %v337 = vadd.f32 0.0, %v336
    %v338 = vpop.f32.mrf.mxu0
    %v339 = vpop.f32.mrf.mxu0
    %v340 = vadd.f32 0.0, %v339
    %v341 = vpop.f32.mrf.mxu0
    %342 = vmatprep.mubr.bf16.mxu0 0
    %343 = vmatmul.mubr.bf16.gmra.mxu0 %v233
    %v344 = vpop.f32.mrf.mxu0
    %v345 = vadd.f32 0.0, %v344
    %v346 = vpop.f32.mrf.mxu0
    %v347 = vpop.f32.mrf.mxu0
    %v348 = vadd.f32 0.0, %v347
    %v349 = vpop.f32.mrf.mxu0
    %350 = vmatprep.mubr.bf16.mxu0 0
    %351 = vmatmul.mubr.bf16.gmra.mxu0 %v236
    %v352 = vpop.f32.mrf.mxu0
    %v353 = vadd.f32 0.0, %v352
    %v354 = vpop.f32.mrf.mxu0
    %v355 = vpop.f32.mrf.mxu0
    %v356 = vadd.f32 0.0, %v355
    %v357 = vpop.f32.mrf.mxu0
    %358 = vmatprep.mubr.bf16.mxu0 0
    %359 = vmatmul.mubr.bf16.gmra.mxu0 %v239
    %v360 = vpop.f32.mrf.mxu0
    %v361 = vadd.f32 0.0, %v360
    %v362 = vpop.f32.mrf.mxu0
    %v363 = vpop.f32.mrf.mxu0
    %v364 = vadd.f32 0.0, %v363
    %v365 = vpop.f32.mrf.mxu0
    %366 = vmatprep.mubr.bf16.mxu0 0
    %367 = vmatmul.mubr.bf16.gmra.mxu0 %v242
    %v368 = vpop.f32.mrf.mxu0
    %v369 = vadd.f32 0.0, %v368
    %v370 = vpop.f32.mrf.mxu0
    %v371 = vpop.f32.mrf.mxu0
    %v372 = vadd.f32 0.0, %v371
    %v373 = vpop.f32.mrf.mxu0
    %374 = vmatprep.mubr.bf16.mxu0 0
    %375 = vmatmul.mubr.bf16.gmra.mxu0 %v245
    %v376 = vpop.f32.mrf.mxu0
    %v377 = vadd.f32 0.0, %v376
    %v378 = vpop.f32.mrf.mxu0
    %v379 = vpop.f32.mrf.mxu0
    %v380 = vadd.f32 0.0, %v379
    %v381 = vpop.f32.mrf.mxu0
    %382 = vmatprep.mubr.bf16.mxu0 0
    %383 = vmatmul.mubr.bf16.gmra.mxu0 %v248
    %v384 = vpop.f32.mrf.mxu0
    %v385 = vadd.f32 0.0, %v384
    %v386 = vpop.f32.mrf.mxu0
    %v387 = vpop.f32.mrf.mxu0
    %v388 = vadd.f32 0.0, %v387
    %v389 = vpop.f32.mrf.mxu0
    %390 = vmatprep.mubr.bf16.mxu0 0
    %391 = vmatmul.mubr.bf16.gmra.mxu0 %v251
    %v392 = vpop.f32.mrf.mxu0
    %v393 = vadd.f32 0.0, %v392
    %v394 = vpop.f32.mrf.mxu0
    %v395 = vpop.f32.mrf.mxu0
    %v396 = vadd.f32 0.0, %v395
    %v397 = vpop.f32.mrf.mxu0
    %398 = vmatprep.mubr.bf16.mxu0 0
    %399 = vmatmul.mubr.bf16.gmra.mxu0 %v254
    %v400 = vpop.f32.mrf.mxu0
    %v401 = vadd.f32 0.0, %v400
    %v402 = vpop.f32.mrf.mxu0
    %v403 = vpop.f32.mrf.mxu0
    %v404 = vadd.f32 0.0, %v403
    %v405 = vpop.f32.mrf.mxu0
    %406 = vmatprep.mubr.bf16.mxu0 0
    %407 = vmatmul.mubr.bf16.gmra.mxu0 %v257
    %v408 = vpop.f32.mrf.mxu0
    %v409 = vadd.f32 0.0, %v408
    %v410 = vpop.f32.mrf.mxu0
    %v411 = vpop.f32.mrf.mxu0
    %v412 = vadd.f32 0.0, %v411
    %v413 = vpop.f32.mrf.mxu0
    %414 = vmatprep.mubr.bf16.mxu0 0
    %415 = vmatmul.mubr.bf16.gmra.mxu0 %v260
    %v416 = vpop.f32.mrf.mxu0
    %v417 = vadd.f32 0.0, %v416
    %v418 = vpop.f32.mrf.mxu0
    %v419 = vpop.f32.mrf.mxu0
    %v420 = vadd.f32 0.0, %v419
    %v421 = vpop.f32.mrf.mxu0
    %422 = vdwg.mxu0
    %v423 = vadd.f32 %v53, %v297
    %v424 = vadd.f32 %v54, %v300
    %v425 = vadd.f32 %v55, %v305
    %v426 = vadd.f32 %v56, %v308
    %v427 = vadd.f32 %v57, %v313
    %v428 = vadd.f32 %v58, %v316
    %v429 = vadd.f32 %v59, %v321
    %v430 = vadd.f32 %v60, %v324
    %v431 = vadd.f32 %v61, %v329
    %v432 = vadd.f32 %v62, %v332
    %v433 = vadd.f32 %v63, %v337
    %v434 = vadd.f32 %v64, %v340
    %v435 = vadd.f32 %v65, %v345
    %v436 = vadd.f32 %v66, %v348
    %v437 = vadd.f32 %v67, %v353
    %v438 = vadd.f32 %v68, %v356
    %v439 = vadd.f32 %v69, %v361
    %v440 = vadd.f32 %v70, %v364
    %v441 = vadd.f32 %v71, %v369
    %v442 = vadd.f32 %v72, %v372
    %v443 = vadd.f32 %v73, %v377
    %v444 = vadd.f32 %v74, %v380
    %v445 = vadd.f32 %v75, %v385
    %v446 = vadd.f32 %v76, %v388
    %v447 = vadd.f32 %v77, %v393
    %v448 = vadd.f32 %v78, %v396
    %v449 = vadd.f32 %v79, %v401
    %v450 = vadd.f32 %v80, %v404
    %v451 = vadd.f32 %v81, %v409
    %v452 = vadd.f32 %v82, %v412
    %v453 = vadd.f32 %v83, %v417
    %v454 = vadd.f32 %v84, %v420
    %455 = vst [vmem:[#allocation2] sm:$0xff] %v423
    %456 = vst [vmem:[#allocation2 + $0x8] sm:$0xff] %v424
    %457 = vst [vmem:[#allocation2 + $0x10] sm:$0xff] %v425
    %458 = vst [vmem:[#allocation2 + $0x18] sm:$0xff] %v426
    %459 = vst [vmem:[#allocation2 + $0x20] sm:$0xff] %v427
    %460 = vst [vmem:[#allocation2 + $0x28] sm:$0xff] %v428
    %461 = vst [vmem:[#allocation2 + $0x30] sm:$0xff] %v429
    %462 = vst [vmem:[#allocation2 + $0x38] sm:$0xff] %v430
    %463 = vst [vmem:[#allocation2 + $0x40] sm:$0xff] %v431
    %464 = vst [vmem:[#allocation2 + $0x48] sm:$0xff] %v432
    %465 = vst [vmem:[#allocation2 + $0x50] sm:$0xff] %v433
    %466 = vst [vmem:[#allocation2 + $0x58] sm:$0xff] %v434
    %467 = vst [vmem:[#allocation2 + $0x60] sm:$0xff] %v435
    %468 = vst [vmem:[#allocation2 + $0x68] sm:$0xff] %v436
    %469 = vst [vmem:[#allocation2 + $0x70] sm:$0xff] %v437
    %470 = vst [vmem:[#allocation2 + $0x78] sm:$0xff] %v438
    %471 = vst [vmem:[#allocation2 + $0x80] sm:$0xff] %v439
    %472 = vst [vmem:[#allocation2 + $0x88] sm:$0xff] %v440
    %473 = vst [vmem:[#allocation2 + $0x90] sm:$0xff] %v441
    %474 = vst [vmem:[#allocation2 + $0x98] sm:$0xff] %v442
    %475 = vst [vmem:[#allocation2 + $0xa0] sm:$0xff] %v443
    %476 = vst [vmem:[#allocation2 + $0xa8] sm:$0xff] %v444
    %477 = vst [vmem:[#allocation2 + $0xb0] sm:$0xff] %v445
    %478 = vst [vmem:[#allocation2 + $0xb8] sm:$0xff] %v446
    %479 = vst [vmem:[#allocation2 + $0xc0] sm:$0xff] %v447
    %480 = vst [vmem:[#allocation2 + $0xc8] sm:$0xff] %v448
    %481 = vst [vmem:[#allocation2 + $0xd0] sm:$0xff] %v449
    %482 = vst [vmem:[#allocation2 + $0xd8] sm:$0xff] %v450
    %483 = vst [vmem:[#allocation2 + $0xe0] sm:$0xff] %v451
    %484 = vst [vmem:[#allocation2 + $0xe8] sm:$0xff] %v452
    %485 = vst [vmem:[#allocation2 + $0xf0] sm:$0xff] %v453
    %486 = vst [vmem:[#allocation2 + $0xf8] sm:$0xff] %v454
    // Predicated region
    $region14: #{cycle_generator_forward.34} parent=1 // pred_check
      %p487 = pneg %p17
    $region15: #{cycle_generator_forward.34} parent=1 // pred_check_branch
      %489 = sbr.rel (%p487) target = $region17
    $region16: #{cycle_generator_forward.34} parent=1 // pred_region
      %v490 = vld [vmem:[#allocation2] sm:$0xff]
      %v491 = vld [vmem:[#allocation2 + $0x8] sm:$0xff]
      %v492 = vld [vmem:[#allocation2 + $0x10] sm:$0xff]
      %v493 = vld [vmem:[#allocation2 + $0x18] sm:$0xff]
      %v494 = vld [vmem:[#allocation2 + $0x20] sm:$0xff]
      %v495 = vld [vmem:[#allocation2 + $0x28] sm:$0xff]
      %v496 = vld [vmem:[#allocation2 + $0x30] sm:$0xff]
      %v497 = vld [vmem:[#allocation2 + $0x38] sm:$0xff]
      %v498 = vld [vmem:[#allocation2 + $0x40] sm:$0xff]
      %v499 = vld [vmem:[#allocation2 + $0x48] sm:$0xff]
      %v500 = vld [vmem:[#allocation2 + $0x50] sm:$0xff]
      %v501 = vld [vmem:[#allocation2 + $0x58] sm:$0xff]
      %v502 = vld [vmem:[#allocation2 + $0x60] sm:$0xff]
      %v503 = vld [vmem:[#allocation2 + $0x68] sm:$0xff]
      %v504 = vld [vmem:[#allocation2 + $0x70] sm:$0xff]
      %v505 = vld [vmem:[#allocation2 + $0x78] sm:$0xff]
      %v506 = vld [vmem:[#allocation2 + $0x80] sm:$0xff]
      %v507 = vld [vmem:[#allocation2 + $0x88] sm:$0xff]
      %v508 = vld [vmem:[#allocation2 + $0x90] sm:$0xff]
      %v509 = vld [vmem:[#allocation2 + $0x98] sm:$0xff]
      %v510 = vld [vmem:[#allocation2 + $0xa0] sm:$0xff]
      %v511 = vld [vmem:[#allocation2 + $0xa8] sm:$0xff]
      %v512 = vld [vmem:[#allocation2 + $0xb0] sm:$0xff]
      %v513 = vld [vmem:[#allocation2 + $0xb8] sm:$0xff]
      %v514 = vld [vmem:[#allocation2 + $0xc0] sm:$0xff]
      %v515 = vld [vmem:[#allocation2 + $0xc8] sm:$0xff]
      %v516 = vld [vmem:[#allocation2 + $0xd0] sm:$0xff]
      %v517 = vld [vmem:[#allocation2 + $0xd8] sm:$0xff]
      %v518 = vld [vmem:[#allocation2 + $0xe0] sm:$0xff]
      %v519 = vld [vmem:[#allocation2 + $0xe8] sm:$0xff]
      %v520 = vld [vmem:[#allocation2 + $0xf0] sm:$0xff]
      %v521 = vld [vmem:[#allocation2 + $0xf8] sm:$0xff]
      %522 = vst [vmem:[%s2] sm:$0xff] %v490
      %523 = vst [vmem:[%s2 + $0x8] sm:$0xff] %v491
      %524 = vst [vmem:[%s2 + $0x10] sm:$0xff] %v492
      %525 = vst [vmem:[%s2 + $0x18] sm:$0xff] %v493
      %526 = vst [vmem:[%s2 + $0x20] sm:$0xff] %v494
      %527 = vst [vmem:[%s2 + $0x28] sm:$0xff] %v495
      %528 = vst [vmem:[%s2 + $0x30] sm:$0xff] %v496
      %529 = vst [vmem:[%s2 + $0x38] sm:$0xff] %v497
      %530 = vst [vmem:[%s2 + $0x40] sm:$0xff] %v498
      %531 = vst [vmem:[%s2 + $0x48] sm:$0xff] %v499
      %532 = vst [vmem:[%s2 + $0x50] sm:$0xff] %v500
      %533 = vst [vmem:[%s2 + $0x58] sm:$0xff] %v501
      %534 = vst [vmem:[%s2 + $0x60] sm:$0xff] %v502
      %535 = vst [vmem:[%s2 + $0x68] sm:$0xff] %v503
      %536 = vst [vmem:[%s2 + $0x70] sm:$0xff] %v504
      %537 = vst [vmem:[%s2 + $0x78] sm:$0xff] %v505
      %538 = vst [vmem:[%s2 + $0x80] sm:$0xff] %v506
      %539 = vst [vmem:[%s2 + $0x88] sm:$0xff] %v507
      %540 = vst [vmem:[%s2 + $0x90] sm:$0xff] %v508
      %541 = vst [vmem:[%s2 + $0x98] sm:$0xff] %v509
      %542 = vst [vmem:[%s2 + $0xa0] sm:$0xff] %v510
      %543 = vst [vmem:[%s2 + $0xa8] sm:$0xff] %v511
      %544 = vst [vmem:[%s2 + $0xb0] sm:$0xff] %v512
      %545 = vst [vmem:[%s2 + $0xb8] sm:$0xff] %v513
      %546 = vst [vmem:[%s2 + $0xc0] sm:$0xff] %v514
      %547 = vst [vmem:[%s2 + $0xc8] sm:$0xff] %v515
      %548 = vst [vmem:[%s2 + $0xd0] sm:$0xff] %v516
      %549 = vst [vmem:[%s2 + $0xd8] sm:$0xff] %v517
      %550 = vst [vmem:[%s2 + $0xe0] sm:$0xff] %v518
      %551 = vst [vmem:[%s2 + $0xe8] sm:$0xff] %v519
      %552 = vst [vmem:[%s2 + $0xf0] sm:$0xff] %v520
      %553 = vst [vmem:[%s2 + $0xf8] sm:$0xff] %v521
      %554 = vadd.xlane.f32.xlu0 %v490
      %v555 = vpop.xlane.xlu0 %554
      %556 = vadd.xlane.f32.xlu0 %v491
      %v557 = vpop.xlane.xlu0 %556
      %558 = vadd.xlane.f32.xlu0 %v492
      %v559 = vpop.xlane.xlu0 %558
      %560 = vadd.xlane.f32.xlu0 %v493
      %v561 = vpop.xlane.xlu0 %560
      %562 = vadd.xlane.f32.xlu0 %v494
      %v563 = vpop.xlane.xlu0 %562
      %564 = vadd.xlane.f32.xlu0 %v495
      %v565 = vpop.xlane.xlu0 %564
      %566 = vadd.xlane.f32.xlu0 %v496
      %v567 = vpop.xlane.xlu0 %566
      %568 = vadd.xlane.f32.xlu0 %v497
      %v569 = vpop.xlane.xlu0 %568
      %570 = vadd.xlane.f32.xlu0 %v498
      %v571 = vpop.xlane.xlu0 %570
      %572 = vadd.xlane.f32.xlu0 %v499
      %v573 = vpop.xlane.xlu0 %572
      %574 = vadd.xlane.f32.xlu0 %v500
      %v575 = vpop.xlane.xlu0 %574
      %576 = vadd.xlane.f32.xlu0 %v501
      %v577 = vpop.xlane.xlu0 %576
      %578 = vadd.xlane.f32.xlu0 %v502
      %v579 = vpop.xlane.xlu0 %578
      %580 = vadd.xlane.f32.xlu0 %v503
      %v581 = vpop.xlane.xlu0 %580
      %582 = vadd.xlane.f32.xlu0 %v504
      %v583 = vpop.xlane.xlu0 %582
      %584 = vadd.xlane.f32.xlu0 %v505
      %v585 = vpop.xlane.xlu0 %584
      %586 = vadd.xlane.f32.xlu0 %v506
      %v587 = vpop.xlane.xlu0 %586
      %588 = vadd.xlane.f32.xlu0 %v507
      %v589 = vpop.xlane.xlu0 %588
      %590 = vadd.xlane.f32.xlu0 %v508
      %v591 = vpop.xlane.xlu0 %590
      %592 = vadd.xlane.f32.xlu0 %v509
      %v593 = vpop.xlane.xlu0 %592
      %594 = vadd.xlane.f32.xlu0 %v510
      %v595 = vpop.xlane.xlu0 %594
      %596 = vadd.xlane.f32.xlu0 %v511
      %v597 = vpop.xlane.xlu0 %596
      %598 = vadd.xlane.f32.xlu0 %v512
      %v599 = vpop.xlane.xlu0 %598
      %600 = vadd.xlane.f32.xlu0 %v513
      %v601 = vpop.xlane.xlu0 %600
      %602 = vadd.xlane.f32.xlu0 %v514
      %v603 = vpop.xlane.xlu0 %602
      %604 = vadd.xlane.f32.xlu0 %v515
      %v605 = vpop.xlane.xlu0 %604
      %606 = vadd.xlane.f32.xlu0 %v516
      %v607 = vpop.xlane.xlu0 %606
      %608 = vadd.xlane.f32.xlu0 %v517
      %v609 = vpop.xlane.xlu0 %608
      %610 = vadd.xlane.f32.xlu0 %v518
      %v611 = vpop.xlane.xlu0 %610
      %612 = vadd.xlane.f32.xlu0 %v519
      %v613 = vpop.xlane.xlu0 %612
      %614 = vadd.xlane.f32.xlu0 %v520
      %v615 = vpop.xlane.xlu0 %614
      %616 = vadd.xlane.f32.xlu0 %v521
      %v617 = vpop.xlane.xlu0 %616
      %v618 = vmul.f32 %v490, %v490
      %v619 = vmul.f32 %v491, %v491
      %v620 = vmul.f32 %v492, %v492
      %v621 = vmul.f32 %v493, %v493
      %v622 = vmul.f32 %v494, %v494
      %v623 = vmul.f32 %v495, %v495
      %v624 = vmul.f32 %v496, %v496
      %v625 = vmul.f32 %v497, %v497
      %v626 = vmul.f32 %v498, %v498
      %v627 = vmul.f32 %v499, %v499
      %v628 = vmul.f32 %v500, %v500
      %v629 = vmul.f32 %v501, %v501
      %v630 = vmul.f32 %v502, %v502
      %v631 = vmul.f32 %v503, %v503
      %v632 = vmul.f32 %v504, %v504
      %v633 = vmul.f32 %v505, %v505
      %v634 = vmul.f32 %v506, %v506
      %v635 = vmul.f32 %v507, %v507
      %v636 = vmul.f32 %v508, %v508
      %v637 = vmul.f32 %v509, %v509
      %v638 = vmul.f32 %v510, %v510
      %v639 = vmul.f32 %v511, %v511
      %v640 = vmul.f32 %v512, %v512
      %v641 = vmul.f32 %v513, %v513
      %v642 = vmul.f32 %v514, %v514
      %v643 = vmul.f32 %v515, %v515
      %v644 = vmul.f32 %v516, %v516
      %v645 = vmul.f32 %v517, %v517
      %v646 = vmul.f32 %v518, %v518
      %v647 = vmul.f32 %v519, %v519
      %v648 = vmul.f32 %v520, %v520
      %v649 = vmul.f32 %v521, %v521
      %650 = vadd.xlane.f32.xlu0 %v618
      %v651 = vpop.xlane.xlu0 %650
      %652 = vadd.xlane.f32.xlu0 %v619
      %v653 = vpop.xlane.xlu0 %652
      %654 = vadd.xlane.f32.xlu0 %v620
      %v655 = vpop.xlane.xlu0 %654
      %656 = vadd.xlane.f32.xlu0 %v621
      %v657 = vpop.xlane.xlu0 %656
      %658 = vadd.xlane.f32.xlu0 %v622
      %v659 = vpop.xlane.xlu0 %658
      %660 = vadd.xlane.f32.xlu0 %v623
      %v661 = vpop.xlane.xlu0 %660
      %662 = vadd.xlane.f32.xlu0 %v624
      %v663 = vpop.xlane.xlu0 %662
      %664 = vadd.xlane.f32.xlu0 %v625
      %v665 = vpop.xlane.xlu0 %664
      %666 = vadd.xlane.f32.xlu0 %v626
      %v667 = vpop.xlane.xlu0 %666
      %668 = vadd.xlane.f32.xlu0 %v627
      %v669 = vpop.xlane.xlu0 %668
      %670 = vadd.xlane.f32.xlu0 %v628
      %v671 = vpop.xlane.xlu0 %670
      %672 = vadd.xlane.f32.xlu0 %v629
      %v673 = vpop.xlane.xlu0 %672
      %674 = vadd.xlane.f32.xlu0 %v630
      %v675 = vpop.xlane.xlu0 %674
      %676 = vadd.xlane.f32.xlu0 %v631
      %v677 = vpop.xlane.xlu0 %676
      %678 = vadd.xlane.f32.xlu0 %v632
      %v679 = vpop.xlane.xlu0 %678
      %680 = vadd.xlane.f32.xlu0 %v633
      %v681 = vpop.xlane.xlu0 %680
      %682 = vadd.xlane.f32.xlu0 %v634
      %v683 = vpop.xlane.xlu0 %682
      %684 = vadd.xlane.f32.xlu0 %v635
      %v685 = vpop.xlane.xlu0 %684
      %686 = vadd.xlane.f32.xlu0 %v636
      %v687 = vpop.xlane.xlu0 %686
      %688 = vadd.xlane.f32.xlu0 %v637
      %v689 = vpop.xlane.xlu0 %688
      %690 = vadd.xlane.f32.xlu0 %v638
      %v691 = vpop.xlane.xlu0 %690
      %692 = vadd.xlane.f32.xlu0 %v639
      %v693 = vpop.xlane.xlu0 %692
      %694 = vadd.xlane.f32.xlu0 %v640
      %v695 = vpop.xlane.xlu0 %694
      %696 = vadd.xlane.f32.xlu0 %v641
      %v697 = vpop.xlane.xlu0 %696
      %698 = vadd.xlane.f32.xlu0 %v642
      %v699 = vpop.xlane.xlu0 %698
      %700 = vadd.xlane.f32.xlu0 %v643
      %v701 = vpop.xlane.xlu0 %700
      %702 = vadd.xlane.f32.xlu0 %v644
      %v703 = vpop.xlane.xlu0 %702
      %704 = vadd.xlane.f32.xlu0 %v645
      %v705 = vpop.xlane.xlu0 %704
      %706 = vadd.xlane.f32.xlu0 %v646
      %v707 = vpop.xlane.xlu0 %706
      %708 = vadd.xlane.f32.xlu0 %v647
      %v709 = vpop.xlane.xlu0 %708
      %710 = vadd.xlane.f32.xlu0 %v648
      %v711 = vpop.xlane.xlu0 %710
      %712 = vadd.xlane.f32.xlu0 %v649
      %v713 = vpop.xlane.xlu0 %712
      %714 = vst [vmem:[#allocation3] sm:$0xff] %v555
      %715 = vst [vmem:[#allocation3 + $0x8] sm:$0xff] %v557
      %716 = vst [vmem:[#allocation3 + $0x10] sm:$0xff] %v559
      %717 = vst [vmem:[#allocation3 + $0x18] sm:$0xff] %v561
      %718 = vst [vmem:[#allocation3 + $0x20] sm:$0xff] %v563
      %719 = vst [vmem:[#allocation3 + $0x28] sm:$0xff] %v565
      %720 = vst [vmem:[#allocation3 + $0x30] sm:$0xff] %v567
      %721 = vst [vmem:[#allocation3 + $0x38] sm:$0xff] %v569
      %722 = vst [vmem:[#allocation3 + $0x40] sm:$0xff] %v571
      %723 = vst [vmem:[#allocation3 + $0x48] sm:$0xff] %v573
      %724 = vst [vmem:[#allocation3 + $0x50] sm:$0xff] %v575
      %725 = vst [vmem:[#allocation3 + $0x58] sm:$0xff] %v577
      %726 = vst [vmem:[#allocation3 + $0x60] sm:$0xff] %v579
      %727 = vst [vmem:[#allocation3 + $0x68] sm:$0xff] %v581
      %728 = vst [vmem:[#allocation3 + $0x70] sm:$0xff] %v583
      %729 = vst [vmem:[#allocation3 + $0x78] sm:$0xff] %v585
      %730 = vst [vmem:[#allocation3 + $0x80] sm:$0xff] %v587
      %731 = vst [vmem:[#allocation3 + $0x88] sm:$0xff] %v589
      %732 = vst [vmem:[#allocation3 + $0x90] sm:$0xff] %v591
      %733 = vst [vmem:[#allocation3 + $0x98] sm:$0xff] %v593
      %734 = vst [vmem:[#allocation3 + $0xa0] sm:$0xff] %v595
      %735 = vst [vmem:[#allocation3 + $0xa8] sm:$0xff] %v597
      %736 = vst [vmem:[#allocation3 + $0xb0] sm:$0xff] %v599
      %737 = vst [vmem:[#allocation3 + $0xb8] sm:$0xff] %v601
      %738 = vst [vmem:[#allocation3 + $0xc0] sm:$0xff] %v603
      %739 = vst [vmem:[#allocation3 + $0xc8] sm:$0xff] %v605
      %740 = vst [vmem:[#allocation3 + $0xd0] sm:$0xff] %v607
      %741 = vst [vmem:[#allocation3 + $0xd8] sm:$0xff] %v609
      %742 = vst [vmem:[#allocation3 + $0xe0] sm:$0xff] %v611
      %743 = vst [vmem:[#allocation3 + $0xe8] sm:$0xff] %v613
      %744 = vst [vmem:[#allocation3 + $0xf0] sm:$0xff] %v615
      %745 = vst [vmem:[#allocation3 + $0xf8] sm:$0xff] %v617
      %746 = vst [vmem:[#allocation5] sm:$0xff] %v651
      %747 = vst [vmem:[#allocation5 + $0x8] sm:$0xff] %v653
      %748 = vst [vmem:[#allocation5 + $0x10] sm:$0xff] %v655
      %749 = vst [vmem:[#allocation5 + $0x18] sm:$0xff] %v657
      %750 = vst [vmem:[#allocation5 + $0x20] sm:$0xff] %v659
      %751 = vst [vmem:[#allocation5 + $0x28] sm:$0xff] %v661
      %752 = vst [vmem:[#allocation5 + $0x30] sm:$0xff] %v663
      %753 = vst [vmem:[#allocation5 + $0x38] sm:$0xff] %v665
      %754 = vst [vmem:[#allocation5 + $0x40] sm:$0xff] %v667
      %755 = vst [vmem:[#allocation5 + $0x48] sm:$0xff] %v669
      %756 = vst [vmem:[#allocation5 + $0x50] sm:$0xff] %v671
      %757 = vst [vmem:[#allocation5 + $0x58] sm:$0xff] %v673
      %758 = vst [vmem:[#allocation5 + $0x60] sm:$0xff] %v675
      %759 = vst [vmem:[#allocation5 + $0x68] sm:$0xff] %v677
      %760 = vst [vmem:[#allocation5 + $0x70] sm:$0xff] %v679
      %761 = vst [vmem:[#allocation5 + $0x78] sm:$0xff] %v681
      %762 = vst [vmem:[#allocation5 + $0x80] sm:$0xff] %v683
      %763 = vst [vmem:[#allocation5 + $0x88] sm:$0xff] %v685
      %764 = vst [vmem:[#allocation5 + $0x90] sm:$0xff] %v687
      %765 = vst [vmem:[#allocation5 + $0x98] sm:$0xff] %v689
      %766 = vst [vmem:[#allocation5 + $0xa0] sm:$0xff] %v691
      %767 = vst [vmem:[#allocation5 + $0xa8] sm:$0xff] %v693
      %768 = vst [vmem:[#allocation5 + $0xb0] sm:$0xff] %v695
      %769 = vst [vmem:[#allocation5 + $0xb8] sm:$0xff] %v697
      %770 = vst [vmem:[#allocation5 + $0xc0] sm:$0xff] %v699
      %771 = vst [vmem:[#allocation5 + $0xc8] sm:$0xff] %v701
      %772 = vst [vmem:[#allocation5 + $0xd0] sm:$0xff] %v703
      %773 = vst [vmem:[#allocation5 + $0xd8] sm:$0xff] %v705
      %774 = vst [vmem:[#allocation5 + $0xe0] sm:$0xff] %v707
      %775 = vst [vmem:[#allocation5 + $0xe8] sm:$0xff] %v709
      %776 = vst [vmem:[#allocation5 + $0xf0] sm:$0xff] %v711
      %777 = vst [vmem:[#allocation5 + $0xf8] sm:$0xff] %v713
    $region17: #{cycle_generator_forward.34} parent=1 // pred_fallthru
      _
    // Predicated region
    $region18: #{cycle_generator_forward.34} parent=1 // pred_check
      _
    $region19: #{cycle_generator_forward.34} parent=1 // pred_check_branch
      %779 = sbr.rel (0) target = $region21
    $region20: #{cycle_generator_forward.34} parent=1 // pred_region
      _
    $region21: #{cycle_generator_forward.34} parent=1 // pred_fallthru
      _
    // Predicated region
    $region22: #{cycle_generator_forward.34} parent=1 // pred_check
      _
    $region23: #{cycle_generator_forward.34} parent=1 // pred_check_branch
      %781 = sbr.rel (0) target = $region25
    $region24: #{cycle_generator_forward.34} parent=1 // pred_region
      %s783 = ssub.s32 4096, 4096
      %784 = vsyncadd [#allocation4], %s783
      %s785 = sshll.u32 [#allocation3], 4
      %s786 = int_to_ptr.vmem [resolvable:$true] %s785
      %791 = dma.vmem_to_hbm [thread:$0]  %s786, 4096, %s3, [#allocation4], 128, 128, 8
    $region25: #{cycle_generator_forward.34} parent=1 // pred_fallthru
      _
    // Predicated region
    $region26: #{cycle_generator_forward.34} parent=1 // pred_check
      _
    $region27: #{cycle_generator_forward.34} parent=1 // pred_check_branch
      %793 = sbr.rel (0) target = $region29
    $region28: #{cycle_generator_forward.34} parent=1 // pred_region
      %s795 = ssub.s32 4096, 4096
      %796 = vsyncadd [#allocation6], %s795
      %s797 = sshll.u32 [#allocation5], 4
      %s798 = int_to_ptr.vmem [resolvable:$true] %s797
      %803 = dma.vmem_to_hbm [thread:$0]  %s798, 4096, %s4, [#allocation6], 128, 128, 8
    $region29: #{cycle_generator_forward.34} parent=1 // pred_fallthru
      _
    // Predicated region
    $region30: #{cycle_generator_forward.34} parent=1 // pred_check
      _
    $region31: #{cycle_generator_forward.34} parent=1 // pred_check_branch
      %805 = sbr.rel (0) target = $region33
    $region32: #{cycle_generator_forward.34} parent=1 // pred_region
      _
    $region33: #{cycle_generator_forward.34} parent=1 // pred_fallthru
      _
    // Predicated region
    $region34: #{cycle_generator_forward.34} parent=1 // pred_check
      _
    $region35: #{cycle_generator_forward.34} parent=1 // pred_check_branch
      %807 = sbr.rel (0) target = $region37
    $region36: #{cycle_generator_forward.34} parent=1 // pred_region
      %808 = dma.done [#allocation4], 4096
    $region37: #{cycle_generator_forward.34} parent=1 // pred_fallthru
      _
    // Predicated region
    $region38: #{cycle_generator_forward.34} parent=1 // pred_check
      _
    $region39: #{cycle_generator_forward.34} parent=1 // pred_check_branch
      %810 = sbr.rel (0) target = $region41
    $region40: #{cycle_generator_forward.34} parent=1 // pred_region
      %811 = dma.done [#allocation6], 4096
    $region41: #{cycle_generator_forward.34} parent=1 // pred_fallthru
      _
    %812 = vsyncpa [#allocation4], 1
    %813 = vsyncpa [#allocation6], 1

// kernel: cycle_generator_forward.36
$region0: #{cycle_generator_forward.36}
  #allocation0 [shape = 'u32[]', space=smem, size = 0x4, offset = 0x4, fixed_abs, tag = 'smem constant byte address 0x4 - core index']
  #allocation1 [shape = 'u32[144,128]{1,0:T(1,128)}', space=vmem, size = 0x12000, scoped, tag = 'internal scratch']
  #allocation2 [shape = 'f32[128,128]{1,0:T(8,128)}', space=vmem, size = 0x10000, scoped, tag = 'scratch operand']
  %s0 = inlined_call_operand.vmem [shape: bf16[128,16], index: 0, kind: input, shape index: {}]
  %s1 = inlined_call_operand.vmem [shape: bf16[16,128], index: 1, kind: input, shape index: {}]
  %s2 = inlined_call_operand.vmem [shape: f32[128,128], index: 2, kind: output, shape index: {0}]
  %s3 = inlined_call_operand.hbm [shape: f32[128,128], index: 3, kind: output, shape index: {1}]
  %s4 = inlined_call_operand.hbm [shape: f32[128,128], index: 4, kind: output, shape index: {2}]
  %5 = xla_tuple %s2, %s3, %s4
  %s6 = sld [smem:[#allocation0]]
  $region42: #{cycle_generator_forward.36} parent=0
    _
  %s8 = ssub.s32 1, %s6
  %s9 = scalar_select 0, %s8, %s6
  $region1: #{cycle_generator_forward.36} parent=0
    #allocation3 [shape = 'u8[65536]{0}', space=vmem, size = 0x10000, scoped, tag = 'output window, operand 1, single buffered']
    #allocation4 [shape = 's32[1]{0}', space=sflag, size = 0x4, scoped, tag = 'scoped memory for cycle_generator_forward.36']
    #allocation5 [shape = 'u8[65536]{0}', space=vmem, size = 0x10000, scoped, tag = 'output window, operand 2, single buffered']
    #allocation6 [shape = 's32[1]{0}', space=sflag, size = 0x4, scoped, tag = 'scoped memory for cycle_generator_forward.36']
    %10 = vsyncpa [#allocation4], 0
    %11 = vsyncpa [#allocation6], 0
    // Predicated region
    $region2: #{cycle_generator_forward.36} parent=1 // pred_check
      _
    $region3: #{cycle_generator_forward.36} parent=1 // pred_check_branch
      %13 = sbr.rel (0) target = $region5
    $region4: #{cycle_generator_forward.36} parent=1 // pred_region
      _
    $region5: #{cycle_generator_forward.36} parent=1 // pred_fallthru
      _
    // Predicated region
    $region6: #{cycle_generator_forward.36} parent=1 // pred_check
      _
    $region7: #{cycle_generator_forward.36} parent=1 // pred_check_branch
      %15 = sbr.rel (0) target = $region9
    $region8: #{cycle_generator_forward.36} parent=1 // pred_region
      _
    $region9: #{cycle_generator_forward.36} parent=1 // pred_fallthru
      _
    %p17 = scmp.eq.s32.totalorder 0, 0
    // Predicated region
    $region10: #{cycle_generator_forward.36} parent=1 // pred_check
      %p18 = pneg %p17
    $region11: #{cycle_generator_forward.36} parent=1 // pred_check_branch
      %20 = sbr.rel (%p18) target = $region13
    $region12: #{cycle_generator_forward.36} parent=1 // pred_region
      %21 = vst [vmem:[#allocation2] sm:$0xff] 0.0
      %22 = vst [vmem:[#allocation2 + $0x8] sm:$0xff] 0.0
      %23 = vst [vmem:[#allocation2 + $0x10] sm:$0xff] 0.0
      %24 = vst [vmem:[#allocation2 + $0x18] sm:$0xff] 0.0
      %25 = vst [vmem:[#allocation2 + $0x20] sm:$0xff] 0.0
      %26 = vst [vmem:[#allocation2 + $0x28] sm:$0xff] 0.0
      %27 = vst [vmem:[#allocation2 + $0x30] sm:$0xff] 0.0
      %28 = vst [vmem:[#allocation2 + $0x38] sm:$0xff] 0.0
      %29 = vst [vmem:[#allocation2 + $0x40] sm:$0xff] 0.0
      %30 = vst [vmem:[#allocation2 + $0x48] sm:$0xff] 0.0
      %31 = vst [vmem:[#allocation2 + $0x50] sm:$0xff] 0.0
      %32 = vst [vmem:[#allocation2 + $0x58] sm:$0xff] 0.0
      %33 = vst [vmem:[#allocation2 + $0x60] sm:$0xff] 0.0
      %34 = vst [vmem:[#allocation2 + $0x68] sm:$0xff] 0.0
      %35 = vst [vmem:[#allocation2 + $0x70] sm:$0xff] 0.0
      %36 = vst [vmem:[#allocation2 + $0x78] sm:$0xff] 0.0
    $region13: #{cycle_generator_forward.36} parent=1 // pred_fallthru
      _
    %v37 = vld [vmem:[#allocation2] sm:$0xff]
    %v38 = vld [vmem:[#allocation2 + $0x8] sm:$0xff]
    %v39 = vld [vmem:[#allocation2 + $0x10] sm:$0xff]
    %v40 = vld [vmem:[#allocation2 + $0x18] sm:$0xff]
    %v41 = vld [vmem:[#allocation2 + $0x20] sm:$0xff]
    %v42 = vld [vmem:[#allocation2 + $0x28] sm:$0xff]
    %v43 = vld [vmem:[#allocation2 + $0x30] sm:$0xff]
    %v44 = vld [vmem:[#allocation2 + $0x38] sm:$0xff]
    %v45 = vld [vmem:[#allocation2 + $0x40] sm:$0xff]
    %v46 = vld [vmem:[#allocation2 + $0x48] sm:$0xff]
    %v47 = vld [vmem:[#allocation2 + $0x50] sm:$0xff]
    %v48 = vld [vmem:[#allocation2 + $0x58] sm:$0xff]
    %v49 = vld [vmem:[#allocation2 + $0x60] sm:$0xff]
    %v50 = vld [vmem:[#allocation2 + $0x68] sm:$0xff]
    %v51 = vld [vmem:[#allocation2 + $0x70] sm:$0xff]
    %v52 = vld [vmem:[#allocation2 + $0x78] sm:$0xff]
    %v53 = vld [vmem:[%s0] sm:$0xf]
    %v54 = vld [vmem:[%s0 + $0x4] sm:$0xf]
    %v55 = vld [vmem:[%s0 + $0x8] sm:$0xf]
    %v56 = vld [vmem:[%s0 + $0xc] sm:$0xf]
    %v57 = vld [vmem:[%s0 + $0x10] sm:$0xf]
    %v58 = vld [vmem:[%s0 + $0x14] sm:$0xf]
    %v59 = vld [vmem:[%s0 + $0x18] sm:$0xf]
    %v60 = vld [vmem:[%s0 + $0x1c] sm:$0xf]
    %v61 = vld [vmem:[%s0 + $0x20] sm:$0xf]
    %v62 = vld [vmem:[%s0 + $0x24] sm:$0xf]
    %v63 = vld [vmem:[%s0 + $0x28] sm:$0xf]
    %v64 = vld [vmem:[%s0 + $0x2c] sm:$0xf]
    %v65 = vld [vmem:[%s0 + $0x30] sm:$0xf]
    %v66 = vld [vmem:[%s0 + $0x34] sm:$0xf]
    %v67 = vld [vmem:[%s0 + $0x38] sm:$0xf]
    %v68 = vld [vmem:[%s0 + $0x3c] sm:$0xf]
    %v69 = vld [vmem:[%s1] sm:$0xf]
    %v70 = vld [vmem:[%s1 + $0x4] sm:$0xf]
    %v87 = vunpack.c.l.b16 %v53
    %v88 = vunpack.c.l.b16 %v54
    %v89 = vunpack.c.l.b16 %v55
    %v90 = vunpack.c.l.b16 %v56
    %v91 = vunpack.c.l.b16 %v57
    %v92 = vunpack.c.l.b16 %v58
    %v93 = vunpack.c.l.b16 %v59
    %v94 = vunpack.c.l.b16 %v60
    %v95 = vunpack.c.l.b16 %v61
    %v96 = vunpack.c.l.b16 %v62
    %v97 = vunpack.c.l.b16 %v63
    %v98 = vunpack.c.l.b16 %v64
    %v99 = vunpack.c.l.b16 %v65
    %v100 = vunpack.c.l.b16 %v66
    %v101 = vunpack.c.l.b16 %v67
    %v102 = vunpack.c.l.b16 %v68
    %v103 = vpack.c.b16 %v88, %v87
    %v104 = vpack.c.b16 %v90, %v89
    %v105 = vpack.c.b16 %v92, %v91
    %v106 = vpack.c.b16 %v94, %v93
    %v107 = vpack.c.b16 %v96, %v95
    %v108 = vpack.c.b16 %v98, %v97
    %v109 = vpack.c.b16 %v100, %v99
    %v110 = vpack.c.b16 %v102, %v101
    %v113 = vunpack.c.l.b16 %v69
    %v114 = vunpack.c.l.b16 %v70
    %v115 = vpack.c.b16 %v114, %v113
    %vm117 = vcmask 130048
    %v119 = vsel %vm117, %v103, 0
    %v122 = vsel %vm117, %v104, 0
    %v125 = vsel %vm117, %v105, 0
    %v128 = vsel %vm117, %v106, 0
    %v131 = vsel %vm117, %v107, 0
    %v134 = vsel %vm117, %v108, 0
    %v137 = vsel %vm117, %v109, 0
    %v140 = vsel %vm117, %v110, 0
    %142 = vmatprep.subr.bf16.mxu0 0
    %143 = vmatpush1.bf16.msra.mxu0 0
    %144 = vmatprep.subr.bf16.mxu0 0
    %145 = vmatpush1.bf16.msra.mxu0 0
    %146 = vmatprep.subr.bf16.mxu0 0
    %147 = vmatpush1.bf16.msra.mxu0 0
    %148 = vmatprep.subr.bf16.mxu0 0
    %149 = vmatpush1.bf16.msra.mxu0 0
    %150 = vmatprep.subr.bf16.mxu0 0
    %151 = vmatpush1.bf16.msra.mxu0 0
    %152 = vmatprep.subr.bf16.mxu0 0
    %153 = vmatpush1.bf16.msra.mxu0 0
    %154 = vmatprep.subr.bf16.mxu0 0
    %155 = vmatpush1.bf16.msra.mxu0 0
    %156 = vmatprep.subr.bf16.mxu0 0
    %157 = vmatpush1.bf16.msra.mxu0 %v115
    %158 = vmatprep.subr.bf16.mxu0 0
    %159 = vmatpush2.bf16.msra.mxu0 0
    %160 = vmatprep.subr.bf16.mxu0 0
    %161 = vmatpush2.bf16.msra.mxu0 0
    %162 = vmatprep.subr.bf16.mxu0 0
    %163 = vmatpush2.bf16.msra.mxu0 0
    %164 = vmatprep.subr.bf16.mxu0 0
    %165 = vmatpush2.bf16.msra.mxu0 0
    %166 = vmatprep.subr.bf16.mxu0 0
    %167 = vmatpush2.bf16.msra.mxu0 0
    %168 = vmatprep.subr.bf16.mxu0 0
    %169 = vmatpush2.bf16.msra.mxu0 0
    %170 = vmatprep.subr.bf16.mxu0 0
    %171 = vmatpush2.bf16.msra.mxu0 0
    %172 = vmatprep.subr.bf16.mxu0 0
    %173 = vmatpush2.bf16.msra.mxu0 0
    %174 = vmatprep.mubr.bf16.mxu0 0
    %175 = vmatmul.mubr.bf16.gmra.mxu0 %v119
    %v176 = vpop.f32.mrf.mxu0
    %v177 = vadd.f32 0.0, %v176
    %v178 = vpop.f32.mrf.mxu0
    %v179 = vpop.f32.mrf.mxu0
    %v180 = vadd.f32 0.0, %v179
    %v181 = vpop.f32.mrf.mxu0
    %182 = vmatprep.mubr.bf16.mxu0 0
    %183 = vmatmul.mubr.bf16.gmra.mxu0 %v122
    %v184 = vpop.f32.mrf.mxu0
    %v185 = vadd.f32 0.0, %v184
    %v186 = vpop.f32.mrf.mxu0
    %v187 = vpop.f32.mrf.mxu0
    %v188 = vadd.f32 0.0, %v187
    %v189 = vpop.f32.mrf.mxu0
    %190 = vmatprep.mubr.bf16.mxu0 0
    %191 = vmatmul.mubr.bf16.gmra.mxu0 %v125
    %v192 = vpop.f32.mrf.mxu0
    %v193 = vadd.f32 0.0, %v192
    %v194 = vpop.f32.mrf.mxu0
    %v195 = vpop.f32.mrf.mxu0
    %v196 = vadd.f32 0.0, %v195
    %v197 = vpop.f32.mrf.mxu0
    %198 = vmatprep.mubr.bf16.mxu0 0
    %199 = vmatmul.mubr.bf16.gmra.mxu0 %v128
    %v200 = vpop.f32.mrf.mxu0
    %v201 = vadd.f32 0.0, %v200
    %v202 = vpop.f32.mrf.mxu0
    %v203 = vpop.f32.mrf.mxu0
    %v204 = vadd.f32 0.0, %v203
    %v205 = vpop.f32.mrf.mxu0
    %206 = vmatprep.mubr.bf16.mxu0 0
    %207 = vmatmul.mubr.bf16.gmra.mxu0 %v131
    %v208 = vpop.f32.mrf.mxu0
    %v209 = vadd.f32 0.0, %v208
    %v210 = vpop.f32.mrf.mxu0
    %v211 = vpop.f32.mrf.mxu0
    %v212 = vadd.f32 0.0, %v211
    %v213 = vpop.f32.mrf.mxu0
    %214 = vmatprep.mubr.bf16.mxu0 0
    %215 = vmatmul.mubr.bf16.gmra.mxu0 %v134
    %v216 = vpop.f32.mrf.mxu0
    %v217 = vadd.f32 0.0, %v216
    %v218 = vpop.f32.mrf.mxu0
    %v219 = vpop.f32.mrf.mxu0
    %v220 = vadd.f32 0.0, %v219
    %v221 = vpop.f32.mrf.mxu0
    %222 = vmatprep.mubr.bf16.mxu0 0
    %223 = vmatmul.mubr.bf16.gmra.mxu0 %v137
    %v224 = vpop.f32.mrf.mxu0
    %v225 = vadd.f32 0.0, %v224
    %v226 = vpop.f32.mrf.mxu0
    %v227 = vpop.f32.mrf.mxu0
    %v228 = vadd.f32 0.0, %v227
    %v229 = vpop.f32.mrf.mxu0
    %230 = vmatprep.mubr.bf16.mxu0 0
    %231 = vmatmul.mubr.bf16.gmra.mxu0 %v140
    %v232 = vpop.f32.mrf.mxu0
    %v233 = vadd.f32 0.0, %v232
    %v234 = vpop.f32.mrf.mxu0
    %v235 = vpop.f32.mrf.mxu0
    %v236 = vadd.f32 0.0, %v235
    %v237 = vpop.f32.mrf.mxu0
    %238 = vdwg.mxu0
    %v239 = vadd.f32 %v37, %v177
    %v240 = vadd.f32 %v38, %v180
    %v241 = vadd.f32 %v39, %v185
    %v242 = vadd.f32 %v40, %v188
    %v243 = vadd.f32 %v41, %v193
    %v244 = vadd.f32 %v42, %v196
    %v245 = vadd.f32 %v43, %v201
    %v246 = vadd.f32 %v44, %v204
    %v247 = vadd.f32 %v45, %v209
    %v248 = vadd.f32 %v46, %v212
    %v249 = vadd.f32 %v47, %v217
    %v250 = vadd.f32 %v48, %v220
    %v251 = vadd.f32 %v49, %v225
    %v252 = vadd.f32 %v50, %v228
    %v253 = vadd.f32 %v51, %v233
    %v254 = vadd.f32 %v52, %v236
    %255 = vst [vmem:[#allocation2] sm:$0xff] %v239
    %256 = vst [vmem:[#allocation2 + $0x8] sm:$0xff] %v240
    %257 = vst [vmem:[#allocation2 + $0x10] sm:$0xff] %v241
    %258 = vst [vmem:[#allocation2 + $0x18] sm:$0xff] %v242
    %259 = vst [vmem:[#allocation2 + $0x20] sm:$0xff] %v243
    %260 = vst [vmem:[#allocation2 + $0x28] sm:$0xff] %v244
    %261 = vst [vmem:[#allocation2 + $0x30] sm:$0xff] %v245
    %262 = vst [vmem:[#allocation2 + $0x38] sm:$0xff] %v246
    %263 = vst [vmem:[#allocation2 + $0x40] sm:$0xff] %v247
    %264 = vst [vmem:[#allocation2 + $0x48] sm:$0xff] %v248
    %265 = vst [vmem:[#allocation2 + $0x50] sm:$0xff] %v249
    %266 = vst [vmem:[#allocation2 + $0x58] sm:$0xff] %v250
    %267 = vst [vmem:[#allocation2 + $0x60] sm:$0xff] %v251
    %268 = vst [vmem:[#allocation2 + $0x68] sm:$0xff] %v252
    %269 = vst [vmem:[#allocation2 + $0x70] sm:$0xff] %v253
    %270 = vst [vmem:[#allocation2 + $0x78] sm:$0xff] %v254
    // Predicated region
    $region14: #{cycle_generator_forward.36} parent=1 // pred_check
      %p271 = pneg %p17
    $region15: #{cycle_generator_forward.36} parent=1 // pred_check_branch
      %273 = sbr.rel (%p271) target = $region17
    $region16: #{cycle_generator_forward.36} parent=1 // pred_region
      %v274 = vld [vmem:[#allocation2] sm:$0xff]
      %v275 = vld [vmem:[#allocation2 + $0x8] sm:$0xff]
      %v276 = vld [vmem:[#allocation2 + $0x10] sm:$0xff]
      %v277 = vld [vmem:[#allocation2 + $0x18] sm:$0xff]
      %v278 = vld [vmem:[#allocation2 + $0x20] sm:$0xff]
      %v279 = vld [vmem:[#allocation2 + $0x28] sm:$0xff]
      %v280 = vld [vmem:[#allocation2 + $0x30] sm:$0xff]
      %v281 = vld [vmem:[#allocation2 + $0x38] sm:$0xff]
      %v282 = vld [vmem:[#allocation2 + $0x40] sm:$0xff]
      %v283 = vld [vmem:[#allocation2 + $0x48] sm:$0xff]
      %v284 = vld [vmem:[#allocation2 + $0x50] sm:$0xff]
      %v285 = vld [vmem:[#allocation2 + $0x58] sm:$0xff]
      %v286 = vld [vmem:[#allocation2 + $0x60] sm:$0xff]
      %v287 = vld [vmem:[#allocation2 + $0x68] sm:$0xff]
      %v288 = vld [vmem:[#allocation2 + $0x70] sm:$0xff]
      %v289 = vld [vmem:[#allocation2 + $0x78] sm:$0xff]
      %290 = vst [vmem:[%s2] sm:$0xff] %v274
      %291 = vst [vmem:[%s2 + $0x8] sm:$0xff] %v275
      %292 = vst [vmem:[%s2 + $0x10] sm:$0xff] %v276
      %293 = vst [vmem:[%s2 + $0x18] sm:$0xff] %v277
      %294 = vst [vmem:[%s2 + $0x20] sm:$0xff] %v278
      %295 = vst [vmem:[%s2 + $0x28] sm:$0xff] %v279
      %296 = vst [vmem:[%s2 + $0x30] sm:$0xff] %v280
      %297 = vst [vmem:[%s2 + $0x38] sm:$0xff] %v281
      %298 = vst [vmem:[%s2 + $0x40] sm:$0xff] %v282
      %299 = vst [vmem:[%s2 + $0x48] sm:$0xff] %v283
      %300 = vst [vmem:[%s2 + $0x50] sm:$0xff] %v284
      %301 = vst [vmem:[%s2 + $0x58] sm:$0xff] %v285
      %302 = vst [vmem:[%s2 + $0x60] sm:$0xff] %v286
      %303 = vst [vmem:[%s2 + $0x68] sm:$0xff] %v287
      %304 = vst [vmem:[%s2 + $0x70] sm:$0xff] %v288
      %305 = vst [vmem:[%s2 + $0x78] sm:$0xff] %v289
      %306 = vadd.xlane.f32.xlu0 %v274
      %v307 = vpop.xlane.xlu0 %306
      %308 = vadd.xlane.f32.xlu0 %v275
      %v309 = vpop.xlane.xlu0 %308
      %310 = vadd.xlane.f32.xlu0 %v276
      %v311 = vpop.xlane.xlu0 %310
      %312 = vadd.xlane.f32.xlu0 %v277
      %v313 = vpop.xlane.xlu0 %312
      %314 = vadd.xlane.f32.xlu0 %v278
      %v315 = vpop.xlane.xlu0 %314
      %316 = vadd.xlane.f32.xlu0 %v279
      %v317 = vpop.xlane.xlu0 %316
      %318 = vadd.xlane.f32.xlu0 %v280
      %v319 = vpop.xlane.xlu0 %318
      %320 = vadd.xlane.f32.xlu0 %v281
      %v321 = vpop.xlane.xlu0 %320
      %322 = vadd.xlane.f32.xlu0 %v282
      %v323 = vpop.xlane.xlu0 %322
      %324 = vadd.xlane.f32.xlu0 %v283
      %v325 = vpop.xlane.xlu0 %324
      %326 = vadd.xlane.f32.xlu0 %v284
      %v327 = vpop.xlane.xlu0 %326
      %328 = vadd.xlane.f32.xlu0 %v285
      %v329 = vpop.xlane.xlu0 %328
      %330 = vadd.xlane.f32.xlu0 %v286
      %v331 = vpop.xlane.xlu0 %330
      %332 = vadd.xlane.f32.xlu0 %v287
      %v333 = vpop.xlane.xlu0 %332
      %334 = vadd.xlane.f32.xlu0 %v288
      %v335 = vpop.xlane.xlu0 %334
      %336 = vadd.xlane.f32.xlu0 %v289
      %v337 = vpop.xlane.xlu0 %336
      %v338 = vmul.f32 %v274, %v274
      %v339 = vmul.f32 %v275, %v275
      %v340 = vmul.f32 %v276, %v276
      %v341 = vmul.f32 %v277, %v277
      %v342 = vmul.f32 %v278, %v278
      %v343 = vmul.f32 %v279, %v279
      %v344 = vmul.f32 %v280, %v280
      %v345 = vmul.f32 %v281, %v281
      %v346 = vmul.f32 %v282, %v282
      %v347 = vmul.f32 %v283, %v283
      %v348 = vmul.f32 %v284, %v284
      %v349 = vmul.f32 %v285, %v285
      %v350 = vmul.f32 %v286, %v286
      %v351 = vmul.f32 %v287, %v287
      %v352 = vmul.f32 %v288, %v288
      %v353 = vmul.f32 %v289, %v289
      %354 = vadd.xlane.f32.xlu0 %v338
      %v355 = vpop.xlane.xlu0 %354
      %356 = vadd.xlane.f32.xlu0 %v339
      %v357 = vpop.xlane.xlu0 %356
      %358 = vadd.xlane.f32.xlu0 %v340
      %v359 = vpop.xlane.xlu0 %358
      %360 = vadd.xlane.f32.xlu0 %v341
      %v361 = vpop.xlane.xlu0 %360
      %362 = vadd.xlane.f32.xlu0 %v342
      %v363 = vpop.xlane.xlu0 %362
      %364 = vadd.xlane.f32.xlu0 %v343
      %v365 = vpop.xlane.xlu0 %364
      %366 = vadd.xlane.f32.xlu0 %v344
      %v367 = vpop.xlane.xlu0 %366
      %368 = vadd.xlane.f32.xlu0 %v345
      %v369 = vpop.xlane.xlu0 %368
      %370 = vadd.xlane.f32.xlu0 %v346
      %v371 = vpop.xlane.xlu0 %370
      %372 = vadd.xlane.f32.xlu0 %v347
      %v373 = vpop.xlane.xlu0 %372
      %374 = vadd.xlane.f32.xlu0 %v348
      %v375 = vpop.xlane.xlu0 %374
      %376 = vadd.xlane.f32.xlu0 %v349
      %v377 = vpop.xlane.xlu0 %376
      %378 = vadd.xlane.f32.xlu0 %v350
      %v379 = vpop.xlane.xlu0 %378
      %380 = vadd.xlane.f32.xlu0 %v351
      %v381 = vpop.xlane.xlu0 %380
      %382 = vadd.xlane.f32.xlu0 %v352
      %v383 = vpop.xlane.xlu0 %382
      %384 = vadd.xlane.f32.xlu0 %v353
      %v385 = vpop.xlane.xlu0 %384
      %386 = vst [vmem:[#allocation3] sm:$0xff] %v307
      %387 = vst [vmem:[#allocation3 + $0x8] sm:$0xff] %v309
      %388 = vst [vmem:[#allocation3 + $0x10] sm:$0xff] %v311
      %389 = vst [vmem:[#allocation3 + $0x18] sm:$0xff] %v313
      %390 = vst [vmem:[#allocation3 + $0x20] sm:$0xff] %v315
      %391 = vst [vmem:[#allocation3 + $0x28] sm:$0xff] %v317
      %392 = vst [vmem:[#allocation3 + $0x30] sm:$0xff] %v319
      %393 = vst [vmem:[#allocation3 + $0x38] sm:$0xff] %v321
      %394 = vst [vmem:[#allocation3 + $0x40] sm:$0xff] %v323
      %395 = vst [vmem:[#allocation3 + $0x48] sm:$0xff] %v325
      %396 = vst [vmem:[#allocation3 + $0x50] sm:$0xff] %v327
      %397 = vst [vmem:[#allocation3 + $0x58] sm:$0xff] %v329
      %398 = vst [vmem:[#allocation3 + $0x60] sm:$0xff] %v331
      %399 = vst [vmem:[#allocation3 + $0x68] sm:$0xff] %v333
      %400 = vst [vmem:[#allocation3 + $0x70] sm:$0xff] %v335
      %401 = vst [vmem:[#allocation3 + $0x78] sm:$0xff] %v337
      %402 = vst [vmem:[#allocation5] sm:$0xff] %v355
      %403 = vst [vmem:[#allocation5 + $0x8] sm:$0xff] %v357
      %404 = vst [vmem:[#allocation5 + $0x10] sm:$0xff] %v359
      %405 = vst [vmem:[#allocation5 + $0x18] sm:$0xff] %v361
      %406 = vst [vmem:[#allocation5 + $0x20] sm:$0xff] %v363
      %407 = vst [vmem:[#allocation5 + $0x28] sm:$0xff] %v365
      %408 = vst [vmem:[#allocation5 + $0x30] sm:$0xff] %v367
      %409 = vst [vmem:[#allocation5 + $0x38] sm:$0xff] %v369
      %410 = vst [vmem:[#allocation5 + $0x40] sm:$0xff] %v371
      %411 = vst [vmem:[#allocation5 + $0x48] sm:$0xff] %v373
      %412 = vst [vmem:[#allocation5 + $0x50] sm:$0xff] %v375
      %413 = vst [vmem:[#allocation5 + $0x58] sm:$0xff] %v377
      %414 = vst [vmem:[#allocation5 + $0x60] sm:$0xff] %v379
      %415 = vst [vmem:[#allocation5 + $0x68] sm:$0xff] %v381
      %416 = vst [vmem:[#allocation5 + $0x70] sm:$0xff] %v383
      %417 = vst [vmem:[#allocation5 + $0x78] sm:$0xff] %v385
    $region17: #{cycle_generator_forward.36} parent=1 // pred_fallthru
      _
    // Predicated region
    $region18: #{cycle_generator_forward.36} parent=1 // pred_check
      _
    $region19: #{cycle_generator_forward.36} parent=1 // pred_check_branch
      %419 = sbr.rel (0) target = $region21
    $region20: #{cycle_generator_forward.36} parent=1 // pred_region
      _
    $region21: #{cycle_generator_forward.36} parent=1 // pred_fallthru
      _
    // Predicated region
    $region22: #{cycle_generator_forward.36} parent=1 // pred_check
      _
    $region23: #{cycle_generator_forward.36} parent=1 // pred_check_branch
      %421 = sbr.rel (0) target = $region25
    $region24: #{cycle_generator_forward.36} parent=1 // pred_region
      %s423 = ssub.s32 2048, 2048
      %424 = vsyncadd [#allocation4], %s423
      %s425 = sshll.u32 [#allocation3], 4
      %s426 = int_to_ptr.vmem [resolvable:$true] %s425
      %431 = dma.vmem_to_hbm [thread:$0]  %s426, 2048, %s3, [#allocation4], 128, 128, 8
    $region25: #{cycle_generator_forward.36} parent=1 // pred_fallthru
      _
    // Predicated region
    $region26: #{cycle_generator_forward.36} parent=1 // pred_check
      _
    $region27: #{cycle_generator_forward.36} parent=1 // pred_check_branch
      %433 = sbr.rel (0) target = $region29
    $region28: #{cycle_generator_forward.36} parent=1 // pred_region
      %s435 = ssub.s32 2048, 2048
      %436 = vsyncadd [#allocation6], %s435
      %s437 = sshll.u32 [#allocation5], 4
      %s438 = int_to_ptr.vmem [resolvable:$true] %s437
      %443 = dma.vmem_to_hbm [thread:$0]  %s438, 2048, %s4, [#allocation6], 128, 128, 8
    $region29: #{cycle_generator_forward.36} parent=1 // pred_fallthru
      _
    // Predicated region
    $region30: #{cycle_generator_forward.36} parent=1 // pred_check
      _
    $region31: #{cycle_generator_forward.36} parent=1 // pred_check_branch
      %445 = sbr.rel (0) target = $region33
    $region32: #{cycle_generator_forward.36} parent=1 // pred_region
      _
    $region33: #{cycle_generator_forward.36} parent=1 // pred_fallthru
      _
    // Predicated region
    $region34: #{cycle_generator_forward.36} parent=1 // pred_check
      _
    $region35: #{cycle_generator_forward.36} parent=1 // pred_check_branch
      %447 = sbr.rel (0) target = $region37
    $region36: #{cycle_generator_forward.36} parent=1 // pred_region
      %448 = dma.done [#allocation4], 2048
    $region37: #{cycle_generator_forward.36} parent=1 // pred_fallthru
      _
    // Predicated region
    $region38: #{cycle_generator_forward.36} parent=1 // pred_check
      _
    $region39: #{cycle_generator_forward.36} parent=1 // pred_check_branch
      %450 = sbr.rel (0) target = $region41
    $region40: #{cycle_generator_forward.36} parent=1 // pred_region
      %451 = dma.done [#allocation6], 2048
    $region41: #{cycle_generator_forward.36} parent=1 // pred_fallthru
      _
    %452 = vsyncpa [#allocation4], 1
    %453 = vsyncpa [#allocation6], 1

// kernel: mul.183
$region0: #{mul.183}
  #allocation0 [shape = 's32[1]{0}', space=sflag, size = 0x4, scoped, tag = 'scoped memory for mul.183']
  %s0 = inlined_call_operand.vmem [shape: f32[8,1], index: 0, kind: input, shape index: {}]
  %s1 = inlined_call_operand.vmem [shape: f32[8,1], index: 1, kind: input, shape index: {}]
  %s2 = inlined_call_operand.vmem [shape: f32[8,1], index: 2, kind: output, shape index: {}]
  %v3 = vld [vmem:[%s0] sm:$0xff]
  %v4 = vld [vmem:[%s1] sm:$0xff]
  %5 = xla_tuple %v3, %v4
  %6 = xla_tuple %5
  %v7 = vmul.f32 %v3, %v4
  %8 = xla_tuple %v7
  %9 = vst [vmem:[%s2] sm:$0xff] %v7

// kernel: cycle_generator_forward.37
$region0: #{cycle_generator_forward.37}
  #allocation0 [shape = 'u32[]', space=smem, size = 0x4, offset = 0x4, fixed_abs, tag = 'smem constant byte address 0x4 - core index']
  #allocation1 [shape = 'u32[144,128]{1,0:T(1,128)}', space=vmem, size = 0x12000, scoped, tag = 'internal scratch']
  %s0 = inlined_call_operand.vmem [shape: f32[8,128], index: 0, kind: input, shape index: {}]
  %s1 = inlined_call_operand.vmem [shape: f32[8,1], index: 1, kind: input, shape index: {}]
  %s2 = inlined_call_operand.vmem [shape: f32[8,1], index: 2, kind: input, shape index: {}]
  %s3 = inlined_call_operand.vmem [shape: f32[8,128], index: 3, kind: output, shape index: {}]
  %s4 = sld [smem:[#allocation0]]
  $region22: #{cycle_generator_forward.37} parent=0
    _
  %s6 = ssub.s32 1, %s4
  %s7 = scalar_select 0, %s6, %s4
  // Predicated region
  $region2: #{cycle_generator_forward.37} parent=0 // pred_check
    _
  $region3: #{cycle_generator_forward.37} parent=0 // pred_check_branch
    %9 = sbr.rel (0) target = $region5
  $region4: #{cycle_generator_forward.37} parent=0 // pred_region
    _
  $region5: #{cycle_generator_forward.37} parent=0 // pred_fallthru
    _
  // Predicated region
  $region6: #{cycle_generator_forward.37} parent=0 // pred_check
    _
  $region7: #{cycle_generator_forward.37} parent=0 // pred_check_branch
    %11 = sbr.rel (0) target = $region9
  $region8: #{cycle_generator_forward.37} parent=0 // pred_region
    _
  $region9: #{cycle_generator_forward.37} parent=0 // pred_fallthru
    _
  // Predicated region
  $region10: #{cycle_generator_forward.37} parent=0 // pred_check
    _
  $region11: #{cycle_generator_forward.37} parent=0 // pred_check_branch
    %13 = sbr.rel (0) target = $region13
  $region12: #{cycle_generator_forward.37} parent=0 // pred_region
    _
  $region13: #{cycle_generator_forward.37} parent=0 // pred_fallthru
    _
  %v14 = vld [vmem:[%s0] sm:$0xff]
  %v15 = vld [vmem:[%s1] sm:$0xff]
  %17 = vset.pattern.permute.xlu0 0
  %18 = vperm.xlu0 %17, %v15
  %v19 = vpop.permute.xlu0 %18
  %v21 = vmul.f32 %v14, %v19
  %v22 = vld [vmem:[%s2] sm:$0xff]
  %24 = vset.pattern.permute.xlu0 0
  %25 = vperm.xlu0 %24, %v22
  %v26 = vpop.permute.xlu0 %25
  %v28 = vadd.f32 %v21, %v26
  %v29 = vmax.f32 %v28, 0.0
  %30 = vst [vmem:[%s3] sm:$0xff] %v29
  // Predicated region
  $region14: #{cycle_generator_forward.37} parent=0 // pred_check
    _
  $region15: #{cycle_generator_forward.37} parent=0 // pred_check_branch
    %32 = sbr.rel (0) target = $region17
  $region16: #{cycle_generator_forward.37} parent=0 // pred_region
    _
  $region17: #{cycle_generator_forward.37} parent=0 // pred_fallthru
    _
  // Predicated region
  $region18: #{cycle_generator_forward.37} parent=0 // pred_check
    _
  $region19: #{cycle_generator_forward.37} parent=0 // pred_check_branch
    %34 = sbr.rel (0) target = $region21
  $region20: #{cycle_generator_forward.37} parent=0 // pred_region
    _
  $region21: #{cycle_generator_forward.37} parent=0 // pred_fallthru
    _

// kernel: cycle_generator_forward.38
$region0: #{cycle_generator_forward.38}
  #allocation0 [shape = 'u32[]', space=smem, size = 0x4, offset = 0x4, fixed_abs, tag = 'smem constant byte address 0x4 - core index']
  #allocation1 [shape = 'u32[144,128]{1,0:T(1,128)}', space=vmem, size = 0x12000, scoped, tag = 'internal scratch']
  #allocation2 [shape = 'f32[48,128]{1,0:T(8,128)}', space=vmem, size = 0x6000, scoped, tag = 'scratch operand']
  %s0 = inlined_call_operand.vmem [shape: bf16[48,16], index: 0, kind: input, shape index: {}]
  %s1 = inlined_call_operand.vmem [shape: bf16[16,128], index: 1, kind: input, shape index: {}]
  %s2 = inlined_call_operand.vmem [shape: f32[48,128], index: 2, kind: output, shape index: {0}]
  %s3 = inlined_call_operand.hbm [shape: f32[48,128], index: 3, kind: output, shape index: {1}]
  %s4 = inlined_call_operand.hbm [shape: f32[48,128], index: 4, kind: output, shape index: {2}]
  %5 = xla_tuple %s2, %s3, %s4
  %s6 = sld [smem:[#allocation0]]
  $region42: #{cycle_generator_forward.38} parent=0
    _
  %s8 = ssub.s32 1, %s6
  %s9 = scalar_select 0, %s8, %s6
  $region1: #{cycle_generator_forward.38} parent=0
    #allocation3 [shape = 'u8[24576]{0}', space=vmem, size = 0x6000, scoped, tag = 'output window, operand 1, single buffered']
    #allocation4 [shape = 's32[1]{0}', space=sflag, size = 0x4, scoped, tag = 'scoped memory for cycle_generator_forward.38']
    #allocation5 [shape = 'u8[24576]{0}', space=vmem, size = 0x6000, scoped, tag = 'output window, operand 2, single buffered']
    #allocation6 [shape = 's32[1]{0}', space=sflag, size = 0x4, scoped, tag = 'scoped memory for cycle_generator_forward.38']
    %10 = vsyncpa [#allocation4], 0
    %11 = vsyncpa [#allocation6], 0
    // Predicated region
    $region2: #{cycle_generator_forward.38} parent=1 // pred_check
      _
    $region3: #{cycle_generator_forward.38} parent=1 // pred_check_branch
      %13 = sbr.rel (0) target = $region5
    $region4: #{cycle_generator_forward.38} parent=1 // pred_region
      _
    $region5: #{cycle_generator_forward.38} parent=1 // pred_fallthru
      _
    // Predicated region
    $region6: #{cycle_generator_forward.38} parent=1 // pred_check
      _
    $region7: #{cycle_generator_forward.38} parent=1 // pred_check_branch
      %15 = sbr.rel (0) target = $region9
    $region8: #{cycle_generator_forward.38} parent=1 // pred_region
      _
    $region9: #{cycle_generator_forward.38} parent=1 // pred_fallthru
      _
    %p17 = scmp.eq.s32.totalorder 0, 0
    // Predicated region
    $region10: #{cycle_generator_forward.38} parent=1 // pred_check
      %p18 = pneg %p17
    $region11: #{cycle_generator_forward.38} parent=1 // pred_check_branch
      %20 = sbr.rel (%p18) target = $region13
    $region12: #{cycle_generator_forward.38} parent=1 // pred_region
      %21 = vst [vmem:[#allocation2] sm:$0xff] 0.0
      %22 = vst [vmem:[#allocation2 + $0x8] sm:$0xff] 0.0
      %23 = vst [vmem:[#allocation2 + $0x10] sm:$0xff] 0.0
      %24 = vst [vmem:[#allocation2 + $0x18] sm:$0xff] 0.0
      %25 = vst [vmem:[#allocation2 + $0x20] sm:$0xff] 0.0
      %26 = vst [vmem:[#allocation2 + $0x28] sm:$0xff] 0.0
    $region13: #{cycle_generator_forward.38} parent=1 // pred_fallthru
      _
    %v27 = vld [vmem:[#allocation2] sm:$0xff]
    %v28 = vld [vmem:[#allocation2 + $0x8] sm:$0xff]
    %v29 = vld [vmem:[#allocation2 + $0x10] sm:$0xff]
    %v30 = vld [vmem:[#allocation2 + $0x18] sm:$0xff]
    %v31 = vld [vmem:[#allocation2 + $0x20] sm:$0xff]
    %v32 = vld [vmem:[#allocation2 + $0x28] sm:$0xff]
    %v33 = vld [vmem:[%s0] sm:$0xf]
    %v34 = vld [vmem:[%s0 + $0x4] sm:$0xf]
    %v35 = vld [vmem:[%s0 + $0x8] sm:$0xf]
    %v36 = vld [vmem:[%s0 + $0xc] sm:$0xf]
    %v37 = vld [vmem:[%s0 + $0x10] sm:$0xf]
    %v38 = vld [vmem:[%s0 + $0x14] sm:$0xf]
    %v39 = vld [vmem:[%s1] sm:$0xf]
    %v40 = vld [vmem:[%s1 + $0x4] sm:$0xf]
    %v47 = vunpack.c.l.b16 %v33
    %v48 = vunpack.c.l.b16 %v34
    %v49 = vunpack.c.l.b16 %v35
    %v50 = vunpack.c.l.b16 %v36
    %v51 = vunpack.c.l.b16 %v37
    %v52 = vunpack.c.l.b16 %v38
    %v53 = vpack.c.b16 %v48, %v47
    %v54 = vpack.c.b16 %v50, %v49
    %v55 = vpack.c.b16 %v52, %v51
    %v58 = vunpack.c.l.b16 %v39
    %v59 = vunpack.c.l.b16 %v40
    %v60 = vpack.c.b16 %v59, %v58
    %vm62 = vcmask 130048
    %v64 = vsel %vm62, %v53, 0
    %v67 = vsel %vm62, %v54, 0
    %v70 = vsel %vm62, %v55, 0
    %72 = vmatprep.subr.bf16.mxu0 0
    %73 = vmatpush1.bf16.msra.mxu0 0
    %74 = vmatprep.subr.bf16.mxu0 0
    %75 = vmatpush1.bf16.msra.mxu0 0
    %76 = vmatprep.subr.bf16.mxu0 0
    %77 = vmatpush1.bf16.msra.mxu0 0
    %78 = vmatprep.subr.bf16.mxu0 0
    %79 = vmatpush1.bf16.msra.mxu0 0
    %80 = vmatprep.subr.bf16.mxu0 0
    %81 = vmatpush1.bf16.msra.mxu0 0
    %82 = vmatprep.subr.bf16.mxu0 0
    %83 = vmatpush1.bf16.msra.mxu0 0
    %84 = vmatprep.subr.bf16.mxu0 0
    %85 = vmatpush1.bf16.msra.mxu0 0
    %86 = vmatprep.subr.bf16.mxu0 0
    %87 = vmatpush1.bf16.msra.mxu0 %v60
    %88 = vmatprep.subr.bf16.mxu0 0
    %89 = vmatpush2.bf16.msra.mxu0 0
    %90 = vmatprep.subr.bf16.mxu0 0
    %91 = vmatpush2.bf16.msra.mxu0 0
    %92 = vmatprep.subr.bf16.mxu0 0
    %93 = vmatpush2.bf16.msra.mxu0 0
    %94 = vmatprep.subr.bf16.mxu0 0
    %95 = vmatpush2.bf16.msra.mxu0 0
    %96 = vmatprep.subr.bf16.mxu0 0
    %97 = vmatpush2.bf16.msra.mxu0 0
    %98 = vmatprep.subr.bf16.mxu0 0
    %99 = vmatpush2.bf16.msra.mxu0 0
    %100 = vmatprep.subr.bf16.mxu0 0
    %101 = vmatpush2.bf16.msra.mxu0 0
    %102 = vmatprep.subr.bf16.mxu0 0
    %103 = vmatpush2.bf16.msra.mxu0 0
    %104 = vmatprep.mubr.bf16.mxu0 0
    %105 = vmatmul.mubr.bf16.gmra.mxu0 %v64
    %v106 = vpop.f32.mrf.mxu0
    %v107 = vadd.f32 0.0, %v106
    %v108 = vpop.f32.mrf.mxu0
    %v109 = vpop.f32.mrf.mxu0
    %v110 = vadd.f32 0.0, %v109
    %v111 = vpop.f32.mrf.mxu0
    %112 = vmatprep.mubr.bf16.mxu0 0
    %113 = vmatmul.mubr.bf16.gmra.mxu0 %v67
    %v114 = vpop.f32.mrf.mxu0
    %v115 = vadd.f32 0.0, %v114
    %v116 = vpop.f32.mrf.mxu0
    %v117 = vpop.f32.mrf.mxu0
    %v118 = vadd.f32 0.0, %v117
    %v119 = vpop.f32.mrf.mxu0
    %120 = vmatprep.mubr.bf16.mxu0 0
    %121 = vmatmul.mubr.bf16.gmra.mxu0 %v70
    %v122 = vpop.f32.mrf.mxu0
    %v123 = vadd.f32 0.0, %v122
    %v124 = vpop.f32.mrf.mxu0
    %v125 = vpop.f32.mrf.mxu0
    %v126 = vadd.f32 0.0, %v125
    %v127 = vpop.f32.mrf.mxu0
    %128 = vdwg.mxu0
    %v129 = vadd.f32 %v27, %v107
    %v130 = vadd.f32 %v28, %v110
    %v131 = vadd.f32 %v29, %v115
    %v132 = vadd.f32 %v30, %v118
    %v133 = vadd.f32 %v31, %v123
    %v134 = vadd.f32 %v32, %v126
    %135 = vst [vmem:[#allocation2] sm:$0xff] %v129
    %136 = vst [vmem:[#allocation2 + $0x8] sm:$0xff] %v130
    %137 = vst [vmem:[#allocation2 + $0x10] sm:$0xff] %v131
    %138 = vst [vmem:[#allocation2 + $0x18] sm:$0xff] %v132
    %139 = vst [vmem:[#allocation2 + $0x20] sm:$0xff] %v133
    %140 = vst [vmem:[#allocation2 + $0x28] sm:$0xff] %v134
    // Predicated region
    $region14: #{cycle_generator_forward.38} parent=1 // pred_check
      %p141 = pneg %p17
    $region15: #{cycle_generator_forward.38} parent=1 // pred_check_branch
      %143 = sbr.rel (%p141) target = $region17
    $region16: #{cycle_generator_forward.38} parent=1 // pred_region
      %v144 = vld [vmem:[#allocation2] sm:$0xff]
      %v145 = vld [vmem:[#allocation2 + $0x8] sm:$0xff]
      %v146 = vld [vmem:[#allocation2 + $0x10] sm:$0xff]
      %v147 = vld [vmem:[#allocation2 + $0x18] sm:$0xff]
      %v148 = vld [vmem:[#allocation2 + $0x20] sm:$0xff]
      %v149 = vld [vmem:[#allocation2 + $0x28] sm:$0xff]
      %150 = vst [vmem:[%s2] sm:$0xff] %v144
      %151 = vst [vmem:[%s2 + $0x8] sm:$0xff] %v145
      %152 = vst [vmem:[%s2 + $0x10] sm:$0xff] %v146
      %153 = vst [vmem:[%s2 + $0x18] sm:$0xff] %v147
      %154 = vst [vmem:[%s2 + $0x20] sm:$0xff] %v148
      %155 = vst [vmem:[%s2 + $0x28] sm:$0xff] %v149
      %156 = vadd.xlane.f32.xlu0 %v144
      %v157 = vpop.xlane.xlu0 %156
      %158 = vadd.xlane.f32.xlu0 %v145
      %v159 = vpop.xlane.xlu0 %158
      %160 = vadd.xlane.f32.xlu0 %v146
      %v161 = vpop.xlane.xlu0 %160
      %162 = vadd.xlane.f32.xlu0 %v147
      %v163 = vpop.xlane.xlu0 %162
      %164 = vadd.xlane.f32.xlu0 %v148
      %v165 = vpop.xlane.xlu0 %164
      %166 = vadd.xlane.f32.xlu0 %v149
      %v167 = vpop.xlane.xlu0 %166
      %v168 = vmul.f32 %v144, %v144
      %v169 = vmul.f32 %v145, %v145
      %v170 = vmul.f32 %v146, %v146
      %v171 = vmul.f32 %v147, %v147
      %v172 = vmul.f32 %v148, %v148
      %v173 = vmul.f32 %v149, %v149
      %174 = vadd.xlane.f32.xlu0 %v168
      %v175 = vpop.xlane.xlu0 %174
      %176 = vadd.xlane.f32.xlu0 %v169
      %v177 = vpop.xlane.xlu0 %176
      %178 = vadd.xlane.f32.xlu0 %v170
      %v179 = vpop.xlane.xlu0 %178
      %180 = vadd.xlane.f32.xlu0 %v171
      %v181 = vpop.xlane.xlu0 %180
      %182 = vadd.xlane.f32.xlu0 %v172
      %v183 = vpop.xlane.xlu0 %182
      %184 = vadd.xlane.f32.xlu0 %v173
      %v185 = vpop.xlane.xlu0 %184
      %186 = vst [vmem:[#allocation3] sm:$0xff] %v157
      %187 = vst [vmem:[#allocation3 + $0x8] sm:$0xff] %v159
      %188 = vst [vmem:[#allocation3 + $0x10] sm:$0xff] %v161
      %189 = vst [vmem:[#allocation3 + $0x18] sm:$0xff] %v163
      %190 = vst [vmem:[#allocation3 + $0x20] sm:$0xff] %v165
      %191 = vst [vmem:[#allocation3 + $0x28] sm:$0xff] %v167
      %192 = vst [vmem:[#allocation5] sm:$0xff] %v175
      %193 = vst [vmem:[#allocation5 + $0x8] sm:$0xff] %v177
      %194 = vst [vmem:[#allocation5 + $0x10] sm:$0xff] %v179
      %195 = vst [vmem:[#allocation5 + $0x18] sm:$0xff] %v181
      %196 = vst [vmem:[#allocation5 + $0x20] sm:$0xff] %v183
      %197 = vst [vmem:[#allocation5 + $0x28] sm:$0xff] %v185
    $region17: #{cycle_generator_forward.38} parent=1 // pred_fallthru
      _
    // Predicated region
    $region18: #{cycle_generator_forward.38} parent=1 // pred_check
      _
    $region19: #{cycle_generator_forward.38} parent=1 // pred_check_branch
      %199 = sbr.rel (0) target = $region21
    $region20: #{cycle_generator_forward.38} parent=1 // pred_region
      _
    $region21: #{cycle_generator_forward.38} parent=1 // pred_fallthru
      _
    // Predicated region
    $region22: #{cycle_generator_forward.38} parent=1 // pred_check
      _
    $region23: #{cycle_generator_forward.38} parent=1 // pred_check_branch
      %201 = sbr.rel (0) target = $region25
    $region24: #{cycle_generator_forward.38} parent=1 // pred_region
      %s203 = ssub.s32 768, 768
      %204 = vsyncadd [#allocation4], %s203
      %s205 = sshll.u32 [#allocation3], 4
      %s206 = int_to_ptr.vmem [resolvable:$true] %s205
      %211 = dma.vmem_to_hbm [thread:$0]  %s206, 768, %s3, [#allocation4], 128, 128, 8
    $region25: #{cycle_generator_forward.38} parent=1 // pred_fallthru
      _
    // Predicated region
    $region26: #{cycle_generator_forward.38} parent=1 // pred_check
      _
    $region27: #{cycle_generator_forward.38} parent=1 // pred_check_branch
      %213 = sbr.rel (0) target = $region29
    $region28: #{cycle_generator_forward.38} parent=1 // pred_region
      %s215 = ssub.s32 768, 768
      %216 = vsyncadd [#allocation6], %s215
      %s217 = sshll.u32 [#allocation5], 4
      %s218 = int_to_ptr.vmem [resolvable:$true] %s217
      %223 = dma.vmem_to_hbm [thread:$0]  %s218, 768, %s4, [#allocation6], 128, 128, 8
    $region29: #{cycle_generator_forward.38} parent=1 // pred_fallthru
      _
    // Predicated region
    $region30: #{cycle_generator_forward.38} parent=1 // pred_check
      _
    $region31: #{cycle_generator_forward.38} parent=1 // pred_check_branch
      %225 = sbr.rel (0) target = $region33
    $region32: #{cycle_generator_forward.38} parent=1 // pred_region
      _
    $region33: #{cycle_generator_forward.38} parent=1 // pred_fallthru
      _
    // Predicated region
    $region34: #{cycle_generator_forward.38} parent=1 // pred_check
      _
    $region35: #{cycle_generator_forward.38} parent=1 // pred_check_branch
      %227 = sbr.rel (0) target = $region37
    $region36: #{cycle_generator_forward.38} parent=1 // pred_region
      %228 = dma.done [#allocation4], 768
    $region37: #{cycle_generator_forward.38} parent=1 // pred_fallthru
      _
    // Predicated region
    $region38: #{cycle_generator_forward.38} parent=1 // pred_check
      _
    $region39: #{cycle_generator_forward.38} parent=1 // pred_check_branch
      %230 = sbr.rel (0) target = $region41
    $region40: #{cycle_generator_forward.38} parent=1 // pred_region
      %231 = dma.done [#allocation6], 768
    $region41: #{cycle_generator_forward.38} parent=1 // pred_fallthru
      _
    %232 = vsyncpa [#allocation4], 1
    %233 = vsyncpa [#allocation6], 1

// kernel: cycle_generator_forward.39
$region0: #{cycle_generator_forward.39}
  #allocation0 [shape = 'u32[]', space=smem, size = 0x4, offset = 0x4, fixed_abs, tag = 'smem constant byte address 0x4 - core index']
  #allocation1 [shape = 'u32[144,128]{1,0:T(1,128)}', space=vmem, size = 0x12000, scoped, tag = 'internal scratch']
  %s0 = inlined_call_operand.vmem [shape: f32[8,512], index: 0, kind: input, shape index: {}]
  %s1 = inlined_call_operand.vmem [shape: f32[8,1], index: 1, kind: input, shape index: {}]
  %s2 = inlined_call_operand.vmem [shape: f32[8,1], index: 2, kind: input, shape index: {}]
  %s3 = inlined_call_operand.vmem [shape: f32[8,512], index: 3, kind: output, shape index: {}]
  %s4 = sld [smem:[#allocation0]]
  $region22: #{cycle_generator_forward.39} parent=0
    _
  %s6 = ssub.s32 1, %s4
  %s7 = scalar_select 0, %s6, %s4
  // Predicated region
  $region2: #{cycle_generator_forward.39} parent=0 // pred_check
    _
  $region3: #{cycle_generator_forward.39} parent=0 // pred_check_branch
    %9 = sbr.rel (0) target = $region5
  $region4: #{cycle_generator_forward.39} parent=0 // pred_region
    _
  $region5: #{cycle_generator_forward.39} parent=0 // pred_fallthru
    _
  // Predicated region
  $region6: #{cycle_generator_forward.39} parent=0 // pred_check
    _
  $region7: #{cycle_generator_forward.39} parent=0 // pred_check_branch
    %11 = sbr.rel (0) target = $region9
  $region8: #{cycle_generator_forward.39} parent=0 // pred_region
    _
  $region9: #{cycle_generator_forward.39} parent=0 // pred_fallthru
    _
  // Predicated region
  $region10: #{cycle_generator_forward.39} parent=0 // pred_check
    _
  $region11: #{cycle_generator_forward.39} parent=0 // pred_check_branch
    %13 = sbr.rel (0) target = $region13
  $region12: #{cycle_generator_forward.39} parent=0 // pred_region
    _
  $region13: #{cycle_generator_forward.39} parent=0 // pred_fallthru
    _
  %v14 = vld [vmem:[%s0] sm:$0xff]
  %v15 = vld [vmem:[%s0 + $0x8] sm:$0xff]
  %v16 = vld [vmem:[%s0 + $0x10] sm:$0xff]
  %v17 = vld [vmem:[%s0 + $0x18] sm:$0xff]
  %v18 = vld [vmem:[%s1] sm:$0xff]
  %20 = vset.pattern.permute.xlu0 0
  %21 = vperm.xlu0 %20, %v18
  %v22 = vpop.permute.xlu0 %21
  %v24 = vmul.f32 %v14, %v22
  %v25 = vmul.f32 %v15, %v22
  %v26 = vmul.f32 %v16, %v22
  %v27 = vmul.f32 %v17, %v22
  %v28 = vld [vmem:[%s2] sm:$0xff]
  %30 = vset.pattern.permute.xlu0 0
  %31 = vperm.xlu0 %30, %v28
  %v32 = vpop.permute.xlu0 %31
  %v34 = vadd.f32 %v24, %v32
  %v35 = vadd.f32 %v25, %v32
  %v36 = vadd.f32 %v26, %v32
  %v37 = vadd.f32 %v27, %v32
  %v38 = vtanh.pop %v34
  %v39 = vtanh.pop %v35
  %v40 = vtanh.pop %v36
  %v41 = vtanh.pop %v37
  %42 = vst [vmem:[%s3] sm:$0xff] %v38
  %43 = vst [vmem:[%s3 + $0x8] sm:$0xff] %v39
  %44 = vst [vmem:[%s3 + $0x10] sm:$0xff] %v40
  %45 = vst [vmem:[%s3 + $0x18] sm:$0xff] %v41
  // Predicated region
  $region14: #{cycle_generator_forward.39} parent=0 // pred_check
    _
  $region15: #{cycle_generator_forward.39} parent=0 // pred_check_branch
    %47 = sbr.rel (0) target = $region17
  $region16: #{cycle_generator_forward.39} parent=0 // pred_region
    _
  $region17: #{cycle_generator_forward.39} parent=0 // pred_fallthru
    _
  // Predicated region
  $region18: #{cycle_generator_forward.39} parent=0 // pred_check
    _
  $region19: #{cycle_generator_forward.39} parent=0 // pred_check_branch
    %49 = sbr.rel (0) target = $region21
  $region20: #{cycle_generator_forward.39} parent=0 // pred_region
    _
  $region21: #{cycle_generator_forward.39} parent=0 // pred_fallthru
    _

</llo_original>
